<compile_context>
chip_gen: v5e
topology: v5e:2x2
jax: 0.10.0
libtpu: 0.0.40
codegen_flags: <defaults>
</compile_context>

<pallas_src>
import jax
import jax.numpy as jnp
from jax import lax
from jax.experimental import pallas as pl
from jax.experimental.pallas import tpu as pltpu

KSIZE = 7
PAD = KSIZE // 2  # 3


def _spatial_attention_kernel(w_ref, x_ref, o_ref, shift_ref):
    # w_ref:     (2*7*7,) f32 in SMEM, [c, kh, kw] order; channel-0 weights are
    #            pre-scaled by 1/C on the host (mean folded into the conv).
    # x_ref:     (1, C, H, W) in VMEM (one batch element, native dtype).
    # o_ref:     (1, 1, H, W) in VMEM.
    # shift_ref: (2*KSIZE, H + 2*PAD, W) f32 VMEM scratch holding the 14
    #            lane-pre-shifted feature planes with a PAD-row zero halo.
    x = x_ref[0].astype(jnp.float32)                 # (C, H, W), upcast in-kernel
    C, H, W = x.shape

    # Channel-wise reductions (VPU adds/maxes across the C sub-arrays).
    # Plain sum: the 1/C is already folded into the channel-0 weights.
    feats = (jnp.sum(x, axis=0), jnp.max(x, axis=0))  # 2 x (H, W)

    # Precompute the 7 lane(kw)-shifted copies of each feature map ONCE and
    # store them with a PAD-row zero halo.  Inside the tap loop, kh becomes a
    # pure sublane (row) offset load and kw is a static plane index, so the
    # inner 98 taps are FMA-only (no per-tap cross-lane relayouts).
    zrows = jnp.zeros((PAD, W), jnp.float32)
    zcols = jnp.zeros((H, PAD), jnp.float32)
    for c in range(2):
        fpad = jnp.concatenate([zcols, feats[c], zcols], axis=1)  # (H, W+2*PAD)
        for kw in range(KSIZE):
            plane = jnp.concatenate(
                [zrows, fpad[:, kw:kw + W], zrows], axis=0)       # (H+2*PAD, W)
            shift_ref[c * KSIZE + kw] = plane

    # 7x7 conv over the 2-channel map.  fori_loop(unroll=True) over kh bounds
    # live ranges while keeping scheduler visibility; the weight is read from
    # SMEM by (possibly dynamic) index, the rows by a sublane-offset load.
    def kh_body(kh, acc):
        for c in range(2):
            for kw in range(KSIZE):
                w = w_ref[c * KSIZE * KSIZE + kh * KSIZE + kw]    # SMEM scalar
                rows = shift_ref[c * KSIZE + kw, pl.ds(kh, H), :]  # (H, W)
                acc = acc + rows * w
        return acc

    acc = lax.fori_loop(0, KSIZE, kh_body,
                        jnp.zeros((H, W), jnp.float32), unroll=True)

    o_ref[0, 0] = jax.nn.sigmoid(acc).astype(o_ref.dtype)


def spatial_attention(x, weight):
    """x: (N, C, H, W), weight: (1, 2, 7, 7) f32 -> (N, 1, H, W) in x.dtype."""
    N, C, H, W = x.shape

    # Fold the 1/C of the channel mean into the channel-0 (avg) conv weights so
    # the kernel only needs a channel sum.
    w = weight.astype(jnp.float32)
    w = w.at[0, 0].multiply(1.0 / C)
    w_flat = w.reshape(-1)                            # (2*7*7,), [c, kh, kw]

    return pl.pallas_call(
        _spatial_attention_kernel,
        out_shape=jax.ShapeDtypeStruct((N, 1, H, W), x.dtype),
        grid_spec=pltpu.PrefetchScalarGridSpec(
            num_scalar_prefetch=0,
            grid=(N,),
            in_specs=[
                pl.BlockSpec(memory_space=pltpu.MemorySpace.SMEM),   # conv weight
                pl.BlockSpec((1, C, H, W), lambda n: (n, 0, 0, 0)),  # x tile
            ],
            out_specs=pl.BlockSpec((1, 1, H, W), lambda n: (n, 0, 0, 0)),
            scratch_shapes=[
                # 14 lane-pre-shifted planes (2 channels x 7 kw shifts), with a
                # PAD-row zero halo top and bottom.
                pltpu.VMEM((2 * KSIZE, H + 2 * PAD, W), jnp.float32),
            ],
        ),
        compiler_params=pltpu.CompilerParams(
            dimension_semantics=("parallel",),
            vmem_limit_bytes=64 * 1024 * 1024,
        ),
    )(w_flat, x)


def _reference(x, weight):
    avg = jnp.mean(x, axis=1, keepdims=True)
    mx = jnp.max(x, axis=1, keepdims=True)
    feat = jnp.concatenate([avg, mx], axis=1)  # (N, 2, H, W)
    y = lax.conv_general_dilated(
        feat, weight,
        window_strides=(1, 1),
        padding=((PAD, PAD), (PAD, PAD)),
        dimension_numbers=("NCHW", "OIHW", "NCHW"),
    )
    return jax.nn.sigmoid(y)


if __name__ == "__main__":
    key = jax.random.PRNGKey(0)
    kx, kw_key = jax.random.split(key)

    N, C, H, W = 2, 4, 16, 16
    x = jax.random.normal(kx, (N, C, H, W), dtype=jnp.float32)

    # Deterministic Conv2d(2, 1, 7, bias=False) weight, kaiming-uniform-like bound.
    fan_in = 2 * KSIZE * KSIZE
    bound = 1.0 / jnp.sqrt(jnp.float32(fan_in))
    weight = jax.random.uniform(kw_key, (1, 2, KSIZE, KSIZE),
                                minval=-bound, maxval=bound, dtype=jnp.float32)

    out = jax.block_until_ready(spatial_attention(x, weight))
    ref = jax.block_until_ready(_reference(x, weight))

    assert out.shape == (N, 1, H, W)
    assert jnp.allclose(out, ref, atol=1e-5, rtol=1e-5), "mismatch vs reference"

    print("KERNEL_OK")
</pallas_src>

<mosaic_0001>
module attributes {stable_mosaic.version = 11 : i64} {
  func.func @_spatial_attention_kernel(%arg0: i32, %arg1: memref<98xf32, #tpu.memory_space<smem>>, %arg2: memref<1x4x16x16xf32, #tpu.memory_space<vmem>>, %arg3: memref<1x1x16x16xf32, #tpu.memory_space<vmem>>, %arg4: memref<14x22x16xf32, #tpu.memory_space<vmem>>) attributes {dimension_semantics = [#tpu.dimension_semantics<parallel>], iteration_bounds = array<i64: 2>, scalar_prefetch = 0 : i64, scratch_operands = 1 : i64, tpu.core_type = #tpu.core_type<tc>, window_params = [{transform_indices = @transform_0, window_bounds = array<i64: 98>}, {transform_indices = @transform_1, window_bounds = array<i64: 1, 4, 16, 16>}, {transform_indices = @transform_2, window_bounds = array<i64: 1, 1, 16, 16>}]} {
    %c0 = arith.constant 0 : index
    %c0_0 = arith.constant 0 : index
    %c0_1 = arith.constant 0 : index
    %c0_2 = arith.constant 0 : index
    %0 = vector.load %arg2[%c0, %c0_0, %c0_1, %c0_2] : memref<1x4x16x16xf32, #tpu.memory_space<vmem>>, vector<1x4x16x16xf32>
    %1 = vector.shape_cast %0 : vector<1x4x16x16xf32> to vector<4x16x16xf32>
    %cst = arith.constant dense<0.000000e+00> : vector<16x16xf32>
    %2 = vector.multi_reduction <add>, %1, %cst [0] : vector<4x16x16xf32> to vector<16x16xf32>
    %cst_3 = arith.constant dense<0xFF800000> : vector<16x16xf32>
    %3 = vector.multi_reduction <maximumf>, %1, %cst_3 [0] : vector<4x16x16xf32> to vector<16x16xf32>
    %cst_4 = arith.constant 0.000000e+00 : f32
    %4 = vector.broadcast %cst_4 : f32 to vector<3x16xf32>
    %cst_5 = arith.constant 0.000000e+00 : f32
    %5 = vector.broadcast %cst_5 : f32 to vector<16x3xf32>
    %6 = tpu.concatenate %5, %2, %5 in 1 : vector<16x3xf32>, vector<16x16xf32>, vector<16x3xf32> -> vector<16x22xf32>
    %7 = vector.extract_strided_slice %6 {offsets = [0, 0], sizes = [16, 16], strides = [1, 1]} : vector<16x22xf32> to vector<16x16xf32>
    %8 = tpu.concatenate %4, %7, %4 in 0 : vector<3x16xf32>, vector<16x16xf32>, vector<3x16xf32> -> vector<22x16xf32>
    %c0_6 = arith.constant 0 : index
    %c0_7 = arith.constant 0 : index
    %c0_8 = arith.constant 0 : index
    %9 = vector.load %arg4[%c0_6, %c0_7, %c0_8] : memref<14x22x16xf32, #tpu.memory_space<vmem>>, vector<1x22x16xf32>
    %10 = vector.shape_cast %9 : vector<1x22x16xf32> to vector<22x16xf32>
    %11 = vector.shape_cast %8 : vector<22x16xf32> to vector<1x22x16xf32>
    tpu.vector_store %arg4[%c0_6, %c0_7, %c0_8], %11 {strides = array<i32>} : memref<14x22x16xf32, #tpu.memory_space<vmem>>, vector<1x22x16xf32>,
    %12 = vector.extract_strided_slice %6 {offsets = [0, 1], sizes = [16, 16], strides = [1, 1]} : vector<16x22xf32> to vector<16x16xf32>
    %13 = tpu.concatenate %4, %12, %4 in 0 : vector<3x16xf32>, vector<16x16xf32>, vector<3x16xf32> -> vector<22x16xf32>
    %c1 = arith.constant 1 : index
    %c0_9 = arith.constant 0 : index
    %c0_10 = arith.constant 0 : index
    %14 = vector.load %arg4[%c1, %c0_9, %c0_10] : memref<14x22x16xf32, #tpu.memory_space<vmem>>, vector<1x22x16xf32>
    %15 = vector.shape_cast %14 : vector<1x22x16xf32> to vector<22x16xf32>
    %16 = vector.shape_cast %13 : vector<22x16xf32> to vector<1x22x16xf32>
    tpu.vector_store %arg4[%c1, %c0_9, %c0_10], %16 {strides = array<i32>} : memref<14x22x16xf32, #tpu.memory_space<vmem>>, vector<1x22x16xf32>,
    %17 = vector.extract_strided_slice %6 {offsets = [0, 2], sizes = [16, 16], strides = [1, 1]} : vector<16x22xf32> to vector<16x16xf32>
    %18 = tpu.concatenate %4, %17, %4 in 0 : vector<3x16xf32>, vector<16x16xf32>, vector<3x16xf32> -> vector<22x16xf32>
    %c2 = arith.constant 2 : index
    %c0_11 = arith.constant 0 : index
    %c0_12 = arith.constant 0 : index
    %19 = vector.load %arg4[%c2, %c0_11, %c0_12] : memref<14x22x16xf32, #tpu.memory_space<vmem>>, vector<1x22x16xf32>
    %20 = vector.shape_cast %19 : vector<1x22x16xf32> to vector<22x16xf32>
    %21 = vector.shape_cast %18 : vector<22x16xf32> to vector<1x22x16xf32>
    tpu.vector_store %arg4[%c2, %c0_11, %c0_12], %21 {strides = array<i32>} : memref<14x22x16xf32, #tpu.memory_space<vmem>>, vector<1x22x16xf32>,
    %22 = vector.extract_strided_slice %6 {offsets = [0, 3], sizes = [16, 16], strides = [1, 1]} : vector<16x22xf32> to vector<16x16xf32>
    %23 = tpu.concatenate %4, %22, %4 in 0 : vector<3x16xf32>, vector<16x16xf32>, vector<3x16xf32> -> vector<22x16xf32>
    %c3 = arith.constant 3 : index
    %c0_13 = arith.constant 0 : index
    %c0_14 = arith.constant 0 : index
    %24 = vector.load %arg4[%c3, %c0_13, %c0_14] : memref<14x22x16xf32, #tpu.memory_space<vmem>>, vector<1x22x16xf32>
    %25 = vector.shape_cast %24 : vector<1x22x16xf32> to vector<22x16xf32>
    %26 = vector.shape_cast %23 : vector<22x16xf32> to vector<1x22x16xf32>
    tpu.vector_store %arg4[%c3, %c0_13, %c0_14], %26 {strides = array<i32>} : memref<14x22x16xf32, #tpu.memory_space<vmem>>, vector<1x22x16xf32>,
    %27 = vector.extract_strided_slice %6 {offsets = [0, 4], sizes = [16, 16], strides = [1, 1]} : vector<16x22xf32> to vector<16x16xf32>
    %28 = tpu.concatenate %4, %27, %4 in 0 : vector<3x16xf32>, vector<16x16xf32>, vector<3x16xf32> -> vector<22x16xf32>
    %c4 = arith.constant 4 : index
    %c0_15 = arith.constant 0 : index
    %c0_16 = arith.constant 0 : index
    %29 = vector.load %arg4[%c4, %c0_15, %c0_16] : memref<14x22x16xf32, #tpu.memory_space<vmem>>, vector<1x22x16xf32>
    %30 = vector.shape_cast %29 : vector<1x22x16xf32> to vector<22x16xf32>
    %31 = vector.shape_cast %28 : vector<22x16xf32> to vector<1x22x16xf32>
    tpu.vector_store %arg4[%c4, %c0_15, %c0_16], %31 {strides = array<i32>} : memref<14x22x16xf32, #tpu.memory_space<vmem>>, vector<1x22x16xf32>,
    %32 = vector.extract_strided_slice %6 {offsets = [0, 5], sizes = [16, 16], strides = [1, 1]} : vector<16x22xf32> to vector<16x16xf32>
    %33 = tpu.concatenate %4, %32, %4 in 0 : vector<3x16xf32>, vector<16x16xf32>, vector<3x16xf32> -> vector<22x16xf32>
    %c5 = arith.constant 5 : index
    %c0_17 = arith.constant 0 : index
    %c0_18 = arith.constant 0 : index
    %34 = vector.load %arg4[%c5, %c0_17, %c0_18] : memref<14x22x16xf32, #tpu.memory_space<vmem>>, vector<1x22x16xf32>
    %35 = vector.shape_cast %34 : vector<1x22x16xf32> to vector<22x16xf32>
    %36 = vector.shape_cast %33 : vector<22x16xf32> to vector<1x22x16xf32>
    tpu.vector_store %arg4[%c5, %c0_17, %c0_18], %36 {strides = array<i32>} : memref<14x22x16xf32, #tpu.memory_space<vmem>>, vector<1x22x16xf32>,
    %37 = vector.extract_strided_slice %6 {offsets = [0, 6], sizes = [16, 16], strides = [1, 1]} : vector<16x22xf32> to vector<16x16xf32>
    %38 = tpu.concatenate %4, %37, %4 in 0 : vector<3x16xf32>, vector<16x16xf32>, vector<3x16xf32> -> vector<22x16xf32>
    %c6 = arith.constant 6 : index
    %c0_19 = arith.constant 0 : index
    %c0_20 = arith.constant 0 : index
    %39 = vector.load %arg4[%c6, %c0_19, %c0_20] : memref<14x22x16xf32, #tpu.memory_space<vmem>>, vector<1x22x16xf32>
    %40 = vector.shape_cast %39 : vector<1x22x16xf32> to vector<22x16xf32>
    %41 = vector.shape_cast %38 : vector<22x16xf32> to vector<1x22x16xf32>
    tpu.vector_store %arg4[%c6, %c0_19, %c0_20], %41 {strides = array<i32>} : memref<14x22x16xf32, #tpu.memory_space<vmem>>, vector<1x22x16xf32>,
    %42 = tpu.concatenate %5, %3, %5 in 1 : vector<16x3xf32>, vector<16x16xf32>, vector<16x3xf32> -> vector<16x22xf32>
    %43 = vector.extract_strided_slice %42 {offsets = [0, 0], sizes = [16, 16], strides = [1, 1]} : vector<16x22xf32> to vector<16x16xf32>
    %44 = tpu.concatenate %4, %43, %4 in 0 : vector<3x16xf32>, vector<16x16xf32>, vector<3x16xf32> -> vector<22x16xf32>
    %c7 = arith.constant 7 : index
    %c0_21 = arith.constant 0 : index
    %c0_22 = arith.constant 0 : index
    %45 = vector.load %arg4[%c7, %c0_21, %c0_22] : memref<14x22x16xf32, #tpu.memory_space<vmem>>, vector<1x22x16xf32>
    %46 = vector.shape_cast %45 : vector<1x22x16xf32> to vector<22x16xf32>
    %47 = vector.shape_cast %44 : vector<22x16xf32> to vector<1x22x16xf32>
    tpu.vector_store %arg4[%c7, %c0_21, %c0_22], %47 {strides = array<i32>} : memref<14x22x16xf32, #tpu.memory_space<vmem>>, vector<1x22x16xf32>,
    %48 = vector.extract_strided_slice %42 {offsets = [0, 1], sizes = [16, 16], strides = [1, 1]} : vector<16x22xf32> to vector<16x16xf32>
    %49 = tpu.concatenate %4, %48, %4 in 0 : vector<3x16xf32>, vector<16x16xf32>, vector<3x16xf32> -> vector<22x16xf32>
    %c8 = arith.constant 8 : index
    %c0_23 = arith.constant 0 : index
    %c0_24 = arith.constant 0 : index
    %50 = vector.load %arg4[%c8, %c0_23, %c0_24] : memref<14x22x16xf32, #tpu.memory_space<vmem>>, vector<1x22x16xf32>
    %51 = vector.shape_cast %50 : vector<1x22x16xf32> to vector<22x16xf32>
    %52 = vector.shape_cast %49 : vector<22x16xf32> to vector<1x22x16xf32>
    tpu.vector_store %arg4[%c8, %c0_23, %c0_24], %52 {strides = array<i32>} : memref<14x22x16xf32, #tpu.memory_space<vmem>>, vector<1x22x16xf32>,
    %53 = vector.extract_strided_slice %42 {offsets = [0, 2], sizes = [16, 16], strides = [1, 1]} : vector<16x22xf32> to vector<16x16xf32>
    %54 = tpu.concatenate %4, %53, %4 in 0 : vector<3x16xf32>, vector<16x16xf32>, vector<3x16xf32> -> vector<22x16xf32>
    %c9 = arith.constant 9 : index
    %c0_25 = arith.constant 0 : index
    %c0_26 = arith.constant 0 : index
    %55 = vector.load %arg4[%c9, %c0_25, %c0_26] : memref<14x22x16xf32, #tpu.memory_space<vmem>>, vector<1x22x16xf32>
    %56 = vector.shape_cast %55 : vector<1x22x16xf32> to vector<22x16xf32>
    %57 = vector.shape_cast %54 : vector<22x16xf32> to vector<1x22x16xf32>
    tpu.vector_store %arg4[%c9, %c0_25, %c0_26], %57 {strides = array<i32>} : memref<14x22x16xf32, #tpu.memory_space<vmem>>, vector<1x22x16xf32>,
    %58 = vector.extract_strided_slice %42 {offsets = [0, 3], sizes = [16, 16], strides = [1, 1]} : vector<16x22xf32> to vector<16x16xf32>
    %59 = tpu.concatenate %4, %58, %4 in 0 : vector<3x16xf32>, vector<16x16xf32>, vector<3x16xf32> -> vector<22x16xf32>
    %c10 = arith.constant 10 : index
    %c0_27 = arith.constant 0 : index
    %c0_28 = arith.constant 0 : index
    %60 = vector.load %arg4[%c10, %c0_27, %c0_28] : memref<14x22x16xf32, #tpu.memory_space<vmem>>, vector<1x22x16xf32>
    %61 = vector.shape_cast %60 : vector<1x22x16xf32> to vector<22x16xf32>
    %62 = vector.shape_cast %59 : vector<22x16xf32> to vector<1x22x16xf32>
    tpu.vector_store %arg4[%c10, %c0_27, %c0_28], %62 {strides = array<i32>} : memref<14x22x16xf32, #tpu.memory_space<vmem>>, vector<1x22x16xf32>,
    %63 = vector.extract_strided_slice %42 {offsets = [0, 4], sizes = [16, 16], strides = [1, 1]} : vector<16x22xf32> to vector<16x16xf32>
    %64 = tpu.concatenate %4, %63, %4 in 0 : vector<3x16xf32>, vector<16x16xf32>, vector<3x16xf32> -> vector<22x16xf32>
    %c11 = arith.constant 11 : index
    %c0_29 = arith.constant 0 : index
    %c0_30 = arith.constant 0 : index
    %65 = vector.load %arg4[%c11, %c0_29, %c0_30] : memref<14x22x16xf32, #tpu.memory_space<vmem>>, vector<1x22x16xf32>
    %66 = vector.shape_cast %65 : vector<1x22x16xf32> to vector<22x16xf32>
    %67 = vector.shape_cast %64 : vector<22x16xf32> to vector<1x22x16xf32>
    tpu.vector_store %arg4[%c11, %c0_29, %c0_30], %67 {strides = array<i32>} : memref<14x22x16xf32, #tpu.memory_space<vmem>>, vector<1x22x16xf32>,
    %68 = vector.extract_strided_slice %42 {offsets = [0, 5], sizes = [16, 16], strides = [1, 1]} : vector<16x22xf32> to vector<16x16xf32>
    %69 = tpu.concatenate %4, %68, %4 in 0 : vector<3x16xf32>, vector<16x16xf32>, vector<3x16xf32> -> vector<22x16xf32>
    %c12 = arith.constant 12 : index
    %c0_31 = arith.constant 0 : index
    %c0_32 = arith.constant 0 : index
    %70 = vector.load %arg4[%c12, %c0_31, %c0_32] : memref<14x22x16xf32, #tpu.memory_space<vmem>>, vector<1x22x16xf32>
    %71 = vector.shape_cast %70 : vector<1x22x16xf32> to vector<22x16xf32>
    %72 = vector.shape_cast %69 : vector<22x16xf32> to vector<1x22x16xf32>
    tpu.vector_store %arg4[%c12, %c0_31, %c0_32], %72 {strides = array<i32>} : memref<14x22x16xf32, #tpu.memory_space<vmem>>, vector<1x22x16xf32>,
    %73 = vector.extract_strided_slice %42 {offsets = [0, 6], sizes = [16, 16], strides = [1, 1]} : vector<16x22xf32> to vector<16x16xf32>
    %74 = tpu.concatenate %4, %73, %4 in 0 : vector<3x16xf32>, vector<16x16xf32>, vector<3x16xf32> -> vector<22x16xf32>
    %c13 = arith.constant 13 : index
    %c0_33 = arith.constant 0 : index
    %c0_34 = arith.constant 0 : index
    %75 = vector.load %arg4[%c13, %c0_33, %c0_34] : memref<14x22x16xf32, #tpu.memory_space<vmem>>, vector<1x22x16xf32>
    %76 = vector.shape_cast %75 : vector<1x22x16xf32> to vector<22x16xf32>
    %77 = vector.shape_cast %74 : vector<22x16xf32> to vector<1x22x16xf32>
    tpu.vector_store %arg4[%c13, %c0_33, %c0_34], %77 {strides = array<i32>} : memref<14x22x16xf32, #tpu.memory_space<vmem>>, vector<1x22x16xf32>,
    %cst_35 = arith.constant 0.000000e+00 : f32
    %78 = vector.broadcast %cst_35 : f32 to vector<16x16xf32>
    %c0_i32 = arith.constant 0 : i32
    %c7_i32 = arith.constant 7 : i32
    %79 = arith.muli %c0_i32, %c7_i32 : i32
    %c0_i32_36 = arith.constant 0 : i32
    %80 = arith.addi %c0_i32_36, %79 : i32
    %c0_i32_37 = arith.constant 0 : i32
    %81 = arith.addi %80, %c0_i32_37 : i32
    %82 = arith.index_cast %81 : i32 to index
    %83 = memref.load %arg1[%82] : memref<98xf32, #tpu.memory_space<smem>>
    %c0_38 = arith.constant 0 : index
    %84 = arith.index_cast %c0_i32 : i32 to index
    %c0_39 = arith.constant 0 : index
    %85 = vector.load %arg4[%c0_38, %84, %c0_39] : memref<14x22x16xf32, #tpu.memory_space<vmem>>, vector<1x16x16xf32>
    %86 = vector.shape_cast %85 : vector<1x16x16xf32> to vector<16x16xf32>
    %87 = vector.broadcast %83 : f32 to vector<16x16xf32>
    %88 = arith.mulf %86, %87 : vector<16x16xf32>
    %89 = arith.addf %78, %88 : vector<16x16xf32>
    %c7_i32_40 = arith.constant 7 : i32
    %90 = arith.muli %c0_i32, %c7_i32_40 : i32
    %c0_i32_41 = arith.constant 0 : i32
    %91 = arith.addi %c0_i32_41, %90 : i32
    %c1_i32 = arith.constant 1 : i32
    %92 = arith.addi %91, %c1_i32 : i32
    %93 = arith.index_cast %92 : i32 to index
    %94 = memref.load %arg1[%93] : memref<98xf32, #tpu.memory_space<smem>>
    %c1_42 = arith.constant 1 : index
    %95 = arith.index_cast %c0_i32 : i32 to index
    %c0_43 = arith.constant 0 : index
    %96 = vector.load %arg4[%c1_42, %95, %c0_43] : memref<14x22x16xf32, #tpu.memory_space<vmem>>, vector<1x16x16xf32>
    %97 = vector.shape_cast %96 : vector<1x16x16xf32> to vector<16x16xf32>
    %98 = vector.broadcast %94 : f32 to vector<16x16xf32>
    %99 = arith.mulf %97, %98 : vector<16x16xf32>
    %100 = arith.addf %89, %99 : vector<16x16xf32>
    %c7_i32_44 = arith.constant 7 : i32
    %101 = arith.muli %c0_i32, %c7_i32_44 : i32
    %c0_i32_45 = arith.constant 0 : i32
    %102 = arith.addi %c0_i32_45, %101 : i32
    %c2_i32 = arith.constant 2 : i32
    %103 = arith.addi %102, %c2_i32 : i32
    %104 = arith.index_cast %103 : i32 to index
    %105 = memref.load %arg1[%104] : memref<98xf32, #tpu.memory_space<smem>>
    %c2_46 = arith.constant 2 : index
    %106 = arith.index_cast %c0_i32 : i32 to index
    %c0_47 = arith.constant 0 : index
    %107 = vector.load %arg4[%c2_46, %106, %c0_47] : memref<14x22x16xf32, #tpu.memory_space<vmem>>, vector<1x16x16xf32>
    %108 = vector.shape_cast %107 : vector<1x16x16xf32> to vector<16x16xf32>
    %109 = vector.broadcast %105 : f32 to vector<16x16xf32>
    %110 = arith.mulf %108, %109 : vector<16x16xf32>
    %111 = arith.addf %100, %110 : vector<16x16xf32>
    %c7_i32_48 = arith.constant 7 : i32
    %112 = arith.muli %c0_i32, %c7_i32_48 : i32
    %c0_i32_49 = arith.constant 0 : i32
    %113 = arith.addi %c0_i32_49, %112 : i32
    %c3_i32 = arith.constant 3 : i32
    %114 = arith.addi %113, %c3_i32 : i32
    %115 = arith.index_cast %114 : i32 to index
    %116 = memref.load %arg1[%115] : memref<98xf32, #tpu.memory_space<smem>>
    %c3_50 = arith.constant 3 : index
    %117 = arith.index_cast %c0_i32 : i32 to index
    %c0_51 = arith.constant 0 : index
    %118 = vector.load %arg4[%c3_50, %117, %c0_51] : memref<14x22x16xf32, #tpu.memory_space<vmem>>, vector<1x16x16xf32>
    %119 = vector.shape_cast %118 : vector<1x16x16xf32> to vector<16x16xf32>
    %120 = vector.broadcast %116 : f32 to vector<16x16xf32>
    %121 = arith.mulf %119, %120 : vector<16x16xf32>
    %122 = arith.addf %111, %121 : vector<16x16xf32>
    %c7_i32_52 = arith.constant 7 : i32
    %123 = arith.muli %c0_i32, %c7_i32_52 : i32
    %c0_i32_53 = arith.constant 0 : i32
    %124 = arith.addi %c0_i32_53, %123 : i32
    %c4_i32 = arith.constant 4 : i32
    %125 = arith.addi %124, %c4_i32 : i32
    %126 = arith.index_cast %125 : i32 to index
    %127 = memref.load %arg1[%126] : memref<98xf32, #tpu.memory_space<smem>>
    %c4_54 = arith.constant 4 : index
    %128 = arith.index_cast %c0_i32 : i32 to index
    %c0_55 = arith.constant 0 : index
    %129 = vector.load %arg4[%c4_54, %128, %c0_55] : memref<14x22x16xf32, #tpu.memory_space<vmem>>, vector<1x16x16xf32>
    %130 = vector.shape_cast %129 : vector<1x16x16xf32> to vector<16x16xf32>
    %131 = vector.broadcast %127 : f32 to vector<16x16xf32>
    %132 = arith.mulf %130, %131 : vector<16x16xf32>
    %133 = arith.addf %122, %132 : vector<16x16xf32>
    %c7_i32_56 = arith.constant 7 : i32
    %134 = arith.muli %c0_i32, %c7_i32_56 : i32
    %c0_i32_57 = arith.constant 0 : i32
    %135 = arith.addi %c0_i32_57, %134 : i32
    %c5_i32 = arith.constant 5 : i32
    %136 = arith.addi %135, %c5_i32 : i32
    %137 = arith.index_cast %136 : i32 to index
    %138 = memref.load %arg1[%137] : memref<98xf32, #tpu.memory_space<smem>>
    %c5_58 = arith.constant 5 : index
    %139 = arith.index_cast %c0_i32 : i32 to index
    %c0_59 = arith.constant 0 : index
    %140 = vector.load %arg4[%c5_58, %139, %c0_59] : memref<14x22x16xf32, #tpu.memory_space<vmem>>, vector<1x16x16xf32>
    %141 = vector.shape_cast %140 : vector<1x16x16xf32> to vector<16x16xf32>
    %142 = vector.broadcast %138 : f32 to vector<16x16xf32>
    %143 = arith.mulf %141, %142 : vector<16x16xf32>
    %144 = arith.addf %133, %143 : vector<16x16xf32>
    %c7_i32_60 = arith.constant 7 : i32
    %145 = arith.muli %c0_i32, %c7_i32_60 : i32
    %c0_i32_61 = arith.constant 0 : i32
    %146 = arith.addi %c0_i32_61, %145 : i32
    %c6_i32 = arith.constant 6 : i32
    %147 = arith.addi %146, %c6_i32 : i32
    %148 = arith.index_cast %147 : i32 to index
    %149 = memref.load %arg1[%148] : memref<98xf32, #tpu.memory_space<smem>>
    %c6_62 = arith.constant 6 : index
    %150 = arith.index_cast %c0_i32 : i32 to index
    %c0_63 = arith.constant 0 : index
    %151 = vector.load %arg4[%c6_62, %150, %c0_63] : memref<14x22x16xf32, #tpu.memory_space<vmem>>, vector<1x16x16xf32>
    %152 = vector.shape_cast %151 : vector<1x16x16xf32> to vector<16x16xf32>
    %153 = vector.broadcast %149 : f32 to vector<16x16xf32>
    %154 = arith.mulf %152, %153 : vector<16x16xf32>
    %155 = arith.addf %144, %154 : vector<16x16xf32>
    %c7_i32_64 = arith.constant 7 : i32
    %156 = arith.muli %c0_i32, %c7_i32_64 : i32
    %c49_i32 = arith.constant 49 : i32
    %157 = arith.addi %c49_i32, %156 : i32
    %c0_i32_65 = arith.constant 0 : i32
    %158 = arith.addi %157, %c0_i32_65 : i32
    %159 = arith.index_cast %158 : i32 to index
    %160 = memref.load %arg1[%159] : memref<98xf32, #tpu.memory_space<smem>>
    %c7_66 = arith.constant 7 : index
    %161 = arith.index_cast %c0_i32 : i32 to index
    %c0_67 = arith.constant 0 : index
    %162 = vector.load %arg4[%c7_66, %161, %c0_67] : memref<14x22x16xf32, #tpu.memory_space<vmem>>, vector<1x16x16xf32>
    %163 = vector.shape_cast %162 : vector<1x16x16xf32> to vector<16x16xf32>
    %164 = vector.broadcast %160 : f32 to vector<16x16xf32>
    %165 = arith.mulf %163, %164 : vector<16x16xf32>
    %166 = arith.addf %155, %165 : vector<16x16xf32>
    %c7_i32_68 = arith.constant 7 : i32
    %167 = arith.muli %c0_i32, %c7_i32_68 : i32
    %c49_i32_69 = arith.constant 49 : i32
    %168 = arith.addi %c49_i32_69, %167 : i32
    %c1_i32_70 = arith.constant 1 : i32
    %169 = arith.addi %168, %c1_i32_70 : i32
    %170 = arith.index_cast %169 : i32 to index
    %171 = memref.load %arg1[%170] : memref<98xf32, #tpu.memory_space<smem>>
    %c8_71 = arith.constant 8 : index
    %172 = arith.index_cast %c0_i32 : i32 to index
    %c0_72 = arith.constant 0 : index
    %173 = vector.load %arg4[%c8_71, %172, %c0_72] : memref<14x22x16xf32, #tpu.memory_space<vmem>>, vector<1x16x16xf32>
    %174 = vector.shape_cast %173 : vector<1x16x16xf32> to vector<16x16xf32>
    %175 = vector.broadcast %171 : f32 to vector<16x16xf32>
    %176 = arith.mulf %174, %175 : vector<16x16xf32>
    %177 = arith.addf %166, %176 : vector<16x16xf32>
    %c7_i32_73 = arith.constant 7 : i32
    %178 = arith.muli %c0_i32, %c7_i32_73 : i32
    %c49_i32_74 = arith.constant 49 : i32
    %179 = arith.addi %c49_i32_74, %178 : i32
    %c2_i32_75 = arith.constant 2 : i32
    %180 = arith.addi %179, %c2_i32_75 : i32
    %181 = arith.index_cast %180 : i32 to index
    %182 = memref.load %arg1[%181] : memref<98xf32, #tpu.memory_space<smem>>
    %c9_76 = arith.constant 9 : index
    %183 = arith.index_cast %c0_i32 : i32 to index
    %c0_77 = arith.constant 0 : index
    %184 = vector.load %arg4[%c9_76, %183, %c0_77] : memref<14x22x16xf32, #tpu.memory_space<vmem>>, vector<1x16x16xf32>
    %185 = vector.shape_cast %184 : vector<1x16x16xf32> to vector<16x16xf32>
    %186 = vector.broadcast %182 : f32 to vector<16x16xf32>
    %187 = arith.mulf %185, %186 : vector<16x16xf32>
    %188 = arith.addf %177, %187 : vector<16x16xf32>
    %c7_i32_78 = arith.constant 7 : i32
    %189 = arith.muli %c0_i32, %c7_i32_78 : i32
    %c49_i32_79 = arith.constant 49 : i32
    %190 = arith.addi %c49_i32_79, %189 : i32
    %c3_i32_80 = arith.constant 3 : i32
    %191 = arith.addi %190, %c3_i32_80 : i32
    %192 = arith.index_cast %191 : i32 to index
    %193 = memref.load %arg1[%192] : memref<98xf32, #tpu.memory_space<smem>>
    %c10_81 = arith.constant 10 : index
    %194 = arith.index_cast %c0_i32 : i32 to index
    %c0_82 = arith.constant 0 : index
    %195 = vector.load %arg4[%c10_81, %194, %c0_82] : memref<14x22x16xf32, #tpu.memory_space<vmem>>, vector<1x16x16xf32>
    %196 = vector.shape_cast %195 : vector<1x16x16xf32> to vector<16x16xf32>
    %197 = vector.broadcast %193 : f32 to vector<16x16xf32>
    %198 = arith.mulf %196, %197 : vector<16x16xf32>
    %199 = arith.addf %188, %198 : vector<16x16xf32>
    %c7_i32_83 = arith.constant 7 : i32
    %200 = arith.muli %c0_i32, %c7_i32_83 : i32
    %c49_i32_84 = arith.constant 49 : i32
    %201 = arith.addi %c49_i32_84, %200 : i32
    %c4_i32_85 = arith.constant 4 : i32
    %202 = arith.addi %201, %c4_i32_85 : i32
    %203 = arith.index_cast %202 : i32 to index
    %204 = memref.load %arg1[%203] : memref<98xf32, #tpu.memory_space<smem>>
    %c11_86 = arith.constant 11 : index
    %205 = arith.index_cast %c0_i32 : i32 to index
    %c0_87 = arith.constant 0 : index
    %206 = vector.load %arg4[%c11_86, %205, %c0_87] : memref<14x22x16xf32, #tpu.memory_space<vmem>>, vector<1x16x16xf32>
    %207 = vector.shape_cast %206 : vector<1x16x16xf32> to vector<16x16xf32>
    %208 = vector.broadcast %204 : f32 to vector<16x16xf32>
    %209 = arith.mulf %207, %208 : vector<16x16xf32>
    %210 = arith.addf %199, %209 : vector<16x16xf32>
    %c7_i32_88 = arith.constant 7 : i32
    %211 = arith.muli %c0_i32, %c7_i32_88 : i32
    %c49_i32_89 = arith.constant 49 : i32
    %212 = arith.addi %c49_i32_89, %211 : i32
    %c5_i32_90 = arith.constant 5 : i32
    %213 = arith.addi %212, %c5_i32_90 : i32
    %214 = arith.index_cast %213 : i32 to index
    %215 = memref.load %arg1[%214] : memref<98xf32, #tpu.memory_space<smem>>
    %c12_91 = arith.constant 12 : index
    %216 = arith.index_cast %c0_i32 : i32 to index
    %c0_92 = arith.constant 0 : index
    %217 = vector.load %arg4[%c12_91, %216, %c0_92] : memref<14x22x16xf32, #tpu.memory_space<vmem>>, vector<1x16x16xf32>
    %218 = vector.shape_cast %217 : vector<1x16x16xf32> to vector<16x16xf32>
    %219 = vector.broadcast %215 : f32 to vector<16x16xf32>
    %220 = arith.mulf %218, %219 : vector<16x16xf32>
    %221 = arith.addf %210, %220 : vector<16x16xf32>
    %c7_i32_93 = arith.constant 7 : i32
    %222 = arith.muli %c0_i32, %c7_i32_93 : i32
    %c49_i32_94 = arith.constant 49 : i32
    %223 = arith.addi %c49_i32_94, %222 : i32
    %c6_i32_95 = arith.constant 6 : i32
    %224 = arith.addi %223, %c6_i32_95 : i32
    %225 = arith.index_cast %224 : i32 to index
    %226 = memref.load %arg1[%225] : memref<98xf32, #tpu.memory_space<smem>>
    %c13_96 = arith.constant 13 : index
    %227 = arith.index_cast %c0_i32 : i32 to index
    %c0_97 = arith.constant 0 : index
    %228 = vector.load %arg4[%c13_96, %227, %c0_97] : memref<14x22x16xf32, #tpu.memory_space<vmem>>, vector<1x16x16xf32>
    %229 = vector.shape_cast %228 : vector<1x16x16xf32> to vector<16x16xf32>
    %230 = vector.broadcast %226 : f32 to vector<16x16xf32>
    %231 = arith.mulf %229, %230 : vector<16x16xf32>
    %232 = arith.addf %221, %231 : vector<16x16xf32>
    %c1_i32_98 = arith.constant 1 : i32
    %c7_i32_99 = arith.constant 7 : i32
    %233 = arith.muli %c1_i32_98, %c7_i32_99 : i32
    %c0_i32_100 = arith.constant 0 : i32
    %234 = arith.addi %c0_i32_100, %233 : i32
    %c0_i32_101 = arith.constant 0 : i32
    %235 = arith.addi %234, %c0_i32_101 : i32
    %236 = arith.index_cast %235 : i32 to index
    %237 = memref.load %arg1[%236] : memref<98xf32, #tpu.memory_space<smem>>
    %c0_102 = arith.constant 0 : index
    %238 = arith.index_cast %c1_i32_98 : i32 to index
    %c0_103 = arith.constant 0 : index
    %239 = vector.load %arg4[%c0_102, %238, %c0_103] : memref<14x22x16xf32, #tpu.memory_space<vmem>>, vector<1x16x16xf32>
    %240 = vector.shape_cast %239 : vector<1x16x16xf32> to vector<16x16xf32>
    %241 = vector.broadcast %237 : f32 to vector<16x16xf32>
    %242 = arith.mulf %240, %241 : vector<16x16xf32>
    %243 = arith.addf %232, %242 : vector<16x16xf32>
    %c7_i32_104 = arith.constant 7 : i32
    %244 = arith.muli %c1_i32_98, %c7_i32_104 : i32
    %c0_i32_105 = arith.constant 0 : i32
    %245 = arith.addi %c0_i32_105, %244 : i32
    %c1_i32_106 = arith.constant 1 : i32
    %246 = arith.addi %245, %c1_i32_106 : i32
    %247 = arith.index_cast %246 : i32 to index
    %248 = memref.load %arg1[%247] : memref<98xf32, #tpu.memory_space<smem>>
    %c1_107 = arith.constant 1 : index
    %249 = arith.index_cast %c1_i32_98 : i32 to index
    %c0_108 = arith.constant 0 : index
    %250 = vector.load %arg4[%c1_107, %249, %c0_108] : memref<14x22x16xf32, #tpu.memory_space<vmem>>, vector<1x16x16xf32>
    %251 = vector.shape_cast %250 : vector<1x16x16xf32> to vector<16x16xf32>
    %252 = vector.broadcast %248 : f32 to vector<16x16xf32>
    %253 = arith.mulf %251, %252 : vector<16x16xf32>
    %254 = arith.addf %243, %253 : vector<16x16xf32>
    %c7_i32_109 = arith.constant 7 : i32
    %255 = arith.muli %c1_i32_98, %c7_i32_109 : i32
    %c0_i32_110 = arith.constant 0 : i32
    %256 = arith.addi %c0_i32_110, %255 : i32
    %c2_i32_111 = arith.constant 2 : i32
    %257 = arith.addi %256, %c2_i32_111 : i32
    %258 = arith.index_cast %257 : i32 to index
    %259 = memref.load %arg1[%258] : memref<98xf32, #tpu.memory_space<smem>>
    %c2_112 = arith.constant 2 : index
    %260 = arith.index_cast %c1_i32_98 : i32 to index
    %c0_113 = arith.constant 0 : index
    %261 = vector.load %arg4[%c2_112, %260, %c0_113] : memref<14x22x16xf32, #tpu.memory_space<vmem>>, vector<1x16x16xf32>
    %262 = vector.shape_cast %261 : vector<1x16x16xf32> to vector<16x16xf32>
    %263 = vector.broadcast %259 : f32 to vector<16x16xf32>
    %264 = arith.mulf %262, %263 : vector<16x16xf32>
    %265 = arith.addf %254, %264 : vector<16x16xf32>
    %c7_i32_114 = arith.constant 7 : i32
    %266 = arith.muli %c1_i32_98, %c7_i32_114 : i32
    %c0_i32_115 = arith.constant 0 : i32
    %267 = arith.addi %c0_i32_115, %266 : i32
    %c3_i32_116 = arith.constant 3 : i32
    %268 = arith.addi %267, %c3_i32_116 : i32
    %269 = arith.index_cast %268 : i32 to index
    %270 = memref.load %arg1[%269] : memref<98xf32, #tpu.memory_space<smem>>
    %c3_117 = arith.constant 3 : index
    %271 = arith.index_cast %c1_i32_98 : i32 to index
    %c0_118 = arith.constant 0 : index
    %272 = vector.load %arg4[%c3_117, %271, %c0_118] : memref<14x22x16xf32, #tpu.memory_space<vmem>>, vector<1x16x16xf32>
    %273 = vector.shape_cast %272 : vector<1x16x16xf32> to vector<16x16xf32>
    %274 = vector.broadcast %270 : f32 to vector<16x16xf32>
    %275 = arith.mulf %273, %274 : vector<16x16xf32>
    %276 = arith.addf %265, %275 : vector<16x16xf32>
    %c7_i32_119 = arith.constant 7 : i32
    %277 = arith.muli %c1_i32_98, %c7_i32_119 : i32
    %c0_i32_120 = arith.constant 0 : i32
    %278 = arith.addi %c0_i32_120, %277 : i32
    %c4_i32_121 = arith.constant 4 : i32
    %279 = arith.addi %278, %c4_i32_121 : i32
    %280 = arith.index_cast %279 : i32 to index
    %281 = memref.load %arg1[%280] : memref<98xf32, #tpu.memory_space<smem>>
    %c4_122 = arith.constant 4 : index
    %282 = arith.index_cast %c1_i32_98 : i32 to index
    %c0_123 = arith.constant 0 : index
    %283 = vector.load %arg4[%c4_122, %282, %c0_123] : memref<14x22x16xf32, #tpu.memory_space<vmem>>, vector<1x16x16xf32>
    %284 = vector.shape_cast %283 : vector<1x16x16xf32> to vector<16x16xf32>
    %285 = vector.broadcast %281 : f32 to vector<16x16xf32>
    %286 = arith.mulf %284, %285 : vector<16x16xf32>
    %287 = arith.addf %276, %286 : vector<16x16xf32>
    %c7_i32_124 = arith.constant 7 : i32
    %288 = arith.muli %c1_i32_98, %c7_i32_124 : i32
    %c0_i32_125 = arith.constant 0 : i32
    %289 = arith.addi %c0_i32_125, %288 : i32
    %c5_i32_126 = arith.constant 5 : i32
    %290 = arith.addi %289, %c5_i32_126 : i32
    %291 = arith.index_cast %290 : i32 to index
    %292 = memref.load %arg1[%291] : memref<98xf32, #tpu.memory_space<smem>>
    %c5_127 = arith.constant 5 : index
    %293 = arith.index_cast %c1_i32_98 : i32 to index
    %c0_128 = arith.constant 0 : index
    %294 = vector.load %arg4[%c5_127, %293, %c0_128] : memref<14x22x16xf32, #tpu.memory_space<vmem>>, vector<1x16x16xf32>
    %295 = vector.shape_cast %294 : vector<1x16x16xf32> to vector<16x16xf32>
    %296 = vector.broadcast %292 : f32 to vector<16x16xf32>
    %297 = arith.mulf %295, %296 : vector<16x16xf32>
    %298 = arith.addf %287, %297 : vector<16x16xf32>
    %c7_i32_129 = arith.constant 7 : i32
    %299 = arith.muli %c1_i32_98, %c7_i32_129 : i32
    %c0_i32_130 = arith.constant 0 : i32
    %300 = arith.addi %c0_i32_130, %299 : i32
    %c6_i32_131 = arith.constant 6 : i32
    %301 = arith.addi %300, %c6_i32_131 : i32
    %302 = arith.index_cast %301 : i32 to index
    %303 = memref.load %arg1[%302] : memref<98xf32, #tpu.memory_space<smem>>
    %c6_132 = arith.constant 6 : index
    %304 = arith.index_cast %c1_i32_98 : i32 to index
    %c0_133 = arith.constant 0 : index
    %305 = vector.load %arg4[%c6_132, %304, %c0_133] : memref<14x22x16xf32, #tpu.memory_space<vmem>>, vector<1x16x16xf32>
    %306 = vector.shape_cast %305 : vector<1x16x16xf32> to vector<16x16xf32>
    %307 = vector.broadcast %303 : f32 to vector<16x16xf32>
    %308 = arith.mulf %306, %307 : vector<16x16xf32>
    %309 = arith.addf %298, %308 : vector<16x16xf32>
    %c7_i32_134 = arith.constant 7 : i32
    %310 = arith.muli %c1_i32_98, %c7_i32_134 : i32
    %c49_i32_135 = arith.constant 49 : i32
    %311 = arith.addi %c49_i32_135, %310 : i32
    %c0_i32_136 = arith.constant 0 : i32
    %312 = arith.addi %311, %c0_i32_136 : i32
    %313 = arith.index_cast %312 : i32 to index
    %314 = memref.load %arg1[%313] : memref<98xf32, #tpu.memory_space<smem>>
    %c7_137 = arith.constant 7 : index
    %315 = arith.index_cast %c1_i32_98 : i32 to index
    %c0_138 = arith.constant 0 : index
    %316 = vector.load %arg4[%c7_137, %315, %c0_138] : memref<14x22x16xf32, #tpu.memory_space<vmem>>, vector<1x16x16xf32>
    %317 = vector.shape_cast %316 : vector<1x16x16xf32> to vector<16x16xf32>
    %318 = vector.broadcast %314 : f32 to vector<16x16xf32>
    %319 = arith.mulf %317, %318 : vector<16x16xf32>
    %320 = arith.addf %309, %319 : vector<16x16xf32>
    %c7_i32_139 = arith.constant 7 : i32
    %321 = arith.muli %c1_i32_98, %c7_i32_139 : i32
    %c49_i32_140 = arith.constant 49 : i32
    %322 = arith.addi %c49_i32_140, %321 : i32
    %c1_i32_141 = arith.constant 1 : i32
    %323 = arith.addi %322, %c1_i32_141 : i32
    %324 = arith.index_cast %323 : i32 to index
    %325 = memref.load %arg1[%324] : memref<98xf32, #tpu.memory_space<smem>>
    %c8_142 = arith.constant 8 : index
    %326 = arith.index_cast %c1_i32_98 : i32 to index
    %c0_143 = arith.constant 0 : index
    %327 = vector.load %arg4[%c8_142, %326, %c0_143] : memref<14x22x16xf32, #tpu.memory_space<vmem>>, vector<1x16x16xf32>
    %328 = vector.shape_cast %327 : vector<1x16x16xf32> to vector<16x16xf32>
    %329 = vector.broadcast %325 : f32 to vector<16x16xf32>
    %330 = arith.mulf %328, %329 : vector<16x16xf32>
    %331 = arith.addf %320, %330 : vector<16x16xf32>
    %c7_i32_144 = arith.constant 7 : i32
    %332 = arith.muli %c1_i32_98, %c7_i32_144 : i32
    %c49_i32_145 = arith.constant 49 : i32
    %333 = arith.addi %c49_i32_145, %332 : i32
    %c2_i32_146 = arith.constant 2 : i32
    %334 = arith.addi %333, %c2_i32_146 : i32
    %335 = arith.index_cast %334 : i32 to index
    %336 = memref.load %arg1[%335] : memref<98xf32, #tpu.memory_space<smem>>
    %c9_147 = arith.constant 9 : index
    %337 = arith.index_cast %c1_i32_98 : i32 to index
    %c0_148 = arith.constant 0 : index
    %338 = vector.load %arg4[%c9_147, %337, %c0_148] : memref<14x22x16xf32, #tpu.memory_space<vmem>>, vector<1x16x16xf32>
    %339 = vector.shape_cast %338 : vector<1x16x16xf32> to vector<16x16xf32>
    %340 = vector.broadcast %336 : f32 to vector<16x16xf32>
    %341 = arith.mulf %339, %340 : vector<16x16xf32>
    %342 = arith.addf %331, %341 : vector<16x16xf32>
    %c7_i32_149 = arith.constant 7 : i32
    %343 = arith.muli %c1_i32_98, %c7_i32_149 : i32
    %c49_i32_150 = arith.constant 49 : i32
    %344 = arith.addi %c49_i32_150, %343 : i32
    %c3_i32_151 = arith.constant 3 : i32
    %345 = arith.addi %344, %c3_i32_151 : i32
    %346 = arith.index_cast %345 : i32 to index
    %347 = memref.load %arg1[%346] : memref<98xf32, #tpu.memory_space<smem>>
    %c10_152 = arith.constant 10 : index
    %348 = arith.index_cast %c1_i32_98 : i32 to index
    %c0_153 = arith.constant 0 : index
    %349 = vector.load %arg4[%c10_152, %348, %c0_153] : memref<14x22x16xf32, #tpu.memory_space<vmem>>, vector<1x16x16xf32>
    %350 = vector.shape_cast %349 : vector<1x16x16xf32> to vector<16x16xf32>
    %351 = vector.broadcast %347 : f32 to vector<16x16xf32>
    %352 = arith.mulf %350, %351 : vector<16x16xf32>
    %353 = arith.addf %342, %352 : vector<16x16xf32>
    %c7_i32_154 = arith.constant 7 : i32
    %354 = arith.muli %c1_i32_98, %c7_i32_154 : i32
    %c49_i32_155 = arith.constant 49 : i32
    %355 = arith.addi %c49_i32_155, %354 : i32
    %c4_i32_156 = arith.constant 4 : i32
    %356 = arith.addi %355, %c4_i32_156 : i32
    %357 = arith.index_cast %356 : i32 to index
    %358 = memref.load %arg1[%357] : memref<98xf32, #tpu.memory_space<smem>>
    %c11_157 = arith.constant 11 : index
    %359 = arith.index_cast %c1_i32_98 : i32 to index
    %c0_158 = arith.constant 0 : index
    %360 = vector.load %arg4[%c11_157, %359, %c0_158] : memref<14x22x16xf32, #tpu.memory_space<vmem>>, vector<1x16x16xf32>
    %361 = vector.shape_cast %360 : vector<1x16x16xf32> to vector<16x16xf32>
    %362 = vector.broadcast %358 : f32 to vector<16x16xf32>
    %363 = arith.mulf %361, %362 : vector<16x16xf32>
    %364 = arith.addf %353, %363 : vector<16x16xf32>
    %c7_i32_159 = arith.constant 7 : i32
    %365 = arith.muli %c1_i32_98, %c7_i32_159 : i32
    %c49_i32_160 = arith.constant 49 : i32
    %366 = arith.addi %c49_i32_160, %365 : i32
    %c5_i32_161 = arith.constant 5 : i32
    %367 = arith.addi %366, %c5_i32_161 : i32
    %368 = arith.index_cast %367 : i32 to index
    %369 = memref.load %arg1[%368] : memref<98xf32, #tpu.memory_space<smem>>
    %c12_162 = arith.constant 12 : index
    %370 = arith.index_cast %c1_i32_98 : i32 to index
    %c0_163 = arith.constant 0 : index
    %371 = vector.load %arg4[%c12_162, %370, %c0_163] : memref<14x22x16xf32, #tpu.memory_space<vmem>>, vector<1x16x16xf32>
    %372 = vector.shape_cast %371 : vector<1x16x16xf32> to vector<16x16xf32>
    %373 = vector.broadcast %369 : f32 to vector<16x16xf32>
    %374 = arith.mulf %372, %373 : vector<16x16xf32>
    %375 = arith.addf %364, %374 : vector<16x16xf32>
    %c7_i32_164 = arith.constant 7 : i32
    %376 = arith.muli %c1_i32_98, %c7_i32_164 : i32
    %c49_i32_165 = arith.constant 49 : i32
    %377 = arith.addi %c49_i32_165, %376 : i32
    %c6_i32_166 = arith.constant 6 : i32
    %378 = arith.addi %377, %c6_i32_166 : i32
    %379 = arith.index_cast %378 : i32 to index
    %380 = memref.load %arg1[%379] : memref<98xf32, #tpu.memory_space<smem>>
    %c13_167 = arith.constant 13 : index
    %381 = arith.index_cast %c1_i32_98 : i32 to index
    %c0_168 = arith.constant 0 : index
    %382 = vector.load %arg4[%c13_167, %381, %c0_168] : memref<14x22x16xf32, #tpu.memory_space<vmem>>, vector<1x16x16xf32>
    %383 = vector.shape_cast %382 : vector<1x16x16xf32> to vector<16x16xf32>
    %384 = vector.broadcast %380 : f32 to vector<16x16xf32>
    %385 = arith.mulf %383, %384 : vector<16x16xf32>
    %386 = arith.addf %375, %385 : vector<16x16xf32>
    %c2_i32_169 = arith.constant 2 : i32
    %c7_i32_170 = arith.constant 7 : i32
    %387 = arith.muli %c2_i32_169, %c7_i32_170 : i32
    %c0_i32_171 = arith.constant 0 : i32
    %388 = arith.addi %c0_i32_171, %387 : i32
    %c0_i32_172 = arith.constant 0 : i32
    %389 = arith.addi %388, %c0_i32_172 : i32
    %390 = arith.index_cast %389 : i32 to index
    %391 = memref.load %arg1[%390] : memref<98xf32, #tpu.memory_space<smem>>
    %c0_173 = arith.constant 0 : index
    %392 = arith.index_cast %c2_i32_169 : i32 to index
    %c0_174 = arith.constant 0 : index
    %393 = vector.load %arg4[%c0_173, %392, %c0_174] : memref<14x22x16xf32, #tpu.memory_space<vmem>>, vector<1x16x16xf32>
    %394 = vector.shape_cast %393 : vector<1x16x16xf32> to vector<16x16xf32>
    %395 = vector.broadcast %391 : f32 to vector<16x16xf32>
    %396 = arith.mulf %394, %395 : vector<16x16xf32>
    %397 = arith.addf %386, %396 : vector<16x16xf32>
    %c7_i32_175 = arith.constant 7 : i32
    %398 = arith.muli %c2_i32_169, %c7_i32_175 : i32
    %c0_i32_176 = arith.constant 0 : i32
    %399 = arith.addi %c0_i32_176, %398 : i32
    %c1_i32_177 = arith.constant 1 : i32
    %400 = arith.addi %399, %c1_i32_177 : i32
    %401 = arith.index_cast %400 : i32 to index
    %402 = memref.load %arg1[%401] : memref<98xf32, #tpu.memory_space<smem>>
    %c1_178 = arith.constant 1 : index
    %403 = arith.index_cast %c2_i32_169 : i32 to index
    %c0_179 = arith.constant 0 : index
    %404 = vector.load %arg4[%c1_178, %403, %c0_179] : memref<14x22x16xf32, #tpu.memory_space<vmem>>, vector<1x16x16xf32>
    %405 = vector.shape_cast %404 : vector<1x16x16xf32> to vector<16x16xf32>
    %406 = vector.broadcast %402 : f32 to vector<16x16xf32>
    %407 = arith.mulf %405, %406 : vector<16x16xf32>
    %408 = arith.addf %397, %407 : vector<16x16xf32>
    %c7_i32_180 = arith.constant 7 : i32
    %409 = arith.muli %c2_i32_169, %c7_i32_180 : i32
    %c0_i32_181 = arith.constant 0 : i32
    %410 = arith.addi %c0_i32_181, %409 : i32
    %c2_i32_182 = arith.constant 2 : i32
    %411 = arith.addi %410, %c2_i32_182 : i32
    %412 = arith.index_cast %411 : i32 to index
    %413 = memref.load %arg1[%412] : memref<98xf32, #tpu.memory_space<smem>>
    %c2_183 = arith.constant 2 : index
    %414 = arith.index_cast %c2_i32_169 : i32 to index
    %c0_184 = arith.constant 0 : index
    %415 = vector.load %arg4[%c2_183, %414, %c0_184] : memref<14x22x16xf32, #tpu.memory_space<vmem>>, vector<1x16x16xf32>
    %416 = vector.shape_cast %415 : vector<1x16x16xf32> to vector<16x16xf32>
    %417 = vector.broadcast %413 : f32 to vector<16x16xf32>
    %418 = arith.mulf %416, %417 : vector<16x16xf32>
    %419 = arith.addf %408, %418 : vector<16x16xf32>
    %c7_i32_185 = arith.constant 7 : i32
    %420 = arith.muli %c2_i32_169, %c7_i32_185 : i32
    %c0_i32_186 = arith.constant 0 : i32
    %421 = arith.addi %c0_i32_186, %420 : i32
    %c3_i32_187 = arith.constant 3 : i32
    %422 = arith.addi %421, %c3_i32_187 : i32
    %423 = arith.index_cast %422 : i32 to index
    %424 = memref.load %arg1[%423] : memref<98xf32, #tpu.memory_space<smem>>
    %c3_188 = arith.constant 3 : index
    %425 = arith.index_cast %c2_i32_169 : i32 to index
    %c0_189 = arith.constant 0 : index
    %426 = vector.load %arg4[%c3_188, %425, %c0_189] : memref<14x22x16xf32, #tpu.memory_space<vmem>>, vector<1x16x16xf32>
    %427 = vector.shape_cast %426 : vector<1x16x16xf32> to vector<16x16xf32>
    %428 = vector.broadcast %424 : f32 to vector<16x16xf32>
    %429 = arith.mulf %427, %428 : vector<16x16xf32>
    %430 = arith.addf %419, %429 : vector<16x16xf32>
    %c7_i32_190 = arith.constant 7 : i32
    %431 = arith.muli %c2_i32_169, %c7_i32_190 : i32
    %c0_i32_191 = arith.constant 0 : i32
    %432 = arith.addi %c0_i32_191, %431 : i32
    %c4_i32_192 = arith.constant 4 : i32
    %433 = arith.addi %432, %c4_i32_192 : i32
    %434 = arith.index_cast %433 : i32 to index
    %435 = memref.load %arg1[%434] : memref<98xf32, #tpu.memory_space<smem>>
    %c4_193 = arith.constant 4 : index
    %436 = arith.index_cast %c2_i32_169 : i32 to index
    %c0_194 = arith.constant 0 : index
    %437 = vector.load %arg4[%c4_193, %436, %c0_194] : memref<14x22x16xf32, #tpu.memory_space<vmem>>, vector<1x16x16xf32>
    %438 = vector.shape_cast %437 : vector<1x16x16xf32> to vector<16x16xf32>
    %439 = vector.broadcast %435 : f32 to vector<16x16xf32>
    %440 = arith.mulf %438, %439 : vector<16x16xf32>
    %441 = arith.addf %430, %440 : vector<16x16xf32>
    %c7_i32_195 = arith.constant 7 : i32
    %442 = arith.muli %c2_i32_169, %c7_i32_195 : i32
    %c0_i32_196 = arith.constant 0 : i32
    %443 = arith.addi %c0_i32_196, %442 : i32
    %c5_i32_197 = arith.constant 5 : i32
    %444 = arith.addi %443, %c5_i32_197 : i32
    %445 = arith.index_cast %444 : i32 to index
    %446 = memref.load %arg1[%445] : memref<98xf32, #tpu.memory_space<smem>>
    %c5_198 = arith.constant 5 : index
    %447 = arith.index_cast %c2_i32_169 : i32 to index
    %c0_199 = arith.constant 0 : index
    %448 = vector.load %arg4[%c5_198, %447, %c0_199] : memref<14x22x16xf32, #tpu.memory_space<vmem>>, vector<1x16x16xf32>
    %449 = vector.shape_cast %448 : vector<1x16x16xf32> to vector<16x16xf32>
    %450 = vector.broadcast %446 : f32 to vector<16x16xf32>
    %451 = arith.mulf %449, %450 : vector<16x16xf32>
    %452 = arith.addf %441, %451 : vector<16x16xf32>
    %c7_i32_200 = arith.constant 7 : i32
    %453 = arith.muli %c2_i32_169, %c7_i32_200 : i32
    %c0_i32_201 = arith.constant 0 : i32
    %454 = arith.addi %c0_i32_201, %453 : i32
    %c6_i32_202 = arith.constant 6 : i32
    %455 = arith.addi %454, %c6_i32_202 : i32
    %456 = arith.index_cast %455 : i32 to index
    %457 = memref.load %arg1[%456] : memref<98xf32, #tpu.memory_space<smem>>
    %c6_203 = arith.constant 6 : index
    %458 = arith.index_cast %c2_i32_169 : i32 to index
    %c0_204 = arith.constant 0 : index
    %459 = vector.load %arg4[%c6_203, %458, %c0_204] : memref<14x22x16xf32, #tpu.memory_space<vmem>>, vector<1x16x16xf32>
    %460 = vector.shape_cast %459 : vector<1x16x16xf32> to vector<16x16xf32>
    %461 = vector.broadcast %457 : f32 to vector<16x16xf32>
    %462 = arith.mulf %460, %461 : vector<16x16xf32>
    %463 = arith.addf %452, %462 : vector<16x16xf32>
    %c7_i32_205 = arith.constant 7 : i32
    %464 = arith.muli %c2_i32_169, %c7_i32_205 : i32
    %c49_i32_206 = arith.constant 49 : i32
    %465 = arith.addi %c49_i32_206, %464 : i32
    %c0_i32_207 = arith.constant 0 : i32
    %466 = arith.addi %465, %c0_i32_207 : i32
    %467 = arith.index_cast %466 : i32 to index
    %468 = memref.load %arg1[%467] : memref<98xf32, #tpu.memory_space<smem>>
    %c7_208 = arith.constant 7 : index
    %469 = arith.index_cast %c2_i32_169 : i32 to index
    %c0_209 = arith.constant 0 : index
    %470 = vector.load %arg4[%c7_208, %469, %c0_209] : memref<14x22x16xf32, #tpu.memory_space<vmem>>, vector<1x16x16xf32>
    %471 = vector.shape_cast %470 : vector<1x16x16xf32> to vector<16x16xf32>
    %472 = vector.broadcast %468 : f32 to vector<16x16xf32>
    %473 = arith.mulf %471, %472 : vector<16x16xf32>
    %474 = arith.addf %463, %473 : vector<16x16xf32>
    %c7_i32_210 = arith.constant 7 : i32
    %475 = arith.muli %c2_i32_169, %c7_i32_210 : i32
    %c49_i32_211 = arith.constant 49 : i32
    %476 = arith.addi %c49_i32_211, %475 : i32
    %c1_i32_212 = arith.constant 1 : i32
    %477 = arith.addi %476, %c1_i32_212 : i32
    %478 = arith.index_cast %477 : i32 to index
    %479 = memref.load %arg1[%478] : memref<98xf32, #tpu.memory_space<smem>>
    %c8_213 = arith.constant 8 : index
    %480 = arith.index_cast %c2_i32_169 : i32 to index
    %c0_214 = arith.constant 0 : index
    %481 = vector.load %arg4[%c8_213, %480, %c0_214] : memref<14x22x16xf32, #tpu.memory_space<vmem>>, vector<1x16x16xf32>
    %482 = vector.shape_cast %481 : vector<1x16x16xf32> to vector<16x16xf32>
    %483 = vector.broadcast %479 : f32 to vector<16x16xf32>
    %484 = arith.mulf %482, %483 : vector<16x16xf32>
    %485 = arith.addf %474, %484 : vector<16x16xf32>
    %c7_i32_215 = arith.constant 7 : i32
    %486 = arith.muli %c2_i32_169, %c7_i32_215 : i32
    %c49_i32_216 = arith.constant 49 : i32
    %487 = arith.addi %c49_i32_216, %486 : i32
    %c2_i32_217 = arith.constant 2 : i32
    %488 = arith.addi %487, %c2_i32_217 : i32
    %489 = arith.index_cast %488 : i32 to index
    %490 = memref.load %arg1[%489] : memref<98xf32, #tpu.memory_space<smem>>
    %c9_218 = arith.constant 9 : index
    %491 = arith.index_cast %c2_i32_169 : i32 to index
    %c0_219 = arith.constant 0 : index
    %492 = vector.load %arg4[%c9_218, %491, %c0_219] : memref<14x22x16xf32, #tpu.memory_space<vmem>>, vector<1x16x16xf32>
    %493 = vector.shape_cast %492 : vector<1x16x16xf32> to vector<16x16xf32>
    %494 = vector.broadcast %490 : f32 to vector<16x16xf32>
    %495 = arith.mulf %493, %494 : vector<16x16xf32>
    %496 = arith.addf %485, %495 : vector<16x16xf32>
    %c7_i32_220 = arith.constant 7 : i32
    %497 = arith.muli %c2_i32_169, %c7_i32_220 : i32
    %c49_i32_221 = arith.constant 49 : i32
    %498 = arith.addi %c49_i32_221, %497 : i32
    %c3_i32_222 = arith.constant 3 : i32
    %499 = arith.addi %498, %c3_i32_222 : i32
    %500 = arith.index_cast %499 : i32 to index
    %501 = memref.load %arg1[%500] : memref<98xf32, #tpu.memory_space<smem>>
    %c10_223 = arith.constant 10 : index
    %502 = arith.index_cast %c2_i32_169 : i32 to index
    %c0_224 = arith.constant 0 : index
    %503 = vector.load %arg4[%c10_223, %502, %c0_224] : memref<14x22x16xf32, #tpu.memory_space<vmem>>, vector<1x16x16xf32>
    %504 = vector.shape_cast %503 : vector<1x16x16xf32> to vector<16x16xf32>
    %505 = vector.broadcast %501 : f32 to vector<16x16xf32>
    %506 = arith.mulf %504, %505 : vector<16x16xf32>
    %507 = arith.addf %496, %506 : vector<16x16xf32>
    %c7_i32_225 = arith.constant 7 : i32
    %508 = arith.muli %c2_i32_169, %c7_i32_225 : i32
    %c49_i32_226 = arith.constant 49 : i32
    %509 = arith.addi %c49_i32_226, %508 : i32
    %c4_i32_227 = arith.constant 4 : i32
    %510 = arith.addi %509, %c4_i32_227 : i32
    %511 = arith.index_cast %510 : i32 to index
    %512 = memref.load %arg1[%511] : memref<98xf32, #tpu.memory_space<smem>>
    %c11_228 = arith.constant 11 : index
    %513 = arith.index_cast %c2_i32_169 : i32 to index
    %c0_229 = arith.constant 0 : index
    %514 = vector.load %arg4[%c11_228, %513, %c0_229] : memref<14x22x16xf32, #tpu.memory_space<vmem>>, vector<1x16x16xf32>
    %515 = vector.shape_cast %514 : vector<1x16x16xf32> to vector<16x16xf32>
    %516 = vector.broadcast %512 : f32 to vector<16x16xf32>
    %517 = arith.mulf %515, %516 : vector<16x16xf32>
    %518 = arith.addf %507, %517 : vector<16x16xf32>
    %c7_i32_230 = arith.constant 7 : i32
    %519 = arith.muli %c2_i32_169, %c7_i32_230 : i32
    %c49_i32_231 = arith.constant 49 : i32
    %520 = arith.addi %c49_i32_231, %519 : i32
    %c5_i32_232 = arith.constant 5 : i32
    %521 = arith.addi %520, %c5_i32_232 : i32
    %522 = arith.index_cast %521 : i32 to index
    %523 = memref.load %arg1[%522] : memref<98xf32, #tpu.memory_space<smem>>
    %c12_233 = arith.constant 12 : index
    %524 = arith.index_cast %c2_i32_169 : i32 to index
    %c0_234 = arith.constant 0 : index
    %525 = vector.load %arg4[%c12_233, %524, %c0_234] : memref<14x22x16xf32, #tpu.memory_space<vmem>>, vector<1x16x16xf32>
    %526 = vector.shape_cast %525 : vector<1x16x16xf32> to vector<16x16xf32>
    %527 = vector.broadcast %523 : f32 to vector<16x16xf32>
    %528 = arith.mulf %526, %527 : vector<16x16xf32>
    %529 = arith.addf %518, %528 : vector<16x16xf32>
    %c7_i32_235 = arith.constant 7 : i32
    %530 = arith.muli %c2_i32_169, %c7_i32_235 : i32
    %c49_i32_236 = arith.constant 49 : i32
    %531 = arith.addi %c49_i32_236, %530 : i32
    %c6_i32_237 = arith.constant 6 : i32
    %532 = arith.addi %531, %c6_i32_237 : i32
    %533 = arith.index_cast %532 : i32 to index
    %534 = memref.load %arg1[%533] : memref<98xf32, #tpu.memory_space<smem>>
    %c13_238 = arith.constant 13 : index
    %535 = arith.index_cast %c2_i32_169 : i32 to index
    %c0_239 = arith.constant 0 : index
    %536 = vector.load %arg4[%c13_238, %535, %c0_239] : memref<14x22x16xf32, #tpu.memory_space<vmem>>, vector<1x16x16xf32>
    %537 = vector.shape_cast %536 : vector<1x16x16xf32> to vector<16x16xf32>
    %538 = vector.broadcast %534 : f32 to vector<16x16xf32>
    %539 = arith.mulf %537, %538 : vector<16x16xf32>
    %540 = arith.addf %529, %539 : vector<16x16xf32>
    %c3_i32_240 = arith.constant 3 : i32
    %c7_i32_241 = arith.constant 7 : i32
    %541 = arith.muli %c3_i32_240, %c7_i32_241 : i32
    %c0_i32_242 = arith.constant 0 : i32
    %542 = arith.addi %c0_i32_242, %541 : i32
    %c0_i32_243 = arith.constant 0 : i32
    %543 = arith.addi %542, %c0_i32_243 : i32
    %544 = arith.index_cast %543 : i32 to index
    %545 = memref.load %arg1[%544] : memref<98xf32, #tpu.memory_space<smem>>
    %c0_244 = arith.constant 0 : index
    %546 = arith.index_cast %c3_i32_240 : i32 to index
    %c0_245 = arith.constant 0 : index
    %547 = vector.load %arg4[%c0_244, %546, %c0_245] : memref<14x22x16xf32, #tpu.memory_space<vmem>>, vector<1x16x16xf32>
    %548 = vector.shape_cast %547 : vector<1x16x16xf32> to vector<16x16xf32>
    %549 = vector.broadcast %545 : f32 to vector<16x16xf32>
    %550 = arith.mulf %548, %549 : vector<16x16xf32>
    %551 = arith.addf %540, %550 : vector<16x16xf32>
    %c7_i32_246 = arith.constant 7 : i32
    %552 = arith.muli %c3_i32_240, %c7_i32_246 : i32
    %c0_i32_247 = arith.constant 0 : i32
    %553 = arith.addi %c0_i32_247, %552 : i32
    %c1_i32_248 = arith.constant 1 : i32
    %554 = arith.addi %553, %c1_i32_248 : i32
    %555 = arith.index_cast %554 : i32 to index
    %556 = memref.load %arg1[%555] : memref<98xf32, #tpu.memory_space<smem>>
    %c1_249 = arith.constant 1 : index
    %557 = arith.index_cast %c3_i32_240 : i32 to index
    %c0_250 = arith.constant 0 : index
    %558 = vector.load %arg4[%c1_249, %557, %c0_250] : memref<14x22x16xf32, #tpu.memory_space<vmem>>, vector<1x16x16xf32>
    %559 = vector.shape_cast %558 : vector<1x16x16xf32> to vector<16x16xf32>
    %560 = vector.broadcast %556 : f32 to vector<16x16xf32>
    %561 = arith.mulf %559, %560 : vector<16x16xf32>
    %562 = arith.addf %551, %561 : vector<16x16xf32>
    %c7_i32_251 = arith.constant 7 : i32
    %563 = arith.muli %c3_i32_240, %c7_i32_251 : i32
    %c0_i32_252 = arith.constant 0 : i32
    %564 = arith.addi %c0_i32_252, %563 : i32
    %c2_i32_253 = arith.constant 2 : i32
    %565 = arith.addi %564, %c2_i32_253 : i32
    %566 = arith.index_cast %565 : i32 to index
    %567 = memref.load %arg1[%566] : memref<98xf32, #tpu.memory_space<smem>>
    %c2_254 = arith.constant 2 : index
    %568 = arith.index_cast %c3_i32_240 : i32 to index
    %c0_255 = arith.constant 0 : index
    %569 = vector.load %arg4[%c2_254, %568, %c0_255] : memref<14x22x16xf32, #tpu.memory_space<vmem>>, vector<1x16x16xf32>
    %570 = vector.shape_cast %569 : vector<1x16x16xf32> to vector<16x16xf32>
    %571 = vector.broadcast %567 : f32 to vector<16x16xf32>
    %572 = arith.mulf %570, %571 : vector<16x16xf32>
    %573 = arith.addf %562, %572 : vector<16x16xf32>
    %c7_i32_256 = arith.constant 7 : i32
    %574 = arith.muli %c3_i32_240, %c7_i32_256 : i32
    %c0_i32_257 = arith.constant 0 : i32
    %575 = arith.addi %c0_i32_257, %574 : i32
    %c3_i32_258 = arith.constant 3 : i32
    %576 = arith.addi %575, %c3_i32_258 : i32
    %577 = arith.index_cast %576 : i32 to index
    %578 = memref.load %arg1[%577] : memref<98xf32, #tpu.memory_space<smem>>
    %c3_259 = arith.constant 3 : index
    %579 = arith.index_cast %c3_i32_240 : i32 to index
    %c0_260 = arith.constant 0 : index
    %580 = vector.load %arg4[%c3_259, %579, %c0_260] : memref<14x22x16xf32, #tpu.memory_space<vmem>>, vector<1x16x16xf32>
    %581 = vector.shape_cast %580 : vector<1x16x16xf32> to vector<16x16xf32>
    %582 = vector.broadcast %578 : f32 to vector<16x16xf32>
    %583 = arith.mulf %581, %582 : vector<16x16xf32>
    %584 = arith.addf %573, %583 : vector<16x16xf32>
    %c7_i32_261 = arith.constant 7 : i32
    %585 = arith.muli %c3_i32_240, %c7_i32_261 : i32
    %c0_i32_262 = arith.constant 0 : i32
    %586 = arith.addi %c0_i32_262, %585 : i32
    %c4_i32_263 = arith.constant 4 : i32
    %587 = arith.addi %586, %c4_i32_263 : i32
    %588 = arith.index_cast %587 : i32 to index
    %589 = memref.load %arg1[%588] : memref<98xf32, #tpu.memory_space<smem>>
    %c4_264 = arith.constant 4 : index
    %590 = arith.index_cast %c3_i32_240 : i32 to index
    %c0_265 = arith.constant 0 : index
    %591 = vector.load %arg4[%c4_264, %590, %c0_265] : memref<14x22x16xf32, #tpu.memory_space<vmem>>, vector<1x16x16xf32>
    %592 = vector.shape_cast %591 : vector<1x16x16xf32> to vector<16x16xf32>
    %593 = vector.broadcast %589 : f32 to vector<16x16xf32>
    %594 = arith.mulf %592, %593 : vector<16x16xf32>
    %595 = arith.addf %584, %594 : vector<16x16xf32>
    %c7_i32_266 = arith.constant 7 : i32
    %596 = arith.muli %c3_i32_240, %c7_i32_266 : i32
    %c0_i32_267 = arith.constant 0 : i32
    %597 = arith.addi %c0_i32_267, %596 : i32
    %c5_i32_268 = arith.constant 5 : i32
    %598 = arith.addi %597, %c5_i32_268 : i32
    %599 = arith.index_cast %598 : i32 to index
    %600 = memref.load %arg1[%599] : memref<98xf32, #tpu.memory_space<smem>>
    %c5_269 = arith.constant 5 : index
    %601 = arith.index_cast %c3_i32_240 : i32 to index
    %c0_270 = arith.constant 0 : index
    %602 = vector.load %arg4[%c5_269, %601, %c0_270] : memref<14x22x16xf32, #tpu.memory_space<vmem>>, vector<1x16x16xf32>
    %603 = vector.shape_cast %602 : vector<1x16x16xf32> to vector<16x16xf32>
    %604 = vector.broadcast %600 : f32 to vector<16x16xf32>
    %605 = arith.mulf %603, %604 : vector<16x16xf32>
    %606 = arith.addf %595, %605 : vector<16x16xf32>
    %c7_i32_271 = arith.constant 7 : i32
    %607 = arith.muli %c3_i32_240, %c7_i32_271 : i32
    %c0_i32_272 = arith.constant 0 : i32
    %608 = arith.addi %c0_i32_272, %607 : i32
    %c6_i32_273 = arith.constant 6 : i32
    %609 = arith.addi %608, %c6_i32_273 : i32
    %610 = arith.index_cast %609 : i32 to index
    %611 = memref.load %arg1[%610] : memref<98xf32, #tpu.memory_space<smem>>
    %c6_274 = arith.constant 6 : index
    %612 = arith.index_cast %c3_i32_240 : i32 to index
    %c0_275 = arith.constant 0 : index
    %613 = vector.load %arg4[%c6_274, %612, %c0_275] : memref<14x22x16xf32, #tpu.memory_space<vmem>>, vector<1x16x16xf32>
    %614 = vector.shape_cast %613 : vector<1x16x16xf32> to vector<16x16xf32>
    %615 = vector.broadcast %611 : f32 to vector<16x16xf32>
    %616 = arith.mulf %614, %615 : vector<16x16xf32>
    %617 = arith.addf %606, %616 : vector<16x16xf32>
    %c7_i32_276 = arith.constant 7 : i32
    %618 = arith.muli %c3_i32_240, %c7_i32_276 : i32
    %c49_i32_277 = arith.constant 49 : i32
    %619 = arith.addi %c49_i32_277, %618 : i32
    %c0_i32_278 = arith.constant 0 : i32
    %620 = arith.addi %619, %c0_i32_278 : i32
    %621 = arith.index_cast %620 : i32 to index
    %622 = memref.load %arg1[%621] : memref<98xf32, #tpu.memory_space<smem>>
    %c7_279 = arith.constant 7 : index
    %623 = arith.index_cast %c3_i32_240 : i32 to index
    %c0_280 = arith.constant 0 : index
    %624 = vector.load %arg4[%c7_279, %623, %c0_280] : memref<14x22x16xf32, #tpu.memory_space<vmem>>, vector<1x16x16xf32>
    %625 = vector.shape_cast %624 : vector<1x16x16xf32> to vector<16x16xf32>
    %626 = vector.broadcast %622 : f32 to vector<16x16xf32>
    %627 = arith.mulf %625, %626 : vector<16x16xf32>
    %628 = arith.addf %617, %627 : vector<16x16xf32>
    %c7_i32_281 = arith.constant 7 : i32
    %629 = arith.muli %c3_i32_240, %c7_i32_281 : i32
    %c49_i32_282 = arith.constant 49 : i32
    %630 = arith.addi %c49_i32_282, %629 : i32
    %c1_i32_283 = arith.constant 1 : i32
    %631 = arith.addi %630, %c1_i32_283 : i32
    %632 = arith.index_cast %631 : i32 to index
    %633 = memref.load %arg1[%632] : memref<98xf32, #tpu.memory_space<smem>>
    %c8_284 = arith.constant 8 : index
    %634 = arith.index_cast %c3_i32_240 : i32 to index
    %c0_285 = arith.constant 0 : index
    %635 = vector.load %arg4[%c8_284, %634, %c0_285] : memref<14x22x16xf32, #tpu.memory_space<vmem>>, vector<1x16x16xf32>
    %636 = vector.shape_cast %635 : vector<1x16x16xf32> to vector<16x16xf32>
    %637 = vector.broadcast %633 : f32 to vector<16x16xf32>
    %638 = arith.mulf %636, %637 : vector<16x16xf32>
    %639 = arith.addf %628, %638 : vector<16x16xf32>
    %c7_i32_286 = arith.constant 7 : i32
    %640 = arith.muli %c3_i32_240, %c7_i32_286 : i32
    %c49_i32_287 = arith.constant 49 : i32
    %641 = arith.addi %c49_i32_287, %640 : i32
    %c2_i32_288 = arith.constant 2 : i32
    %642 = arith.addi %641, %c2_i32_288 : i32
    %643 = arith.index_cast %642 : i32 to index
    %644 = memref.load %arg1[%643] : memref<98xf32, #tpu.memory_space<smem>>
    %c9_289 = arith.constant 9 : index
    %645 = arith.index_cast %c3_i32_240 : i32 to index
    %c0_290 = arith.constant 0 : index
    %646 = vector.load %arg4[%c9_289, %645, %c0_290] : memref<14x22x16xf32, #tpu.memory_space<vmem>>, vector<1x16x16xf32>
    %647 = vector.shape_cast %646 : vector<1x16x16xf32> to vector<16x16xf32>
    %648 = vector.broadcast %644 : f32 to vector<16x16xf32>
    %649 = arith.mulf %647, %648 : vector<16x16xf32>
    %650 = arith.addf %639, %649 : vector<16x16xf32>
    %c7_i32_291 = arith.constant 7 : i32
    %651 = arith.muli %c3_i32_240, %c7_i32_291 : i32
    %c49_i32_292 = arith.constant 49 : i32
    %652 = arith.addi %c49_i32_292, %651 : i32
    %c3_i32_293 = arith.constant 3 : i32
    %653 = arith.addi %652, %c3_i32_293 : i32
    %654 = arith.index_cast %653 : i32 to index
    %655 = memref.load %arg1[%654] : memref<98xf32, #tpu.memory_space<smem>>
    %c10_294 = arith.constant 10 : index
    %656 = arith.index_cast %c3_i32_240 : i32 to index
    %c0_295 = arith.constant 0 : index
    %657 = vector.load %arg4[%c10_294, %656, %c0_295] : memref<14x22x16xf32, #tpu.memory_space<vmem>>, vector<1x16x16xf32>
    %658 = vector.shape_cast %657 : vector<1x16x16xf32> to vector<16x16xf32>
    %659 = vector.broadcast %655 : f32 to vector<16x16xf32>
    %660 = arith.mulf %658, %659 : vector<16x16xf32>
    %661 = arith.addf %650, %660 : vector<16x16xf32>
    %c7_i32_296 = arith.constant 7 : i32
    %662 = arith.muli %c3_i32_240, %c7_i32_296 : i32
    %c49_i32_297 = arith.constant 49 : i32
    %663 = arith.addi %c49_i32_297, %662 : i32
    %c4_i32_298 = arith.constant 4 : i32
    %664 = arith.addi %663, %c4_i32_298 : i32
    %665 = arith.index_cast %664 : i32 to index
    %666 = memref.load %arg1[%665] : memref<98xf32, #tpu.memory_space<smem>>
    %c11_299 = arith.constant 11 : index
    %667 = arith.index_cast %c3_i32_240 : i32 to index
    %c0_300 = arith.constant 0 : index
    %668 = vector.load %arg4[%c11_299, %667, %c0_300] : memref<14x22x16xf32, #tpu.memory_space<vmem>>, vector<1x16x16xf32>
    %669 = vector.shape_cast %668 : vector<1x16x16xf32> to vector<16x16xf32>
    %670 = vector.broadcast %666 : f32 to vector<16x16xf32>
    %671 = arith.mulf %669, %670 : vector<16x16xf32>
    %672 = arith.addf %661, %671 : vector<16x16xf32>
    %c7_i32_301 = arith.constant 7 : i32
    %673 = arith.muli %c3_i32_240, %c7_i32_301 : i32
    %c49_i32_302 = arith.constant 49 : i32
    %674 = arith.addi %c49_i32_302, %673 : i32
    %c5_i32_303 = arith.constant 5 : i32
    %675 = arith.addi %674, %c5_i32_303 : i32
    %676 = arith.index_cast %675 : i32 to index
    %677 = memref.load %arg1[%676] : memref<98xf32, #tpu.memory_space<smem>>
    %c12_304 = arith.constant 12 : index
    %678 = arith.index_cast %c3_i32_240 : i32 to index
    %c0_305 = arith.constant 0 : index
    %679 = vector.load %arg4[%c12_304, %678, %c0_305] : memref<14x22x16xf32, #tpu.memory_space<vmem>>, vector<1x16x16xf32>
    %680 = vector.shape_cast %679 : vector<1x16x16xf32> to vector<16x16xf32>
    %681 = vector.broadcast %677 : f32 to vector<16x16xf32>
    %682 = arith.mulf %680, %681 : vector<16x16xf32>
    %683 = arith.addf %672, %682 : vector<16x16xf32>
    %c7_i32_306 = arith.constant 7 : i32
    %684 = arith.muli %c3_i32_240, %c7_i32_306 : i32
    %c49_i32_307 = arith.constant 49 : i32
    %685 = arith.addi %c49_i32_307, %684 : i32
    %c6_i32_308 = arith.constant 6 : i32
    %686 = arith.addi %685, %c6_i32_308 : i32
    %687 = arith.index_cast %686 : i32 to index
    %688 = memref.load %arg1[%687] : memref<98xf32, #tpu.memory_space<smem>>
    %c13_309 = arith.constant 13 : index
    %689 = arith.index_cast %c3_i32_240 : i32 to index
    %c0_310 = arith.constant 0 : index
    %690 = vector.load %arg4[%c13_309, %689, %c0_310] : memref<14x22x16xf32, #tpu.memory_space<vmem>>, vector<1x16x16xf32>
    %691 = vector.shape_cast %690 : vector<1x16x16xf32> to vector<16x16xf32>
    %692 = vector.broadcast %688 : f32 to vector<16x16xf32>
    %693 = arith.mulf %691, %692 : vector<16x16xf32>
    %694 = arith.addf %683, %693 : vector<16x16xf32>
    %c4_i32_311 = arith.constant 4 : i32
    %c7_i32_312 = arith.constant 7 : i32
    %695 = arith.muli %c4_i32_311, %c7_i32_312 : i32
    %c0_i32_313 = arith.constant 0 : i32
    %696 = arith.addi %c0_i32_313, %695 : i32
    %c0_i32_314 = arith.constant 0 : i32
    %697 = arith.addi %696, %c0_i32_314 : i32
    %698 = arith.index_cast %697 : i32 to index
    %699 = memref.load %arg1[%698] : memref<98xf32, #tpu.memory_space<smem>>
    %c0_315 = arith.constant 0 : index
    %700 = arith.index_cast %c4_i32_311 : i32 to index
    %c0_316 = arith.constant 0 : index
    %701 = vector.load %arg4[%c0_315, %700, %c0_316] : memref<14x22x16xf32, #tpu.memory_space<vmem>>, vector<1x16x16xf32>
    %702 = vector.shape_cast %701 : vector<1x16x16xf32> to vector<16x16xf32>
    %703 = vector.broadcast %699 : f32 to vector<16x16xf32>
    %704 = arith.mulf %702, %703 : vector<16x16xf32>
    %705 = arith.addf %694, %704 : vector<16x16xf32>
    %c7_i32_317 = arith.constant 7 : i32
    %706 = arith.muli %c4_i32_311, %c7_i32_317 : i32
    %c0_i32_318 = arith.constant 0 : i32
    %707 = arith.addi %c0_i32_318, %706 : i32
    %c1_i32_319 = arith.constant 1 : i32
    %708 = arith.addi %707, %c1_i32_319 : i32
    %709 = arith.index_cast %708 : i32 to index
    %710 = memref.load %arg1[%709] : memref<98xf32, #tpu.memory_space<smem>>
    %c1_320 = arith.constant 1 : index
    %711 = arith.index_cast %c4_i32_311 : i32 to index
    %c0_321 = arith.constant 0 : index
    %712 = vector.load %arg4[%c1_320, %711, %c0_321] : memref<14x22x16xf32, #tpu.memory_space<vmem>>, vector<1x16x16xf32>
    %713 = vector.shape_cast %712 : vector<1x16x16xf32> to vector<16x16xf32>
    %714 = vector.broadcast %710 : f32 to vector<16x16xf32>
    %715 = arith.mulf %713, %714 : vector<16x16xf32>
    %716 = arith.addf %705, %715 : vector<16x16xf32>
    %c7_i32_322 = arith.constant 7 : i32
    %717 = arith.muli %c4_i32_311, %c7_i32_322 : i32
    %c0_i32_323 = arith.constant 0 : i32
    %718 = arith.addi %c0_i32_323, %717 : i32
    %c2_i32_324 = arith.constant 2 : i32
    %719 = arith.addi %718, %c2_i32_324 : i32
    %720 = arith.index_cast %719 : i32 to index
    %721 = memref.load %arg1[%720] : memref<98xf32, #tpu.memory_space<smem>>
    %c2_325 = arith.constant 2 : index
    %722 = arith.index_cast %c4_i32_311 : i32 to index
    %c0_326 = arith.constant 0 : index
    %723 = vector.load %arg4[%c2_325, %722, %c0_326] : memref<14x22x16xf32, #tpu.memory_space<vmem>>, vector<1x16x16xf32>
    %724 = vector.shape_cast %723 : vector<1x16x16xf32> to vector<16x16xf32>
    %725 = vector.broadcast %721 : f32 to vector<16x16xf32>
    %726 = arith.mulf %724, %725 : vector<16x16xf32>
    %727 = arith.addf %716, %726 : vector<16x16xf32>
    %c7_i32_327 = arith.constant 7 : i32
    %728 = arith.muli %c4_i32_311, %c7_i32_327 : i32
    %c0_i32_328 = arith.constant 0 : i32
    %729 = arith.addi %c0_i32_328, %728 : i32
    %c3_i32_329 = arith.constant 3 : i32
    %730 = arith.addi %729, %c3_i32_329 : i32
    %731 = arith.index_cast %730 : i32 to index
    %732 = memref.load %arg1[%731] : memref<98xf32, #tpu.memory_space<smem>>
    %c3_330 = arith.constant 3 : index
    %733 = arith.index_cast %c4_i32_311 : i32 to index
    %c0_331 = arith.constant 0 : index
    %734 = vector.load %arg4[%c3_330, %733, %c0_331] : memref<14x22x16xf32, #tpu.memory_space<vmem>>, vector<1x16x16xf32>
    %735 = vector.shape_cast %734 : vector<1x16x16xf32> to vector<16x16xf32>
    %736 = vector.broadcast %732 : f32 to vector<16x16xf32>
    %737 = arith.mulf %735, %736 : vector<16x16xf32>
    %738 = arith.addf %727, %737 : vector<16x16xf32>
    %c7_i32_332 = arith.constant 7 : i32
    %739 = arith.muli %c4_i32_311, %c7_i32_332 : i32
    %c0_i32_333 = arith.constant 0 : i32
    %740 = arith.addi %c0_i32_333, %739 : i32
    %c4_i32_334 = arith.constant 4 : i32
    %741 = arith.addi %740, %c4_i32_334 : i32
    %742 = arith.index_cast %741 : i32 to index
    %743 = memref.load %arg1[%742] : memref<98xf32, #tpu.memory_space<smem>>
    %c4_335 = arith.constant 4 : index
    %744 = arith.index_cast %c4_i32_311 : i32 to index
    %c0_336 = arith.constant 0 : index
    %745 = vector.load %arg4[%c4_335, %744, %c0_336] : memref<14x22x16xf32, #tpu.memory_space<vmem>>, vector<1x16x16xf32>
    %746 = vector.shape_cast %745 : vector<1x16x16xf32> to vector<16x16xf32>
    %747 = vector.broadcast %743 : f32 to vector<16x16xf32>
    %748 = arith.mulf %746, %747 : vector<16x16xf32>
    %749 = arith.addf %738, %748 : vector<16x16xf32>
    %c7_i32_337 = arith.constant 7 : i32
    %750 = arith.muli %c4_i32_311, %c7_i32_337 : i32
    %c0_i32_338 = arith.constant 0 : i32
    %751 = arith.addi %c0_i32_338, %750 : i32
    %c5_i32_339 = arith.constant 5 : i32
    %752 = arith.addi %751, %c5_i32_339 : i32
    %753 = arith.index_cast %752 : i32 to index
    %754 = memref.load %arg1[%753] : memref<98xf32, #tpu.memory_space<smem>>
    %c5_340 = arith.constant 5 : index
    %755 = arith.index_cast %c4_i32_311 : i32 to index
    %c0_341 = arith.constant 0 : index
    %756 = vector.load %arg4[%c5_340, %755, %c0_341] : memref<14x22x16xf32, #tpu.memory_space<vmem>>, vector<1x16x16xf32>
    %757 = vector.shape_cast %756 : vector<1x16x16xf32> to vector<16x16xf32>
    %758 = vector.broadcast %754 : f32 to vector<16x16xf32>
    %759 = arith.mulf %757, %758 : vector<16x16xf32>
    %760 = arith.addf %749, %759 : vector<16x16xf32>
    %c7_i32_342 = arith.constant 7 : i32
    %761 = arith.muli %c4_i32_311, %c7_i32_342 : i32
    %c0_i32_343 = arith.constant 0 : i32
    %762 = arith.addi %c0_i32_343, %761 : i32
    %c6_i32_344 = arith.constant 6 : i32
    %763 = arith.addi %762, %c6_i32_344 : i32
    %764 = arith.index_cast %763 : i32 to index
    %765 = memref.load %arg1[%764] : memref<98xf32, #tpu.memory_space<smem>>
    %c6_345 = arith.constant 6 : index
    %766 = arith.index_cast %c4_i32_311 : i32 to index
    %c0_346 = arith.constant 0 : index
    %767 = vector.load %arg4[%c6_345, %766, %c0_346] : memref<14x22x16xf32, #tpu.memory_space<vmem>>, vector<1x16x16xf32>
    %768 = vector.shape_cast %767 : vector<1x16x16xf32> to vector<16x16xf32>
    %769 = vector.broadcast %765 : f32 to vector<16x16xf32>
    %770 = arith.mulf %768, %769 : vector<16x16xf32>
    %771 = arith.addf %760, %770 : vector<16x16xf32>
    %c7_i32_347 = arith.constant 7 : i32
    %772 = arith.muli %c4_i32_311, %c7_i32_347 : i32
    %c49_i32_348 = arith.constant 49 : i32
    %773 = arith.addi %c49_i32_348, %772 : i32
    %c0_i32_349 = arith.constant 0 : i32
    %774 = arith.addi %773, %c0_i32_349 : i32
    %775 = arith.index_cast %774 : i32 to index
    %776 = memref.load %arg1[%775] : memref<98xf32, #tpu.memory_space<smem>>
    %c7_350 = arith.constant 7 : index
    %777 = arith.index_cast %c4_i32_311 : i32 to index
    %c0_351 = arith.constant 0 : index
    %778 = vector.load %arg4[%c7_350, %777, %c0_351] : memref<14x22x16xf32, #tpu.memory_space<vmem>>, vector<1x16x16xf32>
    %779 = vector.shape_cast %778 : vector<1x16x16xf32> to vector<16x16xf32>
    %780 = vector.broadcast %776 : f32 to vector<16x16xf32>
    %781 = arith.mulf %779, %780 : vector<16x16xf32>
    %782 = arith.addf %771, %781 : vector<16x16xf32>
    %c7_i32_352 = arith.constant 7 : i32
    %783 = arith.muli %c4_i32_311, %c7_i32_352 : i32
    %c49_i32_353 = arith.constant 49 : i32
    %784 = arith.addi %c49_i32_353, %783 : i32
    %c1_i32_354 = arith.constant 1 : i32
    %785 = arith.addi %784, %c1_i32_354 : i32
    %786 = arith.index_cast %785 : i32 to index
    %787 = memref.load %arg1[%786] : memref<98xf32, #tpu.memory_space<smem>>
    %c8_355 = arith.constant 8 : index
    %788 = arith.index_cast %c4_i32_311 : i32 to index
    %c0_356 = arith.constant 0 : index
    %789 = vector.load %arg4[%c8_355, %788, %c0_356] : memref<14x22x16xf32, #tpu.memory_space<vmem>>, vector<1x16x16xf32>
    %790 = vector.shape_cast %789 : vector<1x16x16xf32> to vector<16x16xf32>
    %791 = vector.broadcast %787 : f32 to vector<16x16xf32>
    %792 = arith.mulf %790, %791 : vector<16x16xf32>
    %793 = arith.addf %782, %792 : vector<16x16xf32>
    %c7_i32_357 = arith.constant 7 : i32
    %794 = arith.muli %c4_i32_311, %c7_i32_357 : i32
    %c49_i32_358 = arith.constant 49 : i32
    %795 = arith.addi %c49_i32_358, %794 : i32
    %c2_i32_359 = arith.constant 2 : i32
    %796 = arith.addi %795, %c2_i32_359 : i32
    %797 = arith.index_cast %796 : i32 to index
    %798 = memref.load %arg1[%797] : memref<98xf32, #tpu.memory_space<smem>>
    %c9_360 = arith.constant 9 : index
    %799 = arith.index_cast %c4_i32_311 : i32 to index
    %c0_361 = arith.constant 0 : index
    %800 = vector.load %arg4[%c9_360, %799, %c0_361] : memref<14x22x16xf32, #tpu.memory_space<vmem>>, vector<1x16x16xf32>
    %801 = vector.shape_cast %800 : vector<1x16x16xf32> to vector<16x16xf32>
    %802 = vector.broadcast %798 : f32 to vector<16x16xf32>
    %803 = arith.mulf %801, %802 : vector<16x16xf32>
    %804 = arith.addf %793, %803 : vector<16x16xf32>
    %c7_i32_362 = arith.constant 7 : i32
    %805 = arith.muli %c4_i32_311, %c7_i32_362 : i32
    %c49_i32_363 = arith.constant 49 : i32
    %806 = arith.addi %c49_i32_363, %805 : i32
    %c3_i32_364 = arith.constant 3 : i32
    %807 = arith.addi %806, %c3_i32_364 : i32
    %808 = arith.index_cast %807 : i32 to index
    %809 = memref.load %arg1[%808] : memref<98xf32, #tpu.memory_space<smem>>
    %c10_365 = arith.constant 10 : index
    %810 = arith.index_cast %c4_i32_311 : i32 to index
    %c0_366 = arith.constant 0 : index
    %811 = vector.load %arg4[%c10_365, %810, %c0_366] : memref<14x22x16xf32, #tpu.memory_space<vmem>>, vector<1x16x16xf32>
    %812 = vector.shape_cast %811 : vector<1x16x16xf32> to vector<16x16xf32>
    %813 = vector.broadcast %809 : f32 to vector<16x16xf32>
    %814 = arith.mulf %812, %813 : vector<16x16xf32>
    %815 = arith.addf %804, %814 : vector<16x16xf32>
    %c7_i32_367 = arith.constant 7 : i32
    %816 = arith.muli %c4_i32_311, %c7_i32_367 : i32
    %c49_i32_368 = arith.constant 49 : i32
    %817 = arith.addi %c49_i32_368, %816 : i32
    %c4_i32_369 = arith.constant 4 : i32
    %818 = arith.addi %817, %c4_i32_369 : i32
    %819 = arith.index_cast %818 : i32 to index
    %820 = memref.load %arg1[%819] : memref<98xf32, #tpu.memory_space<smem>>
    %c11_370 = arith.constant 11 : index
    %821 = arith.index_cast %c4_i32_311 : i32 to index
    %c0_371 = arith.constant 0 : index
    %822 = vector.load %arg4[%c11_370, %821, %c0_371] : memref<14x22x16xf32, #tpu.memory_space<vmem>>, vector<1x16x16xf32>
    %823 = vector.shape_cast %822 : vector<1x16x16xf32> to vector<16x16xf32>
    %824 = vector.broadcast %820 : f32 to vector<16x16xf32>
    %825 = arith.mulf %823, %824 : vector<16x16xf32>
    %826 = arith.addf %815, %825 : vector<16x16xf32>
    %c7_i32_372 = arith.constant 7 : i32
    %827 = arith.muli %c4_i32_311, %c7_i32_372 : i32
    %c49_i32_373 = arith.constant 49 : i32
    %828 = arith.addi %c49_i32_373, %827 : i32
    %c5_i32_374 = arith.constant 5 : i32
    %829 = arith.addi %828, %c5_i32_374 : i32
    %830 = arith.index_cast %829 : i32 to index
    %831 = memref.load %arg1[%830] : memref<98xf32, #tpu.memory_space<smem>>
    %c12_375 = arith.constant 12 : index
    %832 = arith.index_cast %c4_i32_311 : i32 to index
    %c0_376 = arith.constant 0 : index
    %833 = vector.load %arg4[%c12_375, %832, %c0_376] : memref<14x22x16xf32, #tpu.memory_space<vmem>>, vector<1x16x16xf32>
    %834 = vector.shape_cast %833 : vector<1x16x16xf32> to vector<16x16xf32>
    %835 = vector.broadcast %831 : f32 to vector<16x16xf32>
    %836 = arith.mulf %834, %835 : vector<16x16xf32>
    %837 = arith.addf %826, %836 : vector<16x16xf32>
    %c7_i32_377 = arith.constant 7 : i32
    %838 = arith.muli %c4_i32_311, %c7_i32_377 : i32
    %c49_i32_378 = arith.constant 49 : i32
    %839 = arith.addi %c49_i32_378, %838 : i32
    %c6_i32_379 = arith.constant 6 : i32
    %840 = arith.addi %839, %c6_i32_379 : i32
    %841 = arith.index_cast %840 : i32 to index
    %842 = memref.load %arg1[%841] : memref<98xf32, #tpu.memory_space<smem>>
    %c13_380 = arith.constant 13 : index
    %843 = arith.index_cast %c4_i32_311 : i32 to index
    %c0_381 = arith.constant 0 : index
    %844 = vector.load %arg4[%c13_380, %843, %c0_381] : memref<14x22x16xf32, #tpu.memory_space<vmem>>, vector<1x16x16xf32>
    %845 = vector.shape_cast %844 : vector<1x16x16xf32> to vector<16x16xf32>
    %846 = vector.broadcast %842 : f32 to vector<16x16xf32>
    %847 = arith.mulf %845, %846 : vector<16x16xf32>
    %848 = arith.addf %837, %847 : vector<16x16xf32>
    %c5_i32_382 = arith.constant 5 : i32
    %c7_i32_383 = arith.constant 7 : i32
    %849 = arith.muli %c5_i32_382, %c7_i32_383 : i32
    %c0_i32_384 = arith.constant 0 : i32
    %850 = arith.addi %c0_i32_384, %849 : i32
    %c0_i32_385 = arith.constant 0 : i32
    %851 = arith.addi %850, %c0_i32_385 : i32
    %852 = arith.index_cast %851 : i32 to index
    %853 = memref.load %arg1[%852] : memref<98xf32, #tpu.memory_space<smem>>
    %c0_386 = arith.constant 0 : index
    %854 = arith.index_cast %c5_i32_382 : i32 to index
    %c0_387 = arith.constant 0 : index
    %855 = vector.load %arg4[%c0_386, %854, %c0_387] : memref<14x22x16xf32, #tpu.memory_space<vmem>>, vector<1x16x16xf32>
    %856 = vector.shape_cast %855 : vector<1x16x16xf32> to vector<16x16xf32>
    %857 = vector.broadcast %853 : f32 to vector<16x16xf32>
    %858 = arith.mulf %856, %857 : vector<16x16xf32>
    %859 = arith.addf %848, %858 : vector<16x16xf32>
    %c7_i32_388 = arith.constant 7 : i32
    %860 = arith.muli %c5_i32_382, %c7_i32_388 : i32
    %c0_i32_389 = arith.constant 0 : i32
    %861 = arith.addi %c0_i32_389, %860 : i32
    %c1_i32_390 = arith.constant 1 : i32
    %862 = arith.addi %861, %c1_i32_390 : i32
    %863 = arith.index_cast %862 : i32 to index
    %864 = memref.load %arg1[%863] : memref<98xf32, #tpu.memory_space<smem>>
    %c1_391 = arith.constant 1 : index
    %865 = arith.index_cast %c5_i32_382 : i32 to index
    %c0_392 = arith.constant 0 : index
    %866 = vector.load %arg4[%c1_391, %865, %c0_392] : memref<14x22x16xf32, #tpu.memory_space<vmem>>, vector<1x16x16xf32>
    %867 = vector.shape_cast %866 : vector<1x16x16xf32> to vector<16x16xf32>
    %868 = vector.broadcast %864 : f32 to vector<16x16xf32>
    %869 = arith.mulf %867, %868 : vector<16x16xf32>
    %870 = arith.addf %859, %869 : vector<16x16xf32>
    %c7_i32_393 = arith.constant 7 : i32
    %871 = arith.muli %c5_i32_382, %c7_i32_393 : i32
    %c0_i32_394 = arith.constant 0 : i32
    %872 = arith.addi %c0_i32_394, %871 : i32
    %c2_i32_395 = arith.constant 2 : i32
    %873 = arith.addi %872, %c2_i32_395 : i32
    %874 = arith.index_cast %873 : i32 to index
    %875 = memref.load %arg1[%874] : memref<98xf32, #tpu.memory_space<smem>>
    %c2_396 = arith.constant 2 : index
    %876 = arith.index_cast %c5_i32_382 : i32 to index
    %c0_397 = arith.constant 0 : index
    %877 = vector.load %arg4[%c2_396, %876, %c0_397] : memref<14x22x16xf32, #tpu.memory_space<vmem>>, vector<1x16x16xf32>
    %878 = vector.shape_cast %877 : vector<1x16x16xf32> to vector<16x16xf32>
    %879 = vector.broadcast %875 : f32 to vector<16x16xf32>
    %880 = arith.mulf %878, %879 : vector<16x16xf32>
    %881 = arith.addf %870, %880 : vector<16x16xf32>
    %c7_i32_398 = arith.constant 7 : i32
    %882 = arith.muli %c5_i32_382, %c7_i32_398 : i32
    %c0_i32_399 = arith.constant 0 : i32
    %883 = arith.addi %c0_i32_399, %882 : i32
    %c3_i32_400 = arith.constant 3 : i32
    %884 = arith.addi %883, %c3_i32_400 : i32
    %885 = arith.index_cast %884 : i32 to index
    %886 = memref.load %arg1[%885] : memref<98xf32, #tpu.memory_space<smem>>
    %c3_401 = arith.constant 3 : index
    %887 = arith.index_cast %c5_i32_382 : i32 to index
    %c0_402 = arith.constant 0 : index
    %888 = vector.load %arg4[%c3_401, %887, %c0_402] : memref<14x22x16xf32, #tpu.memory_space<vmem>>, vector<1x16x16xf32>
    %889 = vector.shape_cast %888 : vector<1x16x16xf32> to vector<16x16xf32>
    %890 = vector.broadcast %886 : f32 to vector<16x16xf32>
    %891 = arith.mulf %889, %890 : vector<16x16xf32>
    %892 = arith.addf %881, %891 : vector<16x16xf32>
    %c7_i32_403 = arith.constant 7 : i32
    %893 = arith.muli %c5_i32_382, %c7_i32_403 : i32
    %c0_i32_404 = arith.constant 0 : i32
    %894 = arith.addi %c0_i32_404, %893 : i32
    %c4_i32_405 = arith.constant 4 : i32
    %895 = arith.addi %894, %c4_i32_405 : i32
    %896 = arith.index_cast %895 : i32 to index
    %897 = memref.load %arg1[%896] : memref<98xf32, #tpu.memory_space<smem>>
    %c4_406 = arith.constant 4 : index
    %898 = arith.index_cast %c5_i32_382 : i32 to index
    %c0_407 = arith.constant 0 : index
    %899 = vector.load %arg4[%c4_406, %898, %c0_407] : memref<14x22x16xf32, #tpu.memory_space<vmem>>, vector<1x16x16xf32>
    %900 = vector.shape_cast %899 : vector<1x16x16xf32> to vector<16x16xf32>
    %901 = vector.broadcast %897 : f32 to vector<16x16xf32>
    %902 = arith.mulf %900, %901 : vector<16x16xf32>
    %903 = arith.addf %892, %902 : vector<16x16xf32>
    %c7_i32_408 = arith.constant 7 : i32
    %904 = arith.muli %c5_i32_382, %c7_i32_408 : i32
    %c0_i32_409 = arith.constant 0 : i32
    %905 = arith.addi %c0_i32_409, %904 : i32
    %c5_i32_410 = arith.constant 5 : i32
    %906 = arith.addi %905, %c5_i32_410 : i32
    %907 = arith.index_cast %906 : i32 to index
    %908 = memref.load %arg1[%907] : memref<98xf32, #tpu.memory_space<smem>>
    %c5_411 = arith.constant 5 : index
    %909 = arith.index_cast %c5_i32_382 : i32 to index
    %c0_412 = arith.constant 0 : index
    %910 = vector.load %arg4[%c5_411, %909, %c0_412] : memref<14x22x16xf32, #tpu.memory_space<vmem>>, vector<1x16x16xf32>
    %911 = vector.shape_cast %910 : vector<1x16x16xf32> to vector<16x16xf32>
    %912 = vector.broadcast %908 : f32 to vector<16x16xf32>
    %913 = arith.mulf %911, %912 : vector<16x16xf32>
    %914 = arith.addf %903, %913 : vector<16x16xf32>
    %c7_i32_413 = arith.constant 7 : i32
    %915 = arith.muli %c5_i32_382, %c7_i32_413 : i32
    %c0_i32_414 = arith.constant 0 : i32
    %916 = arith.addi %c0_i32_414, %915 : i32
    %c6_i32_415 = arith.constant 6 : i32
    %917 = arith.addi %916, %c6_i32_415 : i32
    %918 = arith.index_cast %917 : i32 to index
    %919 = memref.load %arg1[%918] : memref<98xf32, #tpu.memory_space<smem>>
    %c6_416 = arith.constant 6 : index
    %920 = arith.index_cast %c5_i32_382 : i32 to index
    %c0_417 = arith.constant 0 : index
    %921 = vector.load %arg4[%c6_416, %920, %c0_417] : memref<14x22x16xf32, #tpu.memory_space<vmem>>, vector<1x16x16xf32>
    %922 = vector.shape_cast %921 : vector<1x16x16xf32> to vector<16x16xf32>
    %923 = vector.broadcast %919 : f32 to vector<16x16xf32>
    %924 = arith.mulf %922, %923 : vector<16x16xf32>
    %925 = arith.addf %914, %924 : vector<16x16xf32>
    %c7_i32_418 = arith.constant 7 : i32
    %926 = arith.muli %c5_i32_382, %c7_i32_418 : i32
    %c49_i32_419 = arith.constant 49 : i32
    %927 = arith.addi %c49_i32_419, %926 : i32
    %c0_i32_420 = arith.constant 0 : i32
    %928 = arith.addi %927, %c0_i32_420 : i32
    %929 = arith.index_cast %928 : i32 to index
    %930 = memref.load %arg1[%929] : memref<98xf32, #tpu.memory_space<smem>>
    %c7_421 = arith.constant 7 : index
    %931 = arith.index_cast %c5_i32_382 : i32 to index
    %c0_422 = arith.constant 0 : index
    %932 = vector.load %arg4[%c7_421, %931, %c0_422] : memref<14x22x16xf32, #tpu.memory_space<vmem>>, vector<1x16x16xf32>
    %933 = vector.shape_cast %932 : vector<1x16x16xf32> to vector<16x16xf32>
    %934 = vector.broadcast %930 : f32 to vector<16x16xf32>
    %935 = arith.mulf %933, %934 : vector<16x16xf32>
    %936 = arith.addf %925, %935 : vector<16x16xf32>
    %c7_i32_423 = arith.constant 7 : i32
    %937 = arith.muli %c5_i32_382, %c7_i32_423 : i32
    %c49_i32_424 = arith.constant 49 : i32
    %938 = arith.addi %c49_i32_424, %937 : i32
    %c1_i32_425 = arith.constant 1 : i32
    %939 = arith.addi %938, %c1_i32_425 : i32
    %940 = arith.index_cast %939 : i32 to index
    %941 = memref.load %arg1[%940] : memref<98xf32, #tpu.memory_space<smem>>
    %c8_426 = arith.constant 8 : index
    %942 = arith.index_cast %c5_i32_382 : i32 to index
    %c0_427 = arith.constant 0 : index
    %943 = vector.load %arg4[%c8_426, %942, %c0_427] : memref<14x22x16xf32, #tpu.memory_space<vmem>>, vector<1x16x16xf32>
    %944 = vector.shape_cast %943 : vector<1x16x16xf32> to vector<16x16xf32>
    %945 = vector.broadcast %941 : f32 to vector<16x16xf32>
    %946 = arith.mulf %944, %945 : vector<16x16xf32>
    %947 = arith.addf %936, %946 : vector<16x16xf32>
    %c7_i32_428 = arith.constant 7 : i32
    %948 = arith.muli %c5_i32_382, %c7_i32_428 : i32
    %c49_i32_429 = arith.constant 49 : i32
    %949 = arith.addi %c49_i32_429, %948 : i32
    %c2_i32_430 = arith.constant 2 : i32
    %950 = arith.addi %949, %c2_i32_430 : i32
    %951 = arith.index_cast %950 : i32 to index
    %952 = memref.load %arg1[%951] : memref<98xf32, #tpu.memory_space<smem>>
    %c9_431 = arith.constant 9 : index
    %953 = arith.index_cast %c5_i32_382 : i32 to index
    %c0_432 = arith.constant 0 : index
    %954 = vector.load %arg4[%c9_431, %953, %c0_432] : memref<14x22x16xf32, #tpu.memory_space<vmem>>, vector<1x16x16xf32>
    %955 = vector.shape_cast %954 : vector<1x16x16xf32> to vector<16x16xf32>
    %956 = vector.broadcast %952 : f32 to vector<16x16xf32>
    %957 = arith.mulf %955, %956 : vector<16x16xf32>
    %958 = arith.addf %947, %957 : vector<16x16xf32>
    %c7_i32_433 = arith.constant 7 : i32
    %959 = arith.muli %c5_i32_382, %c7_i32_433 : i32
    %c49_i32_434 = arith.constant 49 : i32
    %960 = arith.addi %c49_i32_434, %959 : i32
    %c3_i32_435 = arith.constant 3 : i32
    %961 = arith.addi %960, %c3_i32_435 : i32
    %962 = arith.index_cast %961 : i32 to index
    %963 = memref.load %arg1[%962] : memref<98xf32, #tpu.memory_space<smem>>
    %c10_436 = arith.constant 10 : index
    %964 = arith.index_cast %c5_i32_382 : i32 to index
    %c0_437 = arith.constant 0 : index
    %965 = vector.load %arg4[%c10_436, %964, %c0_437] : memref<14x22x16xf32, #tpu.memory_space<vmem>>, vector<1x16x16xf32>
    %966 = vector.shape_cast %965 : vector<1x16x16xf32> to vector<16x16xf32>
    %967 = vector.broadcast %963 : f32 to vector<16x16xf32>
    %968 = arith.mulf %966, %967 : vector<16x16xf32>
    %969 = arith.addf %958, %968 : vector<16x16xf32>
    %c7_i32_438 = arith.constant 7 : i32
    %970 = arith.muli %c5_i32_382, %c7_i32_438 : i32
    %c49_i32_439 = arith.constant 49 : i32
    %971 = arith.addi %c49_i32_439, %970 : i32
    %c4_i32_440 = arith.constant 4 : i32
    %972 = arith.addi %971, %c4_i32_440 : i32
    %973 = arith.index_cast %972 : i32 to index
    %974 = memref.load %arg1[%973] : memref<98xf32, #tpu.memory_space<smem>>
    %c11_441 = arith.constant 11 : index
    %975 = arith.index_cast %c5_i32_382 : i32 to index
    %c0_442 = arith.constant 0 : index
    %976 = vector.load %arg4[%c11_441, %975, %c0_442] : memref<14x22x16xf32, #tpu.memory_space<vmem>>, vector<1x16x16xf32>
    %977 = vector.shape_cast %976 : vector<1x16x16xf32> to vector<16x16xf32>
    %978 = vector.broadcast %974 : f32 to vector<16x16xf32>
    %979 = arith.mulf %977, %978 : vector<16x16xf32>
    %980 = arith.addf %969, %979 : vector<16x16xf32>
    %c7_i32_443 = arith.constant 7 : i32
    %981 = arith.muli %c5_i32_382, %c7_i32_443 : i32
    %c49_i32_444 = arith.constant 49 : i32
    %982 = arith.addi %c49_i32_444, %981 : i32
    %c5_i32_445 = arith.constant 5 : i32
    %983 = arith.addi %982, %c5_i32_445 : i32
    %984 = arith.index_cast %983 : i32 to index
    %985 = memref.load %arg1[%984] : memref<98xf32, #tpu.memory_space<smem>>
    %c12_446 = arith.constant 12 : index
    %986 = arith.index_cast %c5_i32_382 : i32 to index
    %c0_447 = arith.constant 0 : index
    %987 = vector.load %arg4[%c12_446, %986, %c0_447] : memref<14x22x16xf32, #tpu.memory_space<vmem>>, vector<1x16x16xf32>
    %988 = vector.shape_cast %987 : vector<1x16x16xf32> to vector<16x16xf32>
    %989 = vector.broadcast %985 : f32 to vector<16x16xf32>
    %990 = arith.mulf %988, %989 : vector<16x16xf32>
    %991 = arith.addf %980, %990 : vector<16x16xf32>
    %c7_i32_448 = arith.constant 7 : i32
    %992 = arith.muli %c5_i32_382, %c7_i32_448 : i32
    %c49_i32_449 = arith.constant 49 : i32
    %993 = arith.addi %c49_i32_449, %992 : i32
    %c6_i32_450 = arith.constant 6 : i32
    %994 = arith.addi %993, %c6_i32_450 : i32
    %995 = arith.index_cast %994 : i32 to index
    %996 = memref.load %arg1[%995] : memref<98xf32, #tpu.memory_space<smem>>
    %c13_451 = arith.constant 13 : index
    %997 = arith.index_cast %c5_i32_382 : i32 to index
    %c0_452 = arith.constant 0 : index
    %998 = vector.load %arg4[%c13_451, %997, %c0_452] : memref<14x22x16xf32, #tpu.memory_space<vmem>>, vector<1x16x16xf32>
    %999 = vector.shape_cast %998 : vector<1x16x16xf32> to vector<16x16xf32>
    %1000 = vector.broadcast %996 : f32 to vector<16x16xf32>
    %1001 = arith.mulf %999, %1000 : vector<16x16xf32>
    %1002 = arith.addf %991, %1001 : vector<16x16xf32>
    %c6_i32_453 = arith.constant 6 : i32
    %c7_i32_454 = arith.constant 7 : i32
    %1003 = arith.muli %c6_i32_453, %c7_i32_454 : i32
    %c0_i32_455 = arith.constant 0 : i32
    %1004 = arith.addi %c0_i32_455, %1003 : i32
    %c0_i32_456 = arith.constant 0 : i32
    %1005 = arith.addi %1004, %c0_i32_456 : i32
    %1006 = arith.index_cast %1005 : i32 to index
    %1007 = memref.load %arg1[%1006] : memref<98xf32, #tpu.memory_space<smem>>
    %c0_457 = arith.constant 0 : index
    %1008 = arith.index_cast %c6_i32_453 : i32 to index
    %c0_458 = arith.constant 0 : index
    %1009 = vector.load %arg4[%c0_457, %1008, %c0_458] : memref<14x22x16xf32, #tpu.memory_space<vmem>>, vector<1x16x16xf32>
    %1010 = vector.shape_cast %1009 : vector<1x16x16xf32> to vector<16x16xf32>
    %1011 = vector.broadcast %1007 : f32 to vector<16x16xf32>
    %1012 = arith.mulf %1010, %1011 : vector<16x16xf32>
    %1013 = arith.addf %1002, %1012 : vector<16x16xf32>
    %c7_i32_459 = arith.constant 7 : i32
    %1014 = arith.muli %c6_i32_453, %c7_i32_459 : i32
    %c0_i32_460 = arith.constant 0 : i32
    %1015 = arith.addi %c0_i32_460, %1014 : i32
    %c1_i32_461 = arith.constant 1 : i32
    %1016 = arith.addi %1015, %c1_i32_461 : i32
    %1017 = arith.index_cast %1016 : i32 to index
    %1018 = memref.load %arg1[%1017] : memref<98xf32, #tpu.memory_space<smem>>
    %c1_462 = arith.constant 1 : index
    %1019 = arith.index_cast %c6_i32_453 : i32 to index
    %c0_463 = arith.constant 0 : index
    %1020 = vector.load %arg4[%c1_462, %1019, %c0_463] : memref<14x22x16xf32, #tpu.memory_space<vmem>>, vector<1x16x16xf32>
    %1021 = vector.shape_cast %1020 : vector<1x16x16xf32> to vector<16x16xf32>
    %1022 = vector.broadcast %1018 : f32 to vector<16x16xf32>
    %1023 = arith.mulf %1021, %1022 : vector<16x16xf32>
    %1024 = arith.addf %1013, %1023 : vector<16x16xf32>
    %c7_i32_464 = arith.constant 7 : i32
    %1025 = arith.muli %c6_i32_453, %c7_i32_464 : i32
    %c0_i32_465 = arith.constant 0 : i32
    %1026 = arith.addi %c0_i32_465, %1025 : i32
    %c2_i32_466 = arith.constant 2 : i32
    %1027 = arith.addi %1026, %c2_i32_466 : i32
    %1028 = arith.index_cast %1027 : i32 to index
    %1029 = memref.load %arg1[%1028] : memref<98xf32, #tpu.memory_space<smem>>
    %c2_467 = arith.constant 2 : index
    %1030 = arith.index_cast %c6_i32_453 : i32 to index
    %c0_468 = arith.constant 0 : index
    %1031 = vector.load %arg4[%c2_467, %1030, %c0_468] : memref<14x22x16xf32, #tpu.memory_space<vmem>>, vector<1x16x16xf32>
    %1032 = vector.shape_cast %1031 : vector<1x16x16xf32> to vector<16x16xf32>
    %1033 = vector.broadcast %1029 : f32 to vector<16x16xf32>
    %1034 = arith.mulf %1032, %1033 : vector<16x16xf32>
    %1035 = arith.addf %1024, %1034 : vector<16x16xf32>
    %c7_i32_469 = arith.constant 7 : i32
    %1036 = arith.muli %c6_i32_453, %c7_i32_469 : i32
    %c0_i32_470 = arith.constant 0 : i32
    %1037 = arith.addi %c0_i32_470, %1036 : i32
    %c3_i32_471 = arith.constant 3 : i32
    %1038 = arith.addi %1037, %c3_i32_471 : i32
    %1039 = arith.index_cast %1038 : i32 to index
    %1040 = memref.load %arg1[%1039] : memref<98xf32, #tpu.memory_space<smem>>
    %c3_472 = arith.constant 3 : index
    %1041 = arith.index_cast %c6_i32_453 : i32 to index
    %c0_473 = arith.constant 0 : index
    %1042 = vector.load %arg4[%c3_472, %1041, %c0_473] : memref<14x22x16xf32, #tpu.memory_space<vmem>>, vector<1x16x16xf32>
    %1043 = vector.shape_cast %1042 : vector<1x16x16xf32> to vector<16x16xf32>
    %1044 = vector.broadcast %1040 : f32 to vector<16x16xf32>
    %1045 = arith.mulf %1043, %1044 : vector<16x16xf32>
    %1046 = arith.addf %1035, %1045 : vector<16x16xf32>
    %c7_i32_474 = arith.constant 7 : i32
    %1047 = arith.muli %c6_i32_453, %c7_i32_474 : i32
    %c0_i32_475 = arith.constant 0 : i32
    %1048 = arith.addi %c0_i32_475, %1047 : i32
    %c4_i32_476 = arith.constant 4 : i32
    %1049 = arith.addi %1048, %c4_i32_476 : i32
    %1050 = arith.index_cast %1049 : i32 to index
    %1051 = memref.load %arg1[%1050] : memref<98xf32, #tpu.memory_space<smem>>
    %c4_477 = arith.constant 4 : index
    %1052 = arith.index_cast %c6_i32_453 : i32 to index
    %c0_478 = arith.constant 0 : index
    %1053 = vector.load %arg4[%c4_477, %1052, %c0_478] : memref<14x22x16xf32, #tpu.memory_space<vmem>>, vector<1x16x16xf32>
    %1054 = vector.shape_cast %1053 : vector<1x16x16xf32> to vector<16x16xf32>
    %1055 = vector.broadcast %1051 : f32 to vector<16x16xf32>
    %1056 = arith.mulf %1054, %1055 : vector<16x16xf32>
    %1057 = arith.addf %1046, %1056 : vector<16x16xf32>
    %c7_i32_479 = arith.constant 7 : i32
    %1058 = arith.muli %c6_i32_453, %c7_i32_479 : i32
    %c0_i32_480 = arith.constant 0 : i32
    %1059 = arith.addi %c0_i32_480, %1058 : i32
    %c5_i32_481 = arith.constant 5 : i32
    %1060 = arith.addi %1059, %c5_i32_481 : i32
    %1061 = arith.index_cast %1060 : i32 to index
    %1062 = memref.load %arg1[%1061] : memref<98xf32, #tpu.memory_space<smem>>
    %c5_482 = arith.constant 5 : index
    %1063 = arith.index_cast %c6_i32_453 : i32 to index
    %c0_483 = arith.constant 0 : index
    %1064 = vector.load %arg4[%c5_482, %1063, %c0_483] : memref<14x22x16xf32, #tpu.memory_space<vmem>>, vector<1x16x16xf32>
    %1065 = vector.shape_cast %1064 : vector<1x16x16xf32> to vector<16x16xf32>
    %1066 = vector.broadcast %1062 : f32 to vector<16x16xf32>
    %1067 = arith.mulf %1065, %1066 : vector<16x16xf32>
    %1068 = arith.addf %1057, %1067 : vector<16x16xf32>
    %c7_i32_484 = arith.constant 7 : i32
    %1069 = arith.muli %c6_i32_453, %c7_i32_484 : i32
    %c0_i32_485 = arith.constant 0 : i32
    %1070 = arith.addi %c0_i32_485, %1069 : i32
    %c6_i32_486 = arith.constant 6 : i32
    %1071 = arith.addi %1070, %c6_i32_486 : i32
    %1072 = arith.index_cast %1071 : i32 to index
    %1073 = memref.load %arg1[%1072] : memref<98xf32, #tpu.memory_space<smem>>
    %c6_487 = arith.constant 6 : index
    %1074 = arith.index_cast %c6_i32_453 : i32 to index
    %c0_488 = arith.constant 0 : index
    %1075 = vector.load %arg4[%c6_487, %1074, %c0_488] : memref<14x22x16xf32, #tpu.memory_space<vmem>>, vector<1x16x16xf32>
    %1076 = vector.shape_cast %1075 : vector<1x16x16xf32> to vector<16x16xf32>
    %1077 = vector.broadcast %1073 : f32 to vector<16x16xf32>
    %1078 = arith.mulf %1076, %1077 : vector<16x16xf32>
    %1079 = arith.addf %1068, %1078 : vector<16x16xf32>
    %c7_i32_489 = arith.constant 7 : i32
    %1080 = arith.muli %c6_i32_453, %c7_i32_489 : i32
    %c49_i32_490 = arith.constant 49 : i32
    %1081 = arith.addi %c49_i32_490, %1080 : i32
    %c0_i32_491 = arith.constant 0 : i32
    %1082 = arith.addi %1081, %c0_i32_491 : i32
    %1083 = arith.index_cast %1082 : i32 to index
    %1084 = memref.load %arg1[%1083] : memref<98xf32, #tpu.memory_space<smem>>
    %c7_492 = arith.constant 7 : index
    %1085 = arith.index_cast %c6_i32_453 : i32 to index
    %c0_493 = arith.constant 0 : index
    %1086 = vector.load %arg4[%c7_492, %1085, %c0_493] : memref<14x22x16xf32, #tpu.memory_space<vmem>>, vector<1x16x16xf32>
    %1087 = vector.shape_cast %1086 : vector<1x16x16xf32> to vector<16x16xf32>
    %1088 = vector.broadcast %1084 : f32 to vector<16x16xf32>
    %1089 = arith.mulf %1087, %1088 : vector<16x16xf32>
    %1090 = arith.addf %1079, %1089 : vector<16x16xf32>
    %c7_i32_494 = arith.constant 7 : i32
    %1091 = arith.muli %c6_i32_453, %c7_i32_494 : i32
    %c49_i32_495 = arith.constant 49 : i32
    %1092 = arith.addi %c49_i32_495, %1091 : i32
    %c1_i32_496 = arith.constant 1 : i32
    %1093 = arith.addi %1092, %c1_i32_496 : i32
    %1094 = arith.index_cast %1093 : i32 to index
    %1095 = memref.load %arg1[%1094] : memref<98xf32, #tpu.memory_space<smem>>
    %c8_497 = arith.constant 8 : index
    %1096 = arith.index_cast %c6_i32_453 : i32 to index
    %c0_498 = arith.constant 0 : index
    %1097 = vector.load %arg4[%c8_497, %1096, %c0_498] : memref<14x22x16xf32, #tpu.memory_space<vmem>>, vector<1x16x16xf32>
    %1098 = vector.shape_cast %1097 : vector<1x16x16xf32> to vector<16x16xf32>
    %1099 = vector.broadcast %1095 : f32 to vector<16x16xf32>
    %1100 = arith.mulf %1098, %1099 : vector<16x16xf32>
    %1101 = arith.addf %1090, %1100 : vector<16x16xf32>
    %c7_i32_499 = arith.constant 7 : i32
    %1102 = arith.muli %c6_i32_453, %c7_i32_499 : i32
    %c49_i32_500 = arith.constant 49 : i32
    %1103 = arith.addi %c49_i32_500, %1102 : i32
    %c2_i32_501 = arith.constant 2 : i32
    %1104 = arith.addi %1103, %c2_i32_501 : i32
    %1105 = arith.index_cast %1104 : i32 to index
    %1106 = memref.load %arg1[%1105] : memref<98xf32, #tpu.memory_space<smem>>
    %c9_502 = arith.constant 9 : index
    %1107 = arith.index_cast %c6_i32_453 : i32 to index
    %c0_503 = arith.constant 0 : index
    %1108 = vector.load %arg4[%c9_502, %1107, %c0_503] : memref<14x22x16xf32, #tpu.memory_space<vmem>>, vector<1x16x16xf32>
    %1109 = vector.shape_cast %1108 : vector<1x16x16xf32> to vector<16x16xf32>
    %1110 = vector.broadcast %1106 : f32 to vector<16x16xf32>
    %1111 = arith.mulf %1109, %1110 : vector<16x16xf32>
    %1112 = arith.addf %1101, %1111 : vector<16x16xf32>
    %c7_i32_504 = arith.constant 7 : i32
    %1113 = arith.muli %c6_i32_453, %c7_i32_504 : i32
    %c49_i32_505 = arith.constant 49 : i32
    %1114 = arith.addi %c49_i32_505, %1113 : i32
    %c3_i32_506 = arith.constant 3 : i32
    %1115 = arith.addi %1114, %c3_i32_506 : i32
    %1116 = arith.index_cast %1115 : i32 to index
    %1117 = memref.load %arg1[%1116] : memref<98xf32, #tpu.memory_space<smem>>
    %c10_507 = arith.constant 10 : index
    %1118 = arith.index_cast %c6_i32_453 : i32 to index
    %c0_508 = arith.constant 0 : index
    %1119 = vector.load %arg4[%c10_507, %1118, %c0_508] : memref<14x22x16xf32, #tpu.memory_space<vmem>>, vector<1x16x16xf32>
    %1120 = vector.shape_cast %1119 : vector<1x16x16xf32> to vector<16x16xf32>
    %1121 = vector.broadcast %1117 : f32 to vector<16x16xf32>
    %1122 = arith.mulf %1120, %1121 : vector<16x16xf32>
    %1123 = arith.addf %1112, %1122 : vector<16x16xf32>
    %c7_i32_509 = arith.constant 7 : i32
    %1124 = arith.muli %c6_i32_453, %c7_i32_509 : i32
    %c49_i32_510 = arith.constant 49 : i32
    %1125 = arith.addi %c49_i32_510, %1124 : i32
    %c4_i32_511 = arith.constant 4 : i32
    %1126 = arith.addi %1125, %c4_i32_511 : i32
    %1127 = arith.index_cast %1126 : i32 to index
    %1128 = memref.load %arg1[%1127] : memref<98xf32, #tpu.memory_space<smem>>
    %c11_512 = arith.constant 11 : index
    %1129 = arith.index_cast %c6_i32_453 : i32 to index
    %c0_513 = arith.constant 0 : index
    %1130 = vector.load %arg4[%c11_512, %1129, %c0_513] : memref<14x22x16xf32, #tpu.memory_space<vmem>>, vector<1x16x16xf32>
    %1131 = vector.shape_cast %1130 : vector<1x16x16xf32> to vector<16x16xf32>
    %1132 = vector.broadcast %1128 : f32 to vector<16x16xf32>
    %1133 = arith.mulf %1131, %1132 : vector<16x16xf32>
    %1134 = arith.addf %1123, %1133 : vector<16x16xf32>
    %c7_i32_514 = arith.constant 7 : i32
    %1135 = arith.muli %c6_i32_453, %c7_i32_514 : i32
    %c49_i32_515 = arith.constant 49 : i32
    %1136 = arith.addi %c49_i32_515, %1135 : i32
    %c5_i32_516 = arith.constant 5 : i32
    %1137 = arith.addi %1136, %c5_i32_516 : i32
    %1138 = arith.index_cast %1137 : i32 to index
    %1139 = memref.load %arg1[%1138] : memref<98xf32, #tpu.memory_space<smem>>
    %c12_517 = arith.constant 12 : index
    %1140 = arith.index_cast %c6_i32_453 : i32 to index
    %c0_518 = arith.constant 0 : index
    %1141 = vector.load %arg4[%c12_517, %1140, %c0_518] : memref<14x22x16xf32, #tpu.memory_space<vmem>>, vector<1x16x16xf32>
    %1142 = vector.shape_cast %1141 : vector<1x16x16xf32> to vector<16x16xf32>
    %1143 = vector.broadcast %1139 : f32 to vector<16x16xf32>
    %1144 = arith.mulf %1142, %1143 : vector<16x16xf32>
    %1145 = arith.addf %1134, %1144 : vector<16x16xf32>
    %c7_i32_519 = arith.constant 7 : i32
    %1146 = arith.muli %c6_i32_453, %c7_i32_519 : i32
    %c49_i32_520 = arith.constant 49 : i32
    %1147 = arith.addi %c49_i32_520, %1146 : i32
    %c6_i32_521 = arith.constant 6 : i32
    %1148 = arith.addi %1147, %c6_i32_521 : i32
    %1149 = arith.index_cast %1148 : i32 to index
    %1150 = memref.load %arg1[%1149] : memref<98xf32, #tpu.memory_space<smem>>
    %c13_522 = arith.constant 13 : index
    %1151 = arith.index_cast %c6_i32_453 : i32 to index
    %c0_523 = arith.constant 0 : index
    %1152 = vector.load %arg4[%c13_522, %1151, %c0_523] : memref<14x22x16xf32, #tpu.memory_space<vmem>>, vector<1x16x16xf32>
    %1153 = vector.shape_cast %1152 : vector<1x16x16xf32> to vector<16x16xf32>
    %1154 = vector.broadcast %1150 : f32 to vector<16x16xf32>
    %1155 = arith.mulf %1153, %1154 : vector<16x16xf32>
    %1156 = arith.addf %1145, %1155 : vector<16x16xf32>
    %c7_i32_524 = arith.constant 7 : i32
    %1157 = arith.negf %1156 : vector<16x16xf32>
    %1158 = math.exp %1157 : vector<16x16xf32>
    %cst_525 = arith.constant 1.000000e+00 : f32
    %1159 = vector.broadcast %cst_525 : f32 to vector<16x16xf32>
    %1160 = arith.addf %1159, %1158 : vector<16x16xf32>
    %1161 = arith.divf %1159, %1160 : vector<16x16xf32>
    %c0_526 = arith.constant 0 : index
    %c0_527 = arith.constant 0 : index
    %c0_528 = arith.constant 0 : index
    %c0_529 = arith.constant 0 : index
    %1162 = vector.load %arg3[%c0_526, %c0_527, %c0_528, %c0_529] : memref<1x1x16x16xf32, #tpu.memory_space<vmem>>, vector<1x1x16x16xf32>
    %1163 = vector.shape_cast %1162 : vector<1x1x16x16xf32> to vector<16x16xf32>
    %1164 = vector.shape_cast %1161 : vector<16x16xf32> to vector<1x1x16x16xf32>
    tpu.vector_store %arg3[%c0_526, %c0_527, %c0_528, %c0_529], %1164 {strides = array<i32>} : memref<1x1x16x16xf32, #tpu.memory_space<vmem>>, vector<1x1x16x16xf32>,
    return
  }
  func.func @transform_0(%arg0: i32) -> i32 {
    %c0_i32 = arith.constant 0 : i32
    %c0_i32_0 = arith.constant 0 : i32
    return %c0_i32 : i32
  }
  func.func @transform_1(%arg0: i32) -> (i32, i32, i32, i32) {
    %c0_i32 = arith.constant 0 : i32
    %c0_i32_0 = arith.constant 0 : i32
    %c0_i32_1 = arith.constant 0 : i32
    %c0_i32_2 = arith.constant 0 : i32
    return %arg0, %c0_i32, %c0_i32_0, %c0_i32_1 : i32, i32, i32, i32
  }
  func.func @transform_2(%arg0: i32) -> (i32, i32, i32, i32) {
    %c0_i32 = arith.constant 0 : i32
    %c0_i32_0 = arith.constant 0 : i32
    %c0_i32_1 = arith.constant 0 : i32
    %c0_i32_2 = arith.constant 0 : i32
    return %arg0, %c0_i32, %c0_i32_0, %c0_i32_1 : i32, i32, i32, i32
  }
}

</mosaic_0001>

<llo_original>
// kernel: tpu_custom_call.1
$region0: #{tpu_custom_call.1}
  #allocation0 [shape = 'u32[]', space=smem, size = 0x4, offset = 0x4, fixed_abs, tag = 'smem constant byte address 0x4 - core index']
  #allocation1 [shape = 'u32[72,128]{1,0:T(1,128)}', space=vmem, size = 0x9000, scoped, tag = 'internal scratch']
  #allocation2 [shape = 'f32[14,22,16]{2,1,0:T(8,128)}', space=vmem, size = 0x2a000, scoped, tag = 'scratch operand']
  %s0 = inlined_call_operand.hbm [shape: f32[98], index: 0, kind: input, shape index: {}]
  %s1 = inlined_call_operand.hbm [shape: f32[2,4,16,16], index: 1, kind: input, shape index: {}]
  %s2 = inlined_call_operand.hbm [shape: f32[2,1,16,16], index: 2, kind: output, shape index: {}]
  %s3 = sld [smem:[#allocation0]]
  $region49: #{tpu_custom_call.1} parent=0
    _
  %s5 = ssub.s32 1, %s3
  %s6 = scalar_select 0, %s5, %s3
  $region1: #{tpu_custom_call.1} parent=0
    #allocation3 [shape = 'u8[512]{0}', space=smem, size = 0x200, scoped, tag = 'input window, operand 0, single buffered']
    #allocation4 [shape = 's32[2]{0}', space=sflag, size = 0x8, scoped, tag = 'scoped memory for tpu_custom_call.1']
    #allocation5 [shape = 's32[2]{0}', space=sflag, size = 0x8, scoped, tag = 'scoped memory for tpu_custom_call.1']
    #allocation6 [shape = 's32[2]{0}', space=sflag, size = 0x8, scoped, tag = 'scoped memory for tpu_custom_call.1']
    #allocation7 [shape = 'u8[65536]{0}', space=vmem, size = 0x10000, scoped, tag = 'input window, operand 1']
    #allocation8 [shape = 'u8[16384]{0}', space=vmem, size = 0x4000, scoped, tag = 'output window, operand 0']
    %7 = vsyncpa [#allocation6], 0
    %8 = vsyncpa [#allocation4], 0
    %s9 = scalar_lea.sflag [#allocation4], 1
    %10 = vsyncpa %s9, 0
    %11 = vsyncpa [#allocation5], 0
    %s12 = scalar_lea.sflag [#allocation5], 1
    %13 = vsyncpa %s12, 0
    loop: start=0, step=1, limit=4
    $region2: #{tpu_custom_call.1} parent=1 // loop_pre_header
      _
    $region3: #{tpu_custom_call.1} parent=1 // loop_header
      %s15 = sphi 0, %s19
      %p16 = scmp.ge.s32.totalorder %s15, 4
      %s23 = sphi 0, %s23
      %s25 = sphi 0, %s23
      %s26 = sphi 0, %s25
      %s40 = sphi 0, %s26
      %s46 = sphi 0, %s48
      %s49 = sphi 0, %s46
      %s50 = sphi 0, %s49
      %s66 = sphi 0, %s50
      %s72 = sphi 0, %s74
      %s75 = sphi 0, %s72
      %s76 = sphi 0, %s75
      %s92 = sphi 0, %s76
    $region4: #{tpu_custom_call.1} parent=1 // loop_header_branch
      %18 = sbr.rel (%p16) target = $region8
    $region5: #{tpu_custom_call.1} parent=1 // loop_body
      %s20 = ssub.s32 %s15, 1
      %s21 = ssub.s32 %s15, 2
      %s22 = sadd.s32 %s15, 1
      %s24 = sadd.s32 %s23, 1
      %p27 = scmp.eq.s32.totalorder %s15, 1
      %p28 = scmp.ne.s32.totalorder %s23, %s25
      %p29 = scmp.eq.s32.totalorder %s15, 0
      %p30 = por %p28, %p29
      %p31 = scmp.ne.s32.totalorder %s23, %s25
      %p32 = scmp.eq.s32.totalorder %s20, 1
      %p33 = por %p31, %p32
      %p34 = scmp.ne.s32.totalorder %s25, %s26
      %p35 = scmp.eq.s32.totalorder %s20, 0
      %p36 = por %p34, %p35
      %p37 = scmp.ne.s32.totalorder %s25, %s26
      %p38 = scmp.eq.s32.totalorder %s21, 1
      %p39 = por %p37, %p38
      %p41 = scmp.ne.s32.totalorder %s26, %s40
      %p42 = scmp.eq.s32.totalorder %s21, 0
      %p43 = por %p41, %p42
      %s44 = ssub.s32 %s15, %s22
      %p45 = scmp.eq.s32.totalorder %s44, 0
      %s47 = sadd.s32 %s46, 1
      %s48 = scalar_select %p45, %s46, %s47
      %p51 = pneg %p45
      %p52 = scmp.eq.s32.totalorder %s15, 1
      %p53 = por %p51, %p52
      %p54 = scmp.ne.s32.totalorder %s46, %s49
      %p55 = scmp.eq.s32.totalorder %s15, 0
      %p56 = por %p54, %p55
      %p57 = scmp.ne.s32.totalorder %s46, %s49
      %p58 = scmp.eq.s32.totalorder %s20, 1
      %p59 = por %p57, %p58
      %p60 = scmp.ne.s32.totalorder %s49, %s50
      %p61 = scmp.eq.s32.totalorder %s20, 0
      %p62 = por %p60, %p61
      %p63 = scmp.ne.s32.totalorder %s49, %s50
      %p64 = scmp.eq.s32.totalorder %s21, 1
      %p65 = por %p63, %p64
      %p67 = scmp.ne.s32.totalorder %s50, %s66
      %p68 = scmp.eq.s32.totalorder %s21, 0
      %p69 = por %p67, %p68
      %s70 = ssub.s32 %s15, %s22
      %p71 = scmp.eq.s32.totalorder %s70, 0
      %s73 = sadd.s32 %s72, 1
      %s74 = scalar_select %p71, %s72, %s73
      %p77 = pneg %p71
      %p78 = scmp.eq.s32.totalorder %s15, 1
      %p79 = por %p77, %p78
      %p80 = scmp.ne.s32.totalorder %s72, %s75
      %p81 = scmp.eq.s32.totalorder %s15, 0
      %p82 = por %p80, %p81
      %p83 = scmp.ne.s32.totalorder %s72, %s75
      %p84 = scmp.eq.s32.totalorder %s20, 1
      %p85 = por %p83, %p84
      %p86 = scmp.ne.s32.totalorder %s75, %s76
      %p87 = scmp.eq.s32.totalorder %s20, 0
      %p88 = por %p86, %p87
      %p89 = scmp.ne.s32.totalorder %s75, %s76
      %p90 = scmp.eq.s32.totalorder %s21, 1
      %p91 = por %p89, %p90
      %p93 = scmp.ne.s32.totalorder %s76, %s92
      %p94 = scmp.eq.s32.totalorder %s21, 0
      %p95 = por %p93, %p94
      %p96 = scmp.le.s32.totalorder 1, %s15
      %p97 = scmp.lt.s32.totalorder %s15, 3
      %p98 = pnand %p96, %p97
      %p99 = pneg %p98
      // Predicated region
      $region9: #{tpu_custom_call.1} parent=5 // pred_check
        _
      $region10: #{tpu_custom_call.1} parent=5 // pred_check_branch
        %101 = sbr.rel (%p98) target = $region12
      $region11: #{tpu_custom_call.1} parent=5 // pred_region
        %s102 = ssub.s32 %s15, 1
        // Predicated region
        $region13: #{tpu_custom_call.1} parent=11 // pred_check
          %p103 = pneg %p36
        $region14: #{tpu_custom_call.1} parent=11 // pred_check_branch
          %105 = sbr.rel (%p103) target = $region16
        $region15: #{tpu_custom_call.1} parent=11 // pred_region
          %107 = vsyncadd [#allocation6], 0
          %s109 = sshll.u32 %s0, 4
          %s110 = int_to_ptr.hbm [resolvable:$true] %s109
          %112 = dma.hbm_to_smem %s110, 16, [#allocation3], [#allocation6]
        $region16: #{tpu_custom_call.1} parent=11 // pred_fallthru
          _
      $region12: #{tpu_custom_call.1} parent=5 // pred_fallthru
        _
      %p113 = scmp.lt.s32.totalorder %s15, 2
      // Predicated region
      $region17: #{tpu_custom_call.1} parent=5 // pred_check
        %p114 = pneg %p113
      $region18: #{tpu_custom_call.1} parent=5 // pred_check_branch
        %116 = sbr.rel (%p114) target = $region20
      $region19: #{tpu_custom_call.1} parent=5 // pred_region
        // Predicated region
        $region21: #{tpu_custom_call.1} parent=19 // pred_check
          %p117 = pneg %p56
        $region22: #{tpu_custom_call.1} parent=19 // pred_check_branch
          %119 = sbr.rel (%p117) target = $region24
        $region23: #{tpu_custom_call.1} parent=19 // pred_region
          %s120 = sand.u32 %s46, 1
          %s121 = scalar_lea.sflag [#allocation4], %s120
          %s122 = sand.u32 %s46, 1
          %s123 = smul.addr %s122, 64
          %s124 = scalar_lea.vmem [#allocation7], %s123
          %126 = vsyncadd %s121, 0
          %s127 = smul.addr %s15, 8
          %s128 = smul.addr %s127, 8
          %s129 = scalar_lea.hbm %s1, %s128
          %s130 = sshll.u32 %s129, 4
          %s131 = int_to_ptr.hbm [resolvable:$true] %s130
          %s132 = sshll.u32 %s124, 4
          %s133 = int_to_ptr.vmem [resolvable:$true] %s132
          %138 = dma.hbm_to_vmem [thread:$0]  %s131, 1024, %s133, %s121, 128, 128, 8
        $region24: #{tpu_custom_call.1} parent=19 // pred_fallthru
          _
      $region20: #{tpu_custom_call.1} parent=5 // pred_fallthru
        _
      %p139 = scmp.le.s32.totalorder 1, %s15
      %p140 = scmp.lt.s32.totalorder %s15, 3
      %p141 = pnand %p139, %p140
      %p142 = pneg %p141
      // Predicated region
      $region25: #{tpu_custom_call.1} parent=5 // pred_check
        _
      $region26: #{tpu_custom_call.1} parent=5 // pred_check_branch
        %144 = sbr.rel (%p141) target = $region28
      $region27: #{tpu_custom_call.1} parent=5 // pred_region
        %s145 = ssub.s32 %s15, 1
        // Predicated region
        $region29: #{tpu_custom_call.1} parent=27 // pred_check
          %p146 = pneg %p36
        $region30: #{tpu_custom_call.1} parent=27 // pred_check_branch
          %148 = sbr.rel (%p146) target = $region32
        $region31: #{tpu_custom_call.1} parent=27 // pred_region
          %150 = dma.done [#allocation6], 16
        $region32: #{tpu_custom_call.1} parent=27 // pred_fallthru
          _
        %s151 = sand.u32 %s49, 1
        %s152 = scalar_lea.sflag [#allocation4], %s151
        %s153 = sand.u32 %s49, 1
        %s154 = smul.addr %s153, 64
        %s155 = scalar_lea.vmem [#allocation7], %s154
        // Predicated region
        $region33: #{tpu_custom_call.1} parent=27 // pred_check
          %p156 = pneg %p62
        $region34: #{tpu_custom_call.1} parent=27 // pred_check_branch
          %158 = sbr.rel (%p156) target = $region36
        $region35: #{tpu_custom_call.1} parent=27 // pred_region
          %160 = dma.done %s152, 1024
        $region36: #{tpu_custom_call.1} parent=27 // pred_fallthru
          _
        %161 = sfence
        %p162 = pneg %p36
        %p163 = pneg %p33
        %s164 = sand.u32 %s49, 1
        %s165 = scalar_lea.sflag [#allocation4], %s164
        %s166 = sand.u32 %s49, 1
        %s167 = smul.addr %s166, 64
        %s168 = scalar_lea.vmem [#allocation7], %s167
        %p169 = pneg %p62
        %p170 = pneg %p59
        %p171 = pneg %p88
        %p172 = pneg %p85
        %s173 = sand.u32 %s75, 1
        %s174 = scalar_lea.sflag [#allocation5], %s173
        %s175 = sand.u32 %s75, 1
        %s176 = smul.addr %s175, 16
        %s177 = scalar_lea.vmem [#allocation8], %s176
        %v178 = vld [vmem:[%s155] sm:$0xff]
        %v179 = vld [vmem:[%s155 + $0x8] sm:$0xff]
        %v180 = vld [vmem:[%s155 + $0x10] sm:$0xff]
        %v181 = vld [vmem:[%s155 + $0x18] sm:$0xff]
        %v182 = vld [vmem:[%s155 + $0x20] sm:$0xff]
        %v183 = vld [vmem:[%s155 + $0x28] sm:$0xff]
        %v184 = vld [vmem:[%s155 + $0x30] sm:$0xff]
        %v185 = vld [vmem:[%s155 + $0x38] sm:$0xff]
        %vm186 = vcmask 130048
        %v187 = vsel %vm186, %v178, 0.0
        %v188 = vsel %vm186, %v180, 0.0
        %v189 = vadd.f32 %v187, %v188
        %v190 = vsel %vm186, %v182, 0.0
        %v191 = vadd.f32 %v189, %v190
        %v192 = vsel %vm186, %v184, 0.0
        %v193 = vadd.f32 %v191, %v192
        %v194 = vsel %vm186, %v179, 0.0
        %v195 = vsel %vm186, %v181, 0.0
        %v196 = vadd.f32 %v194, %v195
        %v197 = vsel %vm186, %v183, 0.0
        %v198 = vadd.f32 %v196, %v197
        %v199 = vsel %vm186, %v185, 0.0
        %v200 = vadd.f32 %v198, %v199
        %v201 = vsel %vm186, %v178, -inf
        %v202 = vsel %vm186, %v180, -inf
        %v203 = vsel %vm186, %v182, -inf
        %v204 = vmax.f32 %v201, %v203
        %v205 = vsel %vm186, %v184, -inf
        %v206 = vmax.f32 %v202, %v205
        %v207 = vmax.f32 %v204, %v206
        %v208 = vsel %vm186, %v179, -inf
        %v209 = vsel %vm186, %v181, -inf
        %v210 = vsel %vm186, %v183, -inf
        %v211 = vmax.f32 %v208, %v210
        %v212 = vsel %vm186, %v185, -inf
        %v213 = vmax.f32 %v209, %v212
        %v214 = vmax.f32 %v211, %v213
        %217 = vrot.lane.b32.xlu0 %v193, 3
        %v218 = vpop.permute.xlu0 %217
        %219 = vrot.lane.b32.xlu0 %v200, 3
        %v220 = vpop.permute.xlu0 %219
        %vm223 = vcmask 23552
        %v224 = vsel %vm223, 0.0, %v218
        %v225 = vsel %vm223, 0.0, %v220
        %vm226 = vcmask 154624
        %v227 = vsel %vm226, %v224, 0.0
        %v228 = vsel %vm226, %v225, 0.0
        %vm231 = vcmask 1042432
        %v232 = vrot.slane %v227, 5
        %v233 = vrot.slane %v228, 5
        %v234 = vsel %vm231, %v232, %v233
        %v238 = vsel %vm231, 0.0, %v232
        %v239 = vsel %vm231, %v233, 0.0
        %240 = vst.msk [vmem:[#allocation2] sm:$0xff] %vm186, %v238
        %241 = vst.msk [vmem:[#allocation2 + $0x8] sm:$0xff] %vm186, %v234
        %vm242 = vcmask 128000
        %243 = vst.msk [vmem:[#allocation2 + $0x10] sm:$0x3f] %vm242, %v239
        %244 = vrot.lane.b32.xlu0 %v232, 127
        %v245 = vpop.permute.xlu0 %244
        %246 = vrot.lane.b32.xlu0 %v234, 127
        %v247 = vpop.permute.xlu0 %246
        %248 = vrot.lane.b32.xlu0 %v233, 127
        %v249 = vpop.permute.xlu0 %248
        %v253 = vsel %vm231, 0.0, %v245
        %v254 = vsel %vm231, %v249, 0.0
        %s255 = scalar_lea.vmem [#allocation2], 24
        %256 = vst.msk [vmem:[%s255] sm:$0xff] %vm186, %v253
        %257 = vst.msk [vmem:[%s255 + $0x8] sm:$0xff] %vm186, %v247
        %258 = vst.msk [vmem:[%s255 + $0x10] sm:$0x3f] %vm242, %v254
        %259 = vrot.lane.b32.xlu0 %v232, 126
        %v260 = vpop.permute.xlu0 %259
        %261 = vrot.lane.b32.xlu0 %v234, 126
        %v262 = vpop.permute.xlu0 %261
        %263 = vrot.lane.b32.xlu0 %v233, 126
        %v264 = vpop.permute.xlu0 %263
        %v268 = vsel %vm231, 0.0, %v260
        %v269 = vsel %vm231, %v264, 0.0
        %s270 = scalar_lea.vmem [#allocation2], 48
        %271 = vst.msk [vmem:[%s270] sm:$0xff] %vm186, %v268
        %272 = vst.msk [vmem:[%s270 + $0x8] sm:$0xff] %vm186, %v262
        %273 = vst.msk [vmem:[%s270 + $0x10] sm:$0x3f] %vm242, %v269
        %274 = vrot.lane.b32.xlu0 %v232, 125
        %v275 = vpop.permute.xlu0 %274
        %276 = vrot.lane.b32.xlu0 %v234, 125
        %v277 = vpop.permute.xlu0 %276
        %278 = vrot.lane.b32.xlu0 %v233, 125
        %v279 = vpop.permute.xlu0 %278
        %v283 = vsel %vm231, 0.0, %v275
        %v284 = vsel %vm231, %v279, 0.0
        %s285 = scalar_lea.vmem [#allocation2], 72
        %286 = vst.msk [vmem:[%s285] sm:$0xff] %vm186, %v283
        %287 = vst.msk [vmem:[%s285 + $0x8] sm:$0xff] %vm186, %v277
        %288 = vst.msk [vmem:[%s285 + $0x10] sm:$0x3f] %vm242, %v284
        %289 = vrot.lane.b32.xlu0 %v232, 124
        %v290 = vpop.permute.xlu0 %289
        %291 = vrot.lane.b32.xlu0 %v234, 124
        %v292 = vpop.permute.xlu0 %291
        %293 = vrot.lane.b32.xlu0 %v233, 124
        %v294 = vpop.permute.xlu0 %293
        %v298 = vsel %vm231, 0.0, %v290
        %v299 = vsel %vm231, %v294, 0.0
        %s300 = scalar_lea.vmem [#allocation2], 96
        %301 = vst.msk [vmem:[%s300] sm:$0xff] %vm186, %v298
        %302 = vst.msk [vmem:[%s300 + $0x8] sm:$0xff] %vm186, %v292
        %303 = vst.msk [vmem:[%s300 + $0x10] sm:$0x3f] %vm242, %v299
        %304 = vrot.lane.b32.xlu0 %v232, 123
        %v305 = vpop.permute.xlu0 %304
        %306 = vrot.lane.b32.xlu0 %v234, 123
        %v307 = vpop.permute.xlu0 %306
        %308 = vrot.lane.b32.xlu0 %v233, 123
        %v309 = vpop.permute.xlu0 %308
        %v313 = vsel %vm231, 0.0, %v305
        %v314 = vsel %vm231, %v309, 0.0
        %s315 = scalar_lea.vmem [#allocation2], 120
        %316 = vst.msk [vmem:[%s315] sm:$0xff] %vm186, %v313
        %317 = vst.msk [vmem:[%s315 + $0x8] sm:$0xff] %vm186, %v307
        %318 = vst.msk [vmem:[%s315 + $0x10] sm:$0x3f] %vm242, %v314
        %319 = vrot.lane.b32.xlu0 %v232, 122
        %v320 = vpop.permute.xlu0 %319
        %321 = vrot.lane.b32.xlu0 %v234, 122
        %v322 = vpop.permute.xlu0 %321
        %323 = vrot.lane.b32.xlu0 %v233, 122
        %v324 = vpop.permute.xlu0 %323
        %v328 = vsel %vm231, 0.0, %v320
        %v329 = vsel %vm231, %v324, 0.0
        %s330 = scalar_lea.vmem [#allocation2], 144
        %331 = vst.msk [vmem:[%s330] sm:$0xff] %vm186, %v328
        %332 = vst.msk [vmem:[%s330 + $0x8] sm:$0xff] %vm186, %v322
        %333 = vst.msk [vmem:[%s330 + $0x10] sm:$0x3f] %vm242, %v329
        %336 = vrot.lane.b32.xlu0 %v207, 3
        %v337 = vpop.permute.xlu0 %336
        %338 = vrot.lane.b32.xlu0 %v214, 3
        %v339 = vpop.permute.xlu0 %338
        %v342 = vsel %vm223, 0.0, %v337
        %v343 = vsel %vm223, 0.0, %v339
        %v344 = vsel %vm226, %v342, 0.0
        %v345 = vsel %vm226, %v343, 0.0
        %v348 = vrot.slane %v344, 5
        %v349 = vrot.slane %v345, 5
        %v350 = vsel %vm231, %v348, %v349
        %v354 = vsel %vm231, 0.0, %v348
        %v355 = vsel %vm231, %v349, 0.0
        %s356 = scalar_lea.vmem [#allocation2], 168
        %357 = vst.msk [vmem:[%s356] sm:$0xff] %vm186, %v354
        %358 = vst.msk [vmem:[%s356 + $0x8] sm:$0xff] %vm186, %v350
        %359 = vst.msk [vmem:[%s356 + $0x10] sm:$0x3f] %vm242, %v355
        %360 = vrot.lane.b32.xlu0 %v348, 127
        %v361 = vpop.permute.xlu0 %360
        %362 = vrot.lane.b32.xlu0 %v350, 127
        %v363 = vpop.permute.xlu0 %362
        %364 = vrot.lane.b32.xlu0 %v349, 127
        %v365 = vpop.permute.xlu0 %364
        %v369 = vsel %vm231, 0.0, %v361
        %v370 = vsel %vm231, %v365, 0.0
        %s371 = scalar_lea.vmem [#allocation2], 192
        %372 = vst.msk [vmem:[%s371] sm:$0xff] %vm186, %v369
        %373 = vst.msk [vmem:[%s371 + $0x8] sm:$0xff] %vm186, %v363
        %374 = vst.msk [vmem:[%s371 + $0x10] sm:$0x3f] %vm242, %v370
        %375 = vrot.lane.b32.xlu0 %v348, 126
        %v376 = vpop.permute.xlu0 %375
        %377 = vrot.lane.b32.xlu0 %v350, 126
        %v378 = vpop.permute.xlu0 %377
        %379 = vrot.lane.b32.xlu0 %v349, 126
        %v380 = vpop.permute.xlu0 %379
        %v384 = vsel %vm231, 0.0, %v376
        %v385 = vsel %vm231, %v380, 0.0
        %s386 = scalar_lea.vmem [#allocation2], 216
        %387 = vst.msk [vmem:[%s386] sm:$0xff] %vm186, %v384
        %388 = vst.msk [vmem:[%s386 + $0x8] sm:$0xff] %vm186, %v378
        %389 = vst.msk [vmem:[%s386 + $0x10] sm:$0x3f] %vm242, %v385
        %390 = vrot.lane.b32.xlu0 %v348, 125
        %v391 = vpop.permute.xlu0 %390
        %392 = vrot.lane.b32.xlu0 %v350, 125
        %v393 = vpop.permute.xlu0 %392
        %394 = vrot.lane.b32.xlu0 %v349, 125
        %v395 = vpop.permute.xlu0 %394
        %v399 = vsel %vm231, 0.0, %v391
        %v400 = vsel %vm231, %v395, 0.0
        %s401 = scalar_lea.vmem [#allocation2], 240
        %402 = vst.msk [vmem:[%s401] sm:$0xff] %vm186, %v399
        %403 = vst.msk [vmem:[%s401 + $0x8] sm:$0xff] %vm186, %v393
        %404 = vst.msk [vmem:[%s401 + $0x10] sm:$0x3f] %vm242, %v400
        %405 = vrot.lane.b32.xlu0 %v348, 124
        %v406 = vpop.permute.xlu0 %405
        %407 = vrot.lane.b32.xlu0 %v350, 124
        %v408 = vpop.permute.xlu0 %407
        %409 = vrot.lane.b32.xlu0 %v349, 124
        %v410 = vpop.permute.xlu0 %409
        %v414 = vsel %vm231, 0.0, %v406
        %v415 = vsel %vm231, %v410, 0.0
        %s416 = scalar_lea.vmem [#allocation2], 264
        %417 = vst.msk [vmem:[%s416] sm:$0xff] %vm186, %v414
        %418 = vst.msk [vmem:[%s416 + $0x8] sm:$0xff] %vm186, %v408
        %419 = vst.msk [vmem:[%s416 + $0x10] sm:$0x3f] %vm242, %v415
        %420 = vrot.lane.b32.xlu0 %v348, 123
        %v421 = vpop.permute.xlu0 %420
        %422 = vrot.lane.b32.xlu0 %v350, 123
        %v423 = vpop.permute.xlu0 %422
        %424 = vrot.lane.b32.xlu0 %v349, 123
        %v425 = vpop.permute.xlu0 %424
        %v429 = vsel %vm231, 0.0, %v421
        %v430 = vsel %vm231, %v425, 0.0
        %s431 = scalar_lea.vmem [#allocation2], 288
        %432 = vst.msk [vmem:[%s431] sm:$0xff] %vm186, %v429
        %433 = vst.msk [vmem:[%s431 + $0x8] sm:$0xff] %vm186, %v423
        %434 = vst.msk [vmem:[%s431 + $0x10] sm:$0x3f] %vm242, %v430
        %435 = vrot.lane.b32.xlu0 %v348, 122
        %v436 = vpop.permute.xlu0 %435
        %437 = vrot.lane.b32.xlu0 %v350, 122
        %v438 = vpop.permute.xlu0 %437
        %439 = vrot.lane.b32.xlu0 %v349, 122
        %v440 = vpop.permute.xlu0 %439
        %v444 = vsel %vm231, 0.0, %v436
        %v445 = vsel %vm231, %v440, 0.0
        %s446 = scalar_lea.vmem [#allocation2], 312
        %447 = vst.msk [vmem:[%s446] sm:$0xff] %vm186, %v444
        %448 = vst.msk [vmem:[%s446 + $0x8] sm:$0xff] %vm186, %v438
        %449 = vst.msk [vmem:[%s446 + $0x10] sm:$0x3f] %vm242, %v445
        %s450 = sld [smem:[#allocation3]]
        %v451 = vld [vmem:[#allocation2] sm:$0xff]
        %v452 = vld [vmem:[#allocation2 + $0x8] sm:$0xff]
        %v453 = vstv %s450
        %v454 = vmul.f32 %v451, %v453
        %v455 = vmul.f32 %v452, %v453
        %v456 = vadd.f32 %v454, 0.0
        %v457 = vadd.f32 %v455, 0.0
        %s458 = sld [smem:[#allocation3 + $0x1]]
        %v459 = vld [vmem:[%s255] sm:$0xff]
        %v460 = vld [vmem:[%s255 + $0x8] sm:$0xff]
        %v461 = vstv %s458
        %v462 = vmul.f32 %v459, %v461
        %v463 = vmul.f32 %v460, %v461
        %v464 = vadd.f32 %v456, %v462
        %v465 = vadd.f32 %v457, %v463
        %s466 = sld [smem:[#allocation3 + $0x2]]
        %v467 = vld [vmem:[%s270] sm:$0xff]
        %v468 = vld [vmem:[%s270 + $0x8] sm:$0xff]
        %v469 = vstv %s466
        %v470 = vmul.f32 %v467, %v469
        %v471 = vmul.f32 %v468, %v469
        %v472 = vadd.f32 %v464, %v470
        %v473 = vadd.f32 %v465, %v471
        %s474 = sld [smem:[#allocation3 + $0x3]]
        %v475 = vld [vmem:[%s285] sm:$0xff]
        %v476 = vld [vmem:[%s285 + $0x8] sm:$0xff]
        %v477 = vstv %s474
        %v478 = vmul.f32 %v475, %v477
        %v479 = vmul.f32 %v476, %v477
        %v480 = vadd.f32 %v472, %v478
        %v481 = vadd.f32 %v473, %v479
        %s482 = sld [smem:[#allocation3 + $0x4]]
        %v483 = vld [vmem:[%s300] sm:$0xff]
        %v484 = vld [vmem:[%s300 + $0x8] sm:$0xff]
        %v485 = vstv %s482
        %v486 = vmul.f32 %v483, %v485
        %v487 = vmul.f32 %v484, %v485
        %v488 = vadd.f32 %v480, %v486
        %v489 = vadd.f32 %v481, %v487
        %s490 = sld [smem:[#allocation3 + $0x5]]
        %v491 = vld [vmem:[%s315] sm:$0xff]
        %v492 = vld [vmem:[%s315 + $0x8] sm:$0xff]
        %v493 = vstv %s490
        %v494 = vmul.f32 %v491, %v493
        %v495 = vmul.f32 %v492, %v493
        %v496 = vadd.f32 %v488, %v494
        %v497 = vadd.f32 %v489, %v495
        %s498 = sld [smem:[#allocation3 + $0x6]]
        %v499 = vld [vmem:[%s330] sm:$0xff]
        %v500 = vld [vmem:[%s330 + $0x8] sm:$0xff]
        %v501 = vstv %s498
        %v502 = vmul.f32 %v499, %v501
        %v503 = vmul.f32 %v500, %v501
        %v504 = vadd.f32 %v496, %v502
        %v505 = vadd.f32 %v497, %v503
        %s506 = sld [smem:[#allocation3 + $0x31]]
        %v507 = vld [vmem:[%s356] sm:$0xff]
        %v508 = vld [vmem:[%s356 + $0x8] sm:$0xff]
        %v509 = vstv %s506
        %v510 = vmul.f32 %v507, %v509
        %v511 = vmul.f32 %v508, %v509
        %v512 = vadd.f32 %v504, %v510
        %v513 = vadd.f32 %v505, %v511
        %s514 = sld [smem:[#allocation3 + $0x32]]
        %v515 = vld [vmem:[%s371] sm:$0xff]
        %v516 = vld [vmem:[%s371 + $0x8] sm:$0xff]
        %v517 = vstv %s514
        %v518 = vmul.f32 %v515, %v517
        %v519 = vmul.f32 %v516, %v517
        %v520 = vadd.f32 %v512, %v518
        %v521 = vadd.f32 %v513, %v519
        %s522 = sld [smem:[#allocation3 + $0x33]]
        %v523 = vld [vmem:[%s386] sm:$0xff]
        %v524 = vld [vmem:[%s386 + $0x8] sm:$0xff]
        %v525 = vstv %s522
        %v526 = vmul.f32 %v523, %v525
        %v527 = vmul.f32 %v524, %v525
        %v528 = vadd.f32 %v520, %v526
        %v529 = vadd.f32 %v521, %v527
        %s530 = sld [smem:[#allocation3 + $0x34]]
        %v531 = vld [vmem:[%s401] sm:$0xff]
        %v532 = vld [vmem:[%s401 + $0x8] sm:$0xff]
        %v533 = vstv %s530
        %v534 = vmul.f32 %v531, %v533
        %v535 = vmul.f32 %v532, %v533
        %v536 = vadd.f32 %v528, %v534
        %v537 = vadd.f32 %v529, %v535
        %s538 = sld [smem:[#allocation3 + $0x35]]
        %v539 = vld [vmem:[%s416] sm:$0xff]
        %v540 = vld [vmem:[%s416 + $0x8] sm:$0xff]
        %v541 = vstv %s538
        %v542 = vmul.f32 %v539, %v541
        %v543 = vmul.f32 %v540, %v541
        %v544 = vadd.f32 %v536, %v542
        %v545 = vadd.f32 %v537, %v543
        %s546 = sld [smem:[#allocation3 + $0x36]]
        %v547 = vld [vmem:[%s431] sm:$0xff]
        %v548 = vld [vmem:[%s431 + $0x8] sm:$0xff]
        %v549 = vstv %s546
        %v550 = vmul.f32 %v547, %v549
        %v551 = vmul.f32 %v548, %v549
        %v552 = vadd.f32 %v544, %v550
        %v553 = vadd.f32 %v545, %v551
        %s554 = sld [smem:[#allocation3 + $0x37]]
        %v555 = vld [vmem:[%s446] sm:$0xff]
        %v556 = vld [vmem:[%s446 + $0x8] sm:$0xff]
        %v557 = vstv %s554
        %v558 = vmul.f32 %v555, %v557
        %v559 = vmul.f32 %v556, %v557
        %v560 = vadd.f32 %v552, %v558
        %v561 = vadd.f32 %v553, %v559
        %s562 = sld [smem:[#allocation3 + $0x7]]
        %v563 = vld [vmem:[#allocation2 + $0x1] sm:$0xff]
        %v564 = vld [vmem:[#allocation2 + $0x9] sm:$0xff]
        %v565 = vstv %s562
        %v566 = vmul.f32 %v563, %v565
        %v567 = vmul.f32 %v564, %v565
        %v568 = vadd.f32 %v560, %v566
        %v569 = vadd.f32 %v561, %v567
        %s570 = sld [smem:[#allocation3 + $0x8]]
        %v571 = vld [vmem:[%s255 + $0x1] sm:$0xff]
        %v572 = vld [vmem:[%s255 + $0x9] sm:$0xff]
        %v573 = vstv %s570
        %v574 = vmul.f32 %v571, %v573
        %v575 = vmul.f32 %v572, %v573
        %v576 = vadd.f32 %v568, %v574
        %v577 = vadd.f32 %v569, %v575
        %s578 = sld [smem:[#allocation3 + $0x9]]
        %v579 = vld [vmem:[%s270 + $0x1] sm:$0xff]
        %v580 = vld [vmem:[%s270 + $0x9] sm:$0xff]
        %v581 = vstv %s578
        %v582 = vmul.f32 %v579, %v581
        %v583 = vmul.f32 %v580, %v581
        %v584 = vadd.f32 %v576, %v582
        %v585 = vadd.f32 %v577, %v583
        %s586 = sld [smem:[#allocation3 + $0xa]]
        %v587 = vld [vmem:[%s285 + $0x1] sm:$0xff]
        %v588 = vld [vmem:[%s285 + $0x9] sm:$0xff]
        %v589 = vstv %s586
        %v590 = vmul.f32 %v587, %v589
        %v591 = vmul.f32 %v588, %v589
        %v592 = vadd.f32 %v584, %v590
        %v593 = vadd.f32 %v585, %v591
        %s594 = sld [smem:[#allocation3 + $0xb]]
        %v595 = vld [vmem:[%s300 + $0x1] sm:$0xff]
        %v596 = vld [vmem:[%s300 + $0x9] sm:$0xff]
        %v597 = vstv %s594
        %v598 = vmul.f32 %v595, %v597
        %v599 = vmul.f32 %v596, %v597
        %v600 = vadd.f32 %v592, %v598
        %v601 = vadd.f32 %v593, %v599
        %s602 = sld [smem:[#allocation3 + $0xc]]
        %v603 = vld [vmem:[%s315 + $0x1] sm:$0xff]
        %v604 = vld [vmem:[%s315 + $0x9] sm:$0xff]
        %v605 = vstv %s602
        %v606 = vmul.f32 %v603, %v605
        %v607 = vmul.f32 %v604, %v605
        %v608 = vadd.f32 %v600, %v606
        %v609 = vadd.f32 %v601, %v607
        %s610 = sld [smem:[#allocation3 + $0xd]]
        %v611 = vld [vmem:[%s330 + $0x1] sm:$0xff]
        %v612 = vld [vmem:[%s330 + $0x9] sm:$0xff]
        %v613 = vstv %s610
        %v614 = vmul.f32 %v611, %v613
        %v615 = vmul.f32 %v612, %v613
        %v616 = vadd.f32 %v608, %v614
        %v617 = vadd.f32 %v609, %v615
        %s618 = sld [smem:[#allocation3 + $0x38]]
        %v619 = vld [vmem:[%s356 + $0x1] sm:$0xff]
        %v620 = vld [vmem:[%s356 + $0x9] sm:$0xff]
        %v621 = vstv %s618
        %v622 = vmul.f32 %v619, %v621
        %v623 = vmul.f32 %v620, %v621
        %v624 = vadd.f32 %v616, %v622
        %v625 = vadd.f32 %v617, %v623
        %s626 = sld [smem:[#allocation3 + $0x39]]
        %v627 = vld [vmem:[%s371 + $0x1] sm:$0xff]
        %v628 = vld [vmem:[%s371 + $0x9] sm:$0xff]
        %v629 = vstv %s626
        %v630 = vmul.f32 %v627, %v629
        %v631 = vmul.f32 %v628, %v629
        %v632 = vadd.f32 %v624, %v630
        %v633 = vadd.f32 %v625, %v631
        %s634 = sld [smem:[#allocation3 + $0x3a]]
        %v635 = vld [vmem:[%s386 + $0x1] sm:$0xff]
        %v636 = vld [vmem:[%s386 + $0x9] sm:$0xff]
        %v637 = vstv %s634
        %v638 = vmul.f32 %v635, %v637
        %v639 = vmul.f32 %v636, %v637
        %v640 = vadd.f32 %v632, %v638
        %v641 = vadd.f32 %v633, %v639
        %s642 = sld [smem:[#allocation3 + $0x3b]]
        %v643 = vld [vmem:[%s401 + $0x1] sm:$0xff]
        %v644 = vld [vmem:[%s401 + $0x9] sm:$0xff]
        %v645 = vstv %s642
        %v646 = vmul.f32 %v643, %v645
        %v647 = vmul.f32 %v644, %v645
        %v648 = vadd.f32 %v640, %v646
        %v649 = vadd.f32 %v641, %v647
        %s650 = sld [smem:[#allocation3 + $0x3c]]
        %v651 = vld [vmem:[%s416 + $0x1] sm:$0xff]
        %v652 = vld [vmem:[%s416 + $0x9] sm:$0xff]
        %v653 = vstv %s650
        %v654 = vmul.f32 %v651, %v653
        %v655 = vmul.f32 %v652, %v653
        %v656 = vadd.f32 %v648, %v654
        %v657 = vadd.f32 %v649, %v655
        %s658 = sld [smem:[#allocation3 + $0x3d]]
        %v659 = vld [vmem:[%s431 + $0x1] sm:$0xff]
        %v660 = vld [vmem:[%s431 + $0x9] sm:$0xff]
        %v661 = vstv %s658
        %v662 = vmul.f32 %v659, %v661
        %v663 = vmul.f32 %v660, %v661
        %v664 = vadd.f32 %v656, %v662
        %v665 = vadd.f32 %v657, %v663
        %s666 = sld [smem:[#allocation3 + $0x3e]]
        %v667 = vld [vmem:[%s446 + $0x1] sm:$0xff]
        %v668 = vld [vmem:[%s446 + $0x9] sm:$0xff]
        %v669 = vstv %s666
        %v670 = vmul.f32 %v667, %v669
        %v671 = vmul.f32 %v668, %v669
        %v672 = vadd.f32 %v664, %v670
        %v673 = vadd.f32 %v665, %v671
        %s674 = sld [smem:[#allocation3 + $0xe]]
        %v675 = vld [vmem:[#allocation2 + $0x2] sm:$0xff]
        %v676 = vld [vmem:[#allocation2 + $0xa] sm:$0xff]
        %v677 = vstv %s674
        %v678 = vmul.f32 %v675, %v677
        %v679 = vmul.f32 %v676, %v677
        %v680 = vadd.f32 %v672, %v678
        %v681 = vadd.f32 %v673, %v679
        %s682 = sld [smem:[#allocation3 + $0xf]]
        %v683 = vld [vmem:[%s255 + $0x2] sm:$0xff]
        %v684 = vld [vmem:[%s255 + $0xa] sm:$0xff]
        %v685 = vstv %s682
        %v686 = vmul.f32 %v683, %v685
        %v687 = vmul.f32 %v684, %v685
        %v688 = vadd.f32 %v680, %v686
        %v689 = vadd.f32 %v681, %v687
        %s690 = sld [smem:[#allocation3 + $0x10]]
        %v691 = vld [vmem:[%s270 + $0x2] sm:$0xff]
        %v692 = vld [vmem:[%s270 + $0xa] sm:$0xff]
        %v693 = vstv %s690
        %v694 = vmul.f32 %v691, %v693
        %v695 = vmul.f32 %v692, %v693
        %v696 = vadd.f32 %v688, %v694
        %v697 = vadd.f32 %v689, %v695
        %s698 = sld [smem:[#allocation3 + $0x11]]
        %v699 = vld [vmem:[%s285 + $0x2] sm:$0xff]
        %v700 = vld [vmem:[%s285 + $0xa] sm:$0xff]
        %v701 = vstv %s698
        %v702 = vmul.f32 %v699, %v701
        %v703 = vmul.f32 %v700, %v701
        %v704 = vadd.f32 %v696, %v702
        %v705 = vadd.f32 %v697, %v703
        %s706 = sld [smem:[#allocation3 + $0x12]]
        %v707 = vld [vmem:[%s300 + $0x2] sm:$0xff]
        %v708 = vld [vmem:[%s300 + $0xa] sm:$0xff]
        %v709 = vstv %s706
        %v710 = vmul.f32 %v707, %v709
        %v711 = vmul.f32 %v708, %v709
        %v712 = vadd.f32 %v704, %v710
        %v713 = vadd.f32 %v705, %v711
        %s714 = sld [smem:[#allocation3 + $0x13]]
        %v715 = vld [vmem:[%s315 + $0x2] sm:$0xff]
        %v716 = vld [vmem:[%s315 + $0xa] sm:$0xff]
        %v717 = vstv %s714
        %v718 = vmul.f32 %v715, %v717
        %v719 = vmul.f32 %v716, %v717
        %v720 = vadd.f32 %v712, %v718
        %v721 = vadd.f32 %v713, %v719
        %s722 = sld [smem:[#allocation3 + $0x14]]
        %v723 = vld [vmem:[%s330 + $0x2] sm:$0xff]
        %v724 = vld [vmem:[%s330 + $0xa] sm:$0xff]
        %v725 = vstv %s722
        %v726 = vmul.f32 %v723, %v725
        %v727 = vmul.f32 %v724, %v725
        %v728 = vadd.f32 %v720, %v726
        %v729 = vadd.f32 %v721, %v727
        %s730 = sld [smem:[#allocation3 + $0x3f]]
        %v731 = vld [vmem:[%s356 + $0x2] sm:$0xff]
        %v732 = vld [vmem:[%s356 + $0xa] sm:$0xff]
        %v733 = vstv %s730
        %v734 = vmul.f32 %v731, %v733
        %v735 = vmul.f32 %v732, %v733
        %v736 = vadd.f32 %v728, %v734
        %v737 = vadd.f32 %v729, %v735
        %s738 = sld [smem:[#allocation3 + $0x40]]
        %v739 = vld [vmem:[%s371 + $0x2] sm:$0xff]
        %v740 = vld [vmem:[%s371 + $0xa] sm:$0xff]
        %v741 = vstv %s738
        %v742 = vmul.f32 %v739, %v741
        %v743 = vmul.f32 %v740, %v741
        %v744 = vadd.f32 %v736, %v742
        %v745 = vadd.f32 %v737, %v743
        %s746 = sld [smem:[#allocation3 + $0x41]]
        %v747 = vld [vmem:[%s386 + $0x2] sm:$0xff]
        %v748 = vld [vmem:[%s386 + $0xa] sm:$0xff]
        %v749 = vstv %s746
        %v750 = vmul.f32 %v747, %v749
        %v751 = vmul.f32 %v748, %v749
        %v752 = vadd.f32 %v744, %v750
        %v753 = vadd.f32 %v745, %v751
        %s754 = sld [smem:[#allocation3 + $0x42]]
        %v755 = vld [vmem:[%s401 + $0x2] sm:$0xff]
        %v756 = vld [vmem:[%s401 + $0xa] sm:$0xff]
        %v757 = vstv %s754
        %v758 = vmul.f32 %v755, %v757
        %v759 = vmul.f32 %v756, %v757
        %v760 = vadd.f32 %v752, %v758
        %v761 = vadd.f32 %v753, %v759
        %s762 = sld [smem:[#allocation3 + $0x43]]
        %v763 = vld [vmem:[%s416 + $0x2] sm:$0xff]
        %v764 = vld [vmem:[%s416 + $0xa] sm:$0xff]
        %v765 = vstv %s762
        %v766 = vmul.f32 %v763, %v765
        %v767 = vmul.f32 %v764, %v765
        %v768 = vadd.f32 %v760, %v766
        %v769 = vadd.f32 %v761, %v767
        %s770 = sld [smem:[#allocation3 + $0x44]]
        %v771 = vld [vmem:[%s431 + $0x2] sm:$0xff]
        %v772 = vld [vmem:[%s431 + $0xa] sm:$0xff]
        %v773 = vstv %s770
        %v774 = vmul.f32 %v771, %v773
        %v775 = vmul.f32 %v772, %v773
        %v776 = vadd.f32 %v768, %v774
        %v777 = vadd.f32 %v769, %v775
        %s778 = sld [smem:[#allocation3 + $0x45]]
        %v779 = vld [vmem:[%s446 + $0x2] sm:$0xff]
        %v780 = vld [vmem:[%s446 + $0xa] sm:$0xff]
        %v781 = vstv %s778
        %v782 = vmul.f32 %v779, %v781
        %v783 = vmul.f32 %v780, %v781
        %v784 = vadd.f32 %v776, %v782
        %v785 = vadd.f32 %v777, %v783
        %s786 = sld [smem:[#allocation3 + $0x15]]
        %v787 = vld [vmem:[#allocation2 + $0x3] sm:$0xff]
        %v788 = vld [vmem:[#allocation2 + $0xb] sm:$0xff]
        %v789 = vstv %s786
        %v790 = vmul.f32 %v787, %v789
        %v791 = vmul.f32 %v788, %v789
        %v792 = vadd.f32 %v784, %v790
        %v793 = vadd.f32 %v785, %v791
        %s794 = sld [smem:[#allocation3 + $0x16]]
        %v795 = vld [vmem:[%s255 + $0x3] sm:$0xff]
        %v796 = vld [vmem:[%s255 + $0xb] sm:$0xff]
        %v797 = vstv %s794
        %v798 = vmul.f32 %v795, %v797
        %v799 = vmul.f32 %v796, %v797
        %v800 = vadd.f32 %v792, %v798
        %v801 = vadd.f32 %v793, %v799
        %s802 = sld [smem:[#allocation3 + $0x17]]
        %v803 = vld [vmem:[%s270 + $0x3] sm:$0xff]
        %v804 = vld [vmem:[%s270 + $0xb] sm:$0xff]
        %v805 = vstv %s802
        %v806 = vmul.f32 %v803, %v805
        %v807 = vmul.f32 %v804, %v805
        %v808 = vadd.f32 %v800, %v806
        %v809 = vadd.f32 %v801, %v807
        %s810 = sld [smem:[#allocation3 + $0x18]]
        %v811 = vld [vmem:[%s285 + $0x3] sm:$0xff]
        %v812 = vld [vmem:[%s285 + $0xb] sm:$0xff]
        %v813 = vstv %s810
        %v814 = vmul.f32 %v811, %v813
        %v815 = vmul.f32 %v812, %v813
        %v816 = vadd.f32 %v808, %v814
        %v817 = vadd.f32 %v809, %v815
        %s818 = sld [smem:[#allocation3 + $0x19]]
        %v819 = vld [vmem:[%s300 + $0x3] sm:$0xff]
        %v820 = vld [vmem:[%s300 + $0xb] sm:$0xff]
        %v821 = vstv %s818
        %v822 = vmul.f32 %v819, %v821
        %v823 = vmul.f32 %v820, %v821
        %v824 = vadd.f32 %v816, %v822
        %v825 = vadd.f32 %v817, %v823
        %s826 = sld [smem:[#allocation3 + $0x1a]]
        %v827 = vld [vmem:[%s315 + $0x3] sm:$0xff]
        %v828 = vld [vmem:[%s315 + $0xb] sm:$0xff]
        %v829 = vstv %s826
        %v830 = vmul.f32 %v827, %v829
        %v831 = vmul.f32 %v828, %v829
        %v832 = vadd.f32 %v824, %v830
        %v833 = vadd.f32 %v825, %v831
        %s834 = sld [smem:[#allocation3 + $0x1b]]
        %v835 = vld [vmem:[%s330 + $0x3] sm:$0xff]
        %v836 = vld [vmem:[%s330 + $0xb] sm:$0xff]
        %v837 = vstv %s834
        %v838 = vmul.f32 %v835, %v837
        %v839 = vmul.f32 %v836, %v837
        %v840 = vadd.f32 %v832, %v838
        %v841 = vadd.f32 %v833, %v839
        %s842 = sld [smem:[#allocation3 + $0x46]]
        %v843 = vld [vmem:[%s356 + $0x3] sm:$0xff]
        %v844 = vld [vmem:[%s356 + $0xb] sm:$0xff]
        %v845 = vstv %s842
        %v846 = vmul.f32 %v843, %v845
        %v847 = vmul.f32 %v844, %v845
        %v848 = vadd.f32 %v840, %v846
        %v849 = vadd.f32 %v841, %v847
        %s850 = sld [smem:[#allocation3 + $0x47]]
        %v851 = vld [vmem:[%s371 + $0x3] sm:$0xff]
        %v852 = vld [vmem:[%s371 + $0xb] sm:$0xff]
        %v853 = vstv %s850
        %v854 = vmul.f32 %v851, %v853
        %v855 = vmul.f32 %v852, %v853
        %v856 = vadd.f32 %v848, %v854
        %v857 = vadd.f32 %v849, %v855
        %s858 = sld [smem:[#allocation3 + $0x48]]
        %v859 = vld [vmem:[%s386 + $0x3] sm:$0xff]
        %v860 = vld [vmem:[%s386 + $0xb] sm:$0xff]
        %v861 = vstv %s858
        %v862 = vmul.f32 %v859, %v861
        %v863 = vmul.f32 %v860, %v861
        %v864 = vadd.f32 %v856, %v862
        %v865 = vadd.f32 %v857, %v863
        %s866 = sld [smem:[#allocation3 + $0x49]]
        %v867 = vld [vmem:[%s401 + $0x3] sm:$0xff]
        %v868 = vld [vmem:[%s401 + $0xb] sm:$0xff]
        %v869 = vstv %s866
        %v870 = vmul.f32 %v867, %v869
        %v871 = vmul.f32 %v868, %v869
        %v872 = vadd.f32 %v864, %v870
        %v873 = vadd.f32 %v865, %v871
        %s874 = sld [smem:[#allocation3 + $0x4a]]
        %v875 = vld [vmem:[%s416 + $0x3] sm:$0xff]
        %v876 = vld [vmem:[%s416 + $0xb] sm:$0xff]
        %v877 = vstv %s874
        %v878 = vmul.f32 %v875, %v877
        %v879 = vmul.f32 %v876, %v877
        %v880 = vadd.f32 %v872, %v878
        %v881 = vadd.f32 %v873, %v879
        %s882 = sld [smem:[#allocation3 + $0x4b]]
        %v883 = vld [vmem:[%s431 + $0x3] sm:$0xff]
        %v884 = vld [vmem:[%s431 + $0xb] sm:$0xff]
        %v885 = vstv %s882
        %v886 = vmul.f32 %v883, %v885
        %v887 = vmul.f32 %v884, %v885
        %v888 = vadd.f32 %v880, %v886
        %v889 = vadd.f32 %v881, %v887
        %s890 = sld [smem:[#allocation3 + $0x4c]]
        %v891 = vld [vmem:[%s446 + $0x3] sm:$0xff]
        %v892 = vld [vmem:[%s446 + $0xb] sm:$0xff]
        %v893 = vstv %s890
        %v894 = vmul.f32 %v891, %v893
        %v895 = vmul.f32 %v892, %v893
        %v896 = vadd.f32 %v888, %v894
        %v897 = vadd.f32 %v889, %v895
        %s898 = sld [smem:[#allocation3 + $0x1c]]
        %v899 = vld [vmem:[#allocation2 + $0x4] sm:$0xff]
        %v900 = vld [vmem:[#allocation2 + $0xc] sm:$0xff]
        %v901 = vstv %s898
        %v902 = vmul.f32 %v899, %v901
        %v903 = vmul.f32 %v900, %v901
        %v904 = vadd.f32 %v896, %v902
        %v905 = vadd.f32 %v897, %v903
        %s906 = sld [smem:[#allocation3 + $0x1d]]
        %v907 = vld [vmem:[%s255 + $0x4] sm:$0xff]
        %v908 = vld [vmem:[%s255 + $0xc] sm:$0xff]
        %v909 = vstv %s906
        %v910 = vmul.f32 %v907, %v909
        %v911 = vmul.f32 %v908, %v909
        %v912 = vadd.f32 %v904, %v910
        %v913 = vadd.f32 %v905, %v911
        %s914 = sld [smem:[#allocation3 + $0x1e]]
        %v915 = vld [vmem:[%s270 + $0x4] sm:$0xff]
        %v916 = vld [vmem:[%s270 + $0xc] sm:$0xff]
        %v917 = vstv %s914
        %v918 = vmul.f32 %v915, %v917
        %v919 = vmul.f32 %v916, %v917
        %v920 = vadd.f32 %v912, %v918
        %v921 = vadd.f32 %v913, %v919
        %s922 = sld [smem:[#allocation3 + $0x1f]]
        %v923 = vld [vmem:[%s285 + $0x4] sm:$0xff]
        %v924 = vld [vmem:[%s285 + $0xc] sm:$0xff]
        %v925 = vstv %s922
        %v926 = vmul.f32 %v923, %v925
        %v927 = vmul.f32 %v924, %v925
        %v928 = vadd.f32 %v920, %v926
        %v929 = vadd.f32 %v921, %v927
        %s930 = sld [smem:[#allocation3 + $0x20]]
        %v931 = vld [vmem:[%s300 + $0x4] sm:$0xff]
        %v932 = vld [vmem:[%s300 + $0xc] sm:$0xff]
        %v933 = vstv %s930
        %v934 = vmul.f32 %v931, %v933
        %v935 = vmul.f32 %v932, %v933
        %v936 = vadd.f32 %v928, %v934
        %v937 = vadd.f32 %v929, %v935
        %s938 = sld [smem:[#allocation3 + $0x21]]
        %v939 = vld [vmem:[%s315 + $0x4] sm:$0xff]
        %v940 = vld [vmem:[%s315 + $0xc] sm:$0xff]
        %v941 = vstv %s938
        %v942 = vmul.f32 %v939, %v941
        %v943 = vmul.f32 %v940, %v941
        %v944 = vadd.f32 %v936, %v942
        %v945 = vadd.f32 %v937, %v943
        %s946 = sld [smem:[#allocation3 + $0x22]]
        %v947 = vld [vmem:[%s330 + $0x4] sm:$0xff]
        %v948 = vld [vmem:[%s330 + $0xc] sm:$0xff]
        %v949 = vstv %s946
        %v950 = vmul.f32 %v947, %v949
        %v951 = vmul.f32 %v948, %v949
        %v952 = vadd.f32 %v944, %v950
        %v953 = vadd.f32 %v945, %v951
        %s954 = sld [smem:[#allocation3 + $0x4d]]
        %v955 = vld [vmem:[%s356 + $0x4] sm:$0xff]
        %v956 = vld [vmem:[%s356 + $0xc] sm:$0xff]
        %v957 = vstv %s954
        %v958 = vmul.f32 %v955, %v957
        %v959 = vmul.f32 %v956, %v957
        %v960 = vadd.f32 %v952, %v958
        %v961 = vadd.f32 %v953, %v959
        %s962 = sld [smem:[#allocation3 + $0x4e]]
        %v963 = vld [vmem:[%s371 + $0x4] sm:$0xff]
        %v964 = vld [vmem:[%s371 + $0xc] sm:$0xff]
        %v965 = vstv %s962
        %v966 = vmul.f32 %v963, %v965
        %v967 = vmul.f32 %v964, %v965
        %v968 = vadd.f32 %v960, %v966
        %v969 = vadd.f32 %v961, %v967
        %s970 = sld [smem:[#allocation3 + $0x4f]]
        %v971 = vld [vmem:[%s386 + $0x4] sm:$0xff]
        %v972 = vld [vmem:[%s386 + $0xc] sm:$0xff]
        %v973 = vstv %s970
        %v974 = vmul.f32 %v971, %v973
        %v975 = vmul.f32 %v972, %v973
        %v976 = vadd.f32 %v968, %v974
        %v977 = vadd.f32 %v969, %v975
        %s978 = sld [smem:[#allocation3 + $0x50]]
        %v979 = vld [vmem:[%s401 + $0x4] sm:$0xff]
        %v980 = vld [vmem:[%s401 + $0xc] sm:$0xff]
        %v981 = vstv %s978
        %v982 = vmul.f32 %v979, %v981
        %v983 = vmul.f32 %v980, %v981
        %v984 = vadd.f32 %v976, %v982
        %v985 = vadd.f32 %v977, %v983
        %s986 = sld [smem:[#allocation3 + $0x51]]
        %v987 = vld [vmem:[%s416 + $0x4] sm:$0xff]
        %v988 = vld [vmem:[%s416 + $0xc] sm:$0xff]
        %v989 = vstv %s986
        %v990 = vmul.f32 %v987, %v989
        %v991 = vmul.f32 %v988, %v989
        %v992 = vadd.f32 %v984, %v990
        %v993 = vadd.f32 %v985, %v991
        %s994 = sld [smem:[#allocation3 + $0x52]]
        %v995 = vld [vmem:[%s431 + $0x4] sm:$0xff]
        %v996 = vld [vmem:[%s431 + $0xc] sm:$0xff]
        %v997 = vstv %s994
        %v998 = vmul.f32 %v995, %v997
        %v999 = vmul.f32 %v996, %v997
        %v1000 = vadd.f32 %v992, %v998
        %v1001 = vadd.f32 %v993, %v999
        %s1002 = sld [smem:[#allocation3 + $0x53]]
        %v1003 = vld [vmem:[%s446 + $0x4] sm:$0xff]
        %v1004 = vld [vmem:[%s446 + $0xc] sm:$0xff]
        %v1005 = vstv %s1002
        %v1006 = vmul.f32 %v1003, %v1005
        %v1007 = vmul.f32 %v1004, %v1005
        %v1008 = vadd.f32 %v1000, %v1006
        %v1009 = vadd.f32 %v1001, %v1007
        %s1010 = sld [smem:[#allocation3 + $0x23]]
        %v1011 = vld [vmem:[#allocation2 + $0x5] sm:$0xff]
        %v1012 = vld [vmem:[#allocation2 + $0xd] sm:$0xff]
        %v1013 = vstv %s1010
        %v1014 = vmul.f32 %v1011, %v1013
        %v1015 = vmul.f32 %v1012, %v1013
        %v1016 = vadd.f32 %v1008, %v1014
        %v1017 = vadd.f32 %v1009, %v1015
        %s1018 = sld [smem:[#allocation3 + $0x24]]
        %v1019 = vld [vmem:[%s255 + $0x5] sm:$0xff]
        %v1020 = vld [vmem:[%s255 + $0xd] sm:$0xff]
        %v1021 = vstv %s1018
        %v1022 = vmul.f32 %v1019, %v1021
        %v1023 = vmul.f32 %v1020, %v1021
        %v1024 = vadd.f32 %v1016, %v1022
        %v1025 = vadd.f32 %v1017, %v1023
        %s1026 = sld [smem:[#allocation3 + $0x25]]
        %v1027 = vld [vmem:[%s270 + $0x5] sm:$0xff]
        %v1028 = vld [vmem:[%s270 + $0xd] sm:$0xff]
        %v1029 = vstv %s1026
        %v1030 = vmul.f32 %v1027, %v1029
        %v1031 = vmul.f32 %v1028, %v1029
        %v1032 = vadd.f32 %v1024, %v1030
        %v1033 = vadd.f32 %v1025, %v1031
        %s1034 = sld [smem:[#allocation3 + $0x26]]
        %v1035 = vld [vmem:[%s285 + $0x5] sm:$0xff]
        %v1036 = vld [vmem:[%s285 + $0xd] sm:$0xff]
        %v1037 = vstv %s1034
        %v1038 = vmul.f32 %v1035, %v1037
        %v1039 = vmul.f32 %v1036, %v1037
        %v1040 = vadd.f32 %v1032, %v1038
        %v1041 = vadd.f32 %v1033, %v1039
        %s1042 = sld [smem:[#allocation3 + $0x27]]
        %v1043 = vld [vmem:[%s300 + $0x5] sm:$0xff]
        %v1044 = vld [vmem:[%s300 + $0xd] sm:$0xff]
        %v1045 = vstv %s1042
        %v1046 = vmul.f32 %v1043, %v1045
        %v1047 = vmul.f32 %v1044, %v1045
        %v1048 = vadd.f32 %v1040, %v1046
        %v1049 = vadd.f32 %v1041, %v1047
        %s1050 = sld [smem:[#allocation3 + $0x28]]
        %v1051 = vld [vmem:[%s315 + $0x5] sm:$0xff]
        %v1052 = vld [vmem:[%s315 + $0xd] sm:$0xff]
        %v1053 = vstv %s1050
        %v1054 = vmul.f32 %v1051, %v1053
        %v1055 = vmul.f32 %v1052, %v1053
        %v1056 = vadd.f32 %v1048, %v1054
        %v1057 = vadd.f32 %v1049, %v1055
        %s1058 = sld [smem:[#allocation3 + $0x29]]
        %v1059 = vld [vmem:[%s330 + $0x5] sm:$0xff]
        %v1060 = vld [vmem:[%s330 + $0xd] sm:$0xff]
        %v1061 = vstv %s1058
        %v1062 = vmul.f32 %v1059, %v1061
        %v1063 = vmul.f32 %v1060, %v1061
        %v1064 = vadd.f32 %v1056, %v1062
        %v1065 = vadd.f32 %v1057, %v1063
        %s1066 = sld [smem:[#allocation3 + $0x54]]
        %v1067 = vld [vmem:[%s356 + $0x5] sm:$0xff]
        %v1068 = vld [vmem:[%s356 + $0xd] sm:$0xff]
        %v1069 = vstv %s1066
        %v1070 = vmul.f32 %v1067, %v1069
        %v1071 = vmul.f32 %v1068, %v1069
        %v1072 = vadd.f32 %v1064, %v1070
        %v1073 = vadd.f32 %v1065, %v1071
        %s1074 = sld [smem:[#allocation3 + $0x55]]
        %v1075 = vld [vmem:[%s371 + $0x5] sm:$0xff]
        %v1076 = vld [vmem:[%s371 + $0xd] sm:$0xff]
        %v1077 = vstv %s1074
        %v1078 = vmul.f32 %v1075, %v1077
        %v1079 = vmul.f32 %v1076, %v1077
        %v1080 = vadd.f32 %v1072, %v1078
        %v1081 = vadd.f32 %v1073, %v1079
        %s1082 = sld [smem:[#allocation3 + $0x56]]
        %v1083 = vld [vmem:[%s386 + $0x5] sm:$0xff]
        %v1084 = vld [vmem:[%s386 + $0xd] sm:$0xff]
        %v1085 = vstv %s1082
        %v1086 = vmul.f32 %v1083, %v1085
        %v1087 = vmul.f32 %v1084, %v1085
        %v1088 = vadd.f32 %v1080, %v1086
        %v1089 = vadd.f32 %v1081, %v1087
        %s1090 = sld [smem:[#allocation3 + $0x57]]
        %v1091 = vld [vmem:[%s401 + $0x5] sm:$0xff]
        %v1092 = vld [vmem:[%s401 + $0xd] sm:$0xff]
        %v1093 = vstv %s1090
        %v1094 = vmul.f32 %v1091, %v1093
        %v1095 = vmul.f32 %v1092, %v1093
        %v1096 = vadd.f32 %v1088, %v1094
        %v1097 = vadd.f32 %v1089, %v1095
        %s1098 = sld [smem:[#allocation3 + $0x58]]
        %v1099 = vld [vmem:[%s416 + $0x5] sm:$0xff]
        %v1100 = vld [vmem:[%s416 + $0xd] sm:$0xff]
        %v1101 = vstv %s1098
        %v1102 = vmul.f32 %v1099, %v1101
        %v1103 = vmul.f32 %v1100, %v1101
        %v1104 = vadd.f32 %v1096, %v1102
        %v1105 = vadd.f32 %v1097, %v1103
        %s1106 = sld [smem:[#allocation3 + $0x59]]
        %v1107 = vld [vmem:[%s431 + $0x5] sm:$0xff]
        %v1108 = vld [vmem:[%s431 + $0xd] sm:$0xff]
        %v1109 = vstv %s1106
        %v1110 = vmul.f32 %v1107, %v1109
        %v1111 = vmul.f32 %v1108, %v1109
        %v1112 = vadd.f32 %v1104, %v1110
        %v1113 = vadd.f32 %v1105, %v1111
        %s1114 = sld [smem:[#allocation3 + $0x5a]]
        %v1115 = vld [vmem:[%s446 + $0x5] sm:$0xff]
        %v1116 = vld [vmem:[%s446 + $0xd] sm:$0xff]
        %v1117 = vstv %s1114
        %v1118 = vmul.f32 %v1115, %v1117
        %v1119 = vmul.f32 %v1116, %v1117
        %v1120 = vadd.f32 %v1112, %v1118
        %v1121 = vadd.f32 %v1113, %v1119
        %s1122 = sld [smem:[#allocation3 + $0x2a]]
        %v1123 = vld [vmem:[#allocation2 + $0x6] sm:$0xff]
        %v1124 = vld [vmem:[#allocation2 + $0xe] sm:$0xff]
        %v1125 = vstv %s1122
        %v1126 = vmul.f32 %v1123, %v1125
        %v1127 = vmul.f32 %v1124, %v1125
        %v1128 = vadd.f32 %v1120, %v1126
        %v1129 = vadd.f32 %v1121, %v1127
        %s1130 = sld [smem:[#allocation3 + $0x2b]]
        %v1131 = vld [vmem:[%s255 + $0x6] sm:$0xff]
        %v1132 = vld [vmem:[%s255 + $0xe] sm:$0xff]
        %v1133 = vstv %s1130
        %v1134 = vmul.f32 %v1131, %v1133
        %v1135 = vmul.f32 %v1132, %v1133
        %v1136 = vadd.f32 %v1128, %v1134
        %v1137 = vadd.f32 %v1129, %v1135
        %s1138 = sld [smem:[#allocation3 + $0x2c]]
        %v1139 = vld [vmem:[%s270 + $0x6] sm:$0xff]
        %v1140 = vld [vmem:[%s270 + $0xe] sm:$0xff]
        %v1141 = vstv %s1138
        %v1142 = vmul.f32 %v1139, %v1141
        %v1143 = vmul.f32 %v1140, %v1141
        %v1144 = vadd.f32 %v1136, %v1142
        %v1145 = vadd.f32 %v1137, %v1143
        %s1146 = sld [smem:[#allocation3 + $0x2d]]
        %v1147 = vld [vmem:[%s285 + $0x6] sm:$0xff]
        %v1148 = vld [vmem:[%s285 + $0xe] sm:$0xff]
        %v1149 = vstv %s1146
        %v1150 = vmul.f32 %v1147, %v1149
        %v1151 = vmul.f32 %v1148, %v1149
        %v1152 = vadd.f32 %v1144, %v1150
        %v1153 = vadd.f32 %v1145, %v1151
        %s1154 = sld [smem:[#allocation3 + $0x2e]]
        %v1155 = vld [vmem:[%s300 + $0x6] sm:$0xff]
        %v1156 = vld [vmem:[%s300 + $0xe] sm:$0xff]
        %v1157 = vstv %s1154
        %v1158 = vmul.f32 %v1155, %v1157
        %v1159 = vmul.f32 %v1156, %v1157
        %v1160 = vadd.f32 %v1152, %v1158
        %v1161 = vadd.f32 %v1153, %v1159
        %s1162 = sld [smem:[#allocation3 + $0x2f]]
        %v1163 = vld [vmem:[%s315 + $0x6] sm:$0xff]
        %v1164 = vld [vmem:[%s315 + $0xe] sm:$0xff]
        %v1165 = vstv %s1162
        %v1166 = vmul.f32 %v1163, %v1165
        %v1167 = vmul.f32 %v1164, %v1165
        %v1168 = vadd.f32 %v1160, %v1166
        %v1169 = vadd.f32 %v1161, %v1167
        %s1170 = sld [smem:[#allocation3 + $0x30]]
        %v1171 = vld [vmem:[%s330 + $0x6] sm:$0xff]
        %v1172 = vld [vmem:[%s330 + $0xe] sm:$0xff]
        %v1173 = vstv %s1170
        %v1174 = vmul.f32 %v1171, %v1173
        %v1175 = vmul.f32 %v1172, %v1173
        %v1176 = vadd.f32 %v1168, %v1174
        %v1177 = vadd.f32 %v1169, %v1175
        %s1178 = sld [smem:[#allocation3 + $0x5b]]
        %v1179 = vld [vmem:[%s356 + $0x6] sm:$0xff]
        %v1180 = vld [vmem:[%s356 + $0xe] sm:$0xff]
        %v1181 = vstv %s1178
        %v1182 = vmul.f32 %v1179, %v1181
        %v1183 = vmul.f32 %v1180, %v1181
        %v1184 = vadd.f32 %v1176, %v1182
        %v1185 = vadd.f32 %v1177, %v1183
        %s1186 = sld [smem:[#allocation3 + $0x5c]]
        %v1187 = vld [vmem:[%s371 + $0x6] sm:$0xff]
        %v1188 = vld [vmem:[%s371 + $0xe] sm:$0xff]
        %v1189 = vstv %s1186
        %v1190 = vmul.f32 %v1187, %v1189
        %v1191 = vmul.f32 %v1188, %v1189
        %v1192 = vadd.f32 %v1184, %v1190
        %v1193 = vadd.f32 %v1185, %v1191
        %s1194 = sld [smem:[#allocation3 + $0x5d]]
        %v1195 = vld [vmem:[%s386 + $0x6] sm:$0xff]
        %v1196 = vld [vmem:[%s386 + $0xe] sm:$0xff]
        %v1197 = vstv %s1194
        %v1198 = vmul.f32 %v1195, %v1197
        %v1199 = vmul.f32 %v1196, %v1197
        %v1200 = vadd.f32 %v1192, %v1198
        %v1201 = vadd.f32 %v1193, %v1199
        %s1202 = sld [smem:[#allocation3 + $0x5e]]
        %v1203 = vld [vmem:[%s401 + $0x6] sm:$0xff]
        %v1204 = vld [vmem:[%s401 + $0xe] sm:$0xff]
        %v1205 = vstv %s1202
        %v1206 = vmul.f32 %v1203, %v1205
        %v1207 = vmul.f32 %v1204, %v1205
        %v1208 = vadd.f32 %v1200, %v1206
        %v1209 = vadd.f32 %v1201, %v1207
        %s1210 = sld [smem:[#allocation3 + $0x5f]]
        %v1211 = vld [vmem:[%s416 + $0x6] sm:$0xff]
        %v1212 = vld [vmem:[%s416 + $0xe] sm:$0xff]
        %v1213 = vstv %s1210
        %v1214 = vmul.f32 %v1211, %v1213
        %v1215 = vmul.f32 %v1212, %v1213
        %v1216 = vadd.f32 %v1208, %v1214
        %v1217 = vadd.f32 %v1209, %v1215
        %s1218 = sld [smem:[#allocation3 + $0x60]]
        %v1219 = vld [vmem:[%s431 + $0x6] sm:$0xff]
        %v1220 = vld [vmem:[%s431 + $0xe] sm:$0xff]
        %v1221 = vstv %s1218
        %v1222 = vmul.f32 %v1219, %v1221
        %v1223 = vmul.f32 %v1220, %v1221
        %v1224 = vadd.f32 %v1216, %v1222
        %v1225 = vadd.f32 %v1217, %v1223
        %s1226 = sld [smem:[#allocation3 + $0x61]]
        %v1227 = vld [vmem:[%s446 + $0x6] sm:$0xff]
        %v1228 = vld [vmem:[%s446 + $0xe] sm:$0xff]
        %v1229 = vstv %s1226
        %v1230 = vmul.f32 %v1227, %v1229
        %v1231 = vmul.f32 %v1228, %v1229
        %v1232 = vadd.f32 %v1224, %v1230
        %v1233 = vadd.f32 %v1225, %v1231
        %v1234 = vxor.u32 %v1232, 2147483648
        %v1235 = vxor.u32 %v1233, 2147483648
        %v1236 = vmul.f32 %v1234, 1.442695
        %v1237 = vpow.pop %v1236
        %v1238 = vmul.f32 %v1235, 1.442695
        %v1239 = vpow.pop %v1238
        %v1240 = vadd.f32 %v1237, 1.0
        %v1241 = vadd.f32 %v1239, 1.0
        %v1242 = vrcp.pop %v1240
        %v1243 = vmul.f32 %v1240, %v1242
        %v1244 = vsub.f32 1.0, %v1243
        %v1245 = vmul.f32 %v1242, %v1244
        %v1246 = vadd.f32 %v1242, %v1245
        %vm1247 = vweird.f32 %v1240
        %vm1248 = vweird.f32 %v1242
        %vm1249 = vmor %vm1247, %vm1248
        %v1250 = vsel %vm1249, %v1242, %v1246
        %v1251 = vand.u32 2147483647, %v1240
        %vm1252 = vcmp.eq.f32.partialorder %v1251, 8.507059e+37
        %v1253 = vand.u32 %v1240, 2147483648
        %v1254 = vor.u32 1.1754944e-38, %v1253
        %v1255 = vsel %vm1252, %v1254, %v1250
        %v1256 = vmul.f32 1.0, %v1255
        %v1257 = vrcp.pop %v1241
        %v1258 = vmul.f32 %v1241, %v1257
        %v1259 = vsub.f32 1.0, %v1258
        %v1260 = vmul.f32 %v1257, %v1259
        %v1261 = vadd.f32 %v1257, %v1260
        %vm1262 = vweird.f32 %v1241
        %vm1263 = vweird.f32 %v1257
        %vm1264 = vmor %vm1262, %vm1263
        %v1265 = vsel %vm1264, %v1257, %v1261
        %v1266 = vand.u32 2147483647, %v1241
        %vm1267 = vcmp.eq.f32.partialorder %v1266, 8.507059e+37
        %v1268 = vand.u32 %v1241, 2147483648
        %v1269 = vor.u32 1.1754944e-38, %v1268
        %v1270 = vsel %vm1267, %v1269, %v1265
        %v1271 = vmul.f32 1.0, %v1270
        %1272 = vst.msk [vmem:[%s177] sm:$0xff] %vm186, %v1256
        %1273 = vst.msk [vmem:[%s177 + $0x8] sm:$0xff] %vm186, %v1271
        %s1274 = sand.u32 %s75, 1
        %s1275 = scalar_lea.sflag [#allocation5], %s1274
        %s1276 = sand.u32 %s75, 1
        %s1277 = smul.addr %s1276, 16
        %s1278 = scalar_lea.vmem [#allocation8], %s1277
        // Predicated region
        $region37: #{tpu_custom_call.1} parent=27 // pred_check
          %p1279 = pneg %p85
        $region38: #{tpu_custom_call.1} parent=27 // pred_check_branch
          %1281 = sbr.rel (%p1279) target = $region40
        $region39: #{tpu_custom_call.1} parent=27 // pred_region
          %1283 = vsyncadd %s1275, 0
          %s1284 = smul.addr %s20, 2
          %s1285 = smul.addr %s1284, 8
          %s1286 = scalar_lea.hbm %s2, %s1285
          %s1287 = sshll.u32 %s1278, 4
          %s1288 = int_to_ptr.vmem [resolvable:$true] %s1287
          %s1289 = sshll.u32 %s1286, 4
          %s1290 = int_to_ptr.hbm [resolvable:$true] %s1289
          %1295 = dma.vmem_to_hbm [thread:$0]  %s1288, 256, %s1290, %s1275, 128, 128, 8
        $region40: #{tpu_custom_call.1} parent=27 // pred_fallthru
          _
      $region28: #{tpu_custom_call.1} parent=5 // pred_fallthru
        _
      %p1296 = scmp.le.s32.totalorder 2, %s15
      // Predicated region
      $region41: #{tpu_custom_call.1} parent=5 // pred_check
        %p1297 = pneg %p1296
      $region42: #{tpu_custom_call.1} parent=5 // pred_check_branch
        %1299 = sbr.rel (%p1297) target = $region44
      $region43: #{tpu_custom_call.1} parent=5 // pred_region
        %s1300 = ssub.s32 %s15, 2
        // Predicated region
        $region45: #{tpu_custom_call.1} parent=43 // pred_check
          %p1301 = pneg %p91
        $region46: #{tpu_custom_call.1} parent=43 // pred_check_branch
          %1303 = sbr.rel (%p1301) target = $region48
        $region47: #{tpu_custom_call.1} parent=43 // pred_region
          %s1304 = sand.u32 %s76, 1
          %s1305 = scalar_lea.sflag [#allocation5], %s1304
          %s1306 = sand.u32 %s76, 1
          %s1307 = smul.addr %s1306, 16
          %s1308 = scalar_lea.vmem [#allocation8], %s1307
          %1310 = dma.done %s1305, 256
        $region48: #{tpu_custom_call.1} parent=43 // pred_fallthru
          _
      $region44: #{tpu_custom_call.1} parent=5 // pred_fallthru
        _
    $region6: #{tpu_custom_call.1} parent=1 // loop_footer
      %s19 = sadd.s32 1, %s15
    $region7: #{tpu_custom_call.1} parent=1 // loop_footer_branch
      %14 = sbr.rel target = $region3
    $region8: #{tpu_custom_call.1} parent=1 // loop_exit
      _
    %1311 = vsyncpa [#allocation4], 1
    %s1312 = scalar_lea.sflag [#allocation4], 1
    %1313 = vsyncpa %s1312, 1
    %1314 = vsyncpa [#allocation5], 1
    %s1315 = scalar_lea.sflag [#allocation5], 1
    %1316 = vsyncpa %s1315, 1
    %1317 = vsyncpa [#allocation6], 1
    %s1318 = scalar_lea.sflag [#allocation6], 1
    %1319 = vsyncpa %s1318, 1

</llo_original>
